<compile_context>
chip_gen: v7x
topology: tpu7x:2x2x1
jax: 0.10.0
libtpu: 0.0.40
codegen_flags: <defaults>
</compile_context>

<pallas_src>
import functools

import jax
import jax.numpy as jnp
from jax.experimental import pallas as pl
from jax.experimental.pallas import tpu as pltpu

LANE = 128
SUBLANE = 8


def round_up(x, m):
    return ((x + m - 1) // m) * m


def pad2(x, shape):
    """Zero-pad x up to `shape` (same rank)."""
    return jnp.pad(x, [(0, s - d) for d, s in zip(x.shape, shape)])


# ---------------------------------------------------------------------------
# Kernel 1: fused GRU over a whole (time-major) sequence.
# ---------------------------------------------------------------------------
def _seq_gru_kernel(x_ref, keep_ref, wih_ref, whh_ref, bih_ref, bhh_ref,
                    h_ref, *, Hp):
    t = pl.program_id(0)

    @pl.when(t == 0)
    def _():
        h_ref[...] = jnp.zeros_like(h_ref)

    h = h_ref[...]
    x = x_ref[0]
    gx = jnp.dot(x, wih_ref[...], preferred_element_type=jnp.float32) + bih_ref[...]
    gh = jnp.dot(h, whh_ref[...], preferred_element_type=jnp.float32) + bhh_ref[...]
    r = jax.nn.sigmoid(gx[:, 0:Hp] + gh[:, 0:Hp])
    z = jax.nn.sigmoid(gx[:, Hp:2 * Hp] + gh[:, Hp:2 * Hp])
    n = jnp.tanh(gx[:, 2 * Hp:3 * Hp] + r * gh[:, 2 * Hp:3 * Hp])
    h_new = (1.0 - z) * n + z * h
    keep = keep_ref[0]                      # [N, 1]; 1.0 = real token, 0.0 = pad
    h_ref[...] = keep * h_new + (1.0 - keep) * h


def seq_gru(x, keep, gru_w):
    """x: [T, N, Ein] (time-major), keep: [T, N, 1]. Returns hidden at last real step [N, Hp]."""
    T, N, Ein = x.shape
    wih, whh, bih, bhh = gru_w
    H3 = wih.shape[1]
    Hp = whh.shape[0]
    grid_spec = pltpu.PrefetchScalarGridSpec(
        num_scalar_prefetch=0,
        grid=(T,),
        in_specs=[
            pl.BlockSpec((1, N, Ein), lambda t: (t, 0, 0)),
            pl.BlockSpec((1, N, 1), lambda t: (t, 0, 0)),
            pl.BlockSpec((Ein, H3), lambda t: (0, 0)),
            pl.BlockSpec((Hp, H3), lambda t: (0, 0)),
            pl.BlockSpec((1, H3), lambda t: (0, 0)),
            pl.BlockSpec((1, H3), lambda t: (0, 0)),
        ],
        out_specs=pl.BlockSpec((N, Hp), lambda t: (0, 0)),
    )
    return pl.pallas_call(
        functools.partial(_seq_gru_kernel, Hp=Hp),
        out_shape=jax.ShapeDtypeStruct((N, Hp), jnp.float32),
        grid_spec=grid_spec,
        compiler_params=pltpu.CompilerParams(dimension_semantics=("arbitrary",)),
    )(x, keep, wih, whh, bih, bhh)


# ---------------------------------------------------------------------------
# Kernel 2: fused episodic memory: grid=(n_episode, nfact).
# ---------------------------------------------------------------------------
def _episodic_kernel(facts_ref, q_ref, gw1_ref, gb1_ref, gw2r_ref, gb2_ref,
                     awih_ref, awhh_ref, abih_ref, abhh_ref,
                     mwih_ref, mwhh_ref, mbih_ref, mbhh_ref,
                     mem_ref, e_ref, *, Hp):
    ep = pl.program_id(0)
    t = pl.program_id(1)

    @pl.when((ep == 0) & (t == 0))
    def _():
        mem_ref[...] = q_ref[...]

    @pl.when(t == 0)
    def _():
        e_ref[...] = jnp.zeros_like(e_ref)

    f = facts_ref[0]
    q = q_ref[...]
    m = mem_ref[...]
    e = e_ref[...]

    # gate MLP; the 4Hp x Hp weight is kept as four 128-aligned row blocks
    w1 = gw1_ref[...]
    pre = (jnp.dot(f * q, w1[0:Hp, :], preferred_element_type=jnp.float32)
           + jnp.dot(f * m, w1[Hp:2 * Hp, :], preferred_element_type=jnp.float32)
           + jnp.dot(jnp.abs(f - q), w1[2 * Hp:3 * Hp, :], preferred_element_type=jnp.float32)
           + jnp.dot(jnp.abs(f - m), w1[3 * Hp:4 * Hp, :], preferred_element_type=jnp.float32))
    hg = jnp.tanh(pre + gb1_ref[...])
    # gate scalar on the VPU (multiply + lane reduce); bias is pre-broadcast over lanes,
    # so gt comes out already broadcast to [B, Hp].
    gt = jax.nn.sigmoid(jnp.sum(hg * gw2r_ref[...], axis=-1, keepdims=True) + gb2_ref[...])

    # attention GRU cell: input = f, hidden = e
    gx = jnp.dot(f, awih_ref[...], preferred_element_type=jnp.float32) + abih_ref[...]
    gh = jnp.dot(e, awhh_ref[...], preferred_element_type=jnp.float32) + abhh_ref[...]
    r = jax.nn.sigmoid(gx[:, 0:Hp] + gh[:, 0:Hp])
    z = jax.nn.sigmoid(gx[:, Hp:2 * Hp] + gh[:, Hp:2 * Hp])
    n = jnp.tanh(gx[:, 2 * Hp:3 * Hp] + r * gh[:, 2 * Hp:3 * Hp])
    h_att = (1.0 - z) * n + z * e

    e_new = gt * h_att + (1.0 - gt) * e
    e_ref[...] = e_new

    # end of an episode: memory = memory_grucell(e, memory)
    @pl.when(t == pl.num_programs(1) - 1)
    def _():
        gx2 = jnp.dot(e_new, mwih_ref[...], preferred_element_type=jnp.float32) + mbih_ref[...]
        gh2 = jnp.dot(m, mwhh_ref[...], preferred_element_type=jnp.float32) + mbhh_ref[...]
        r2 = jax.nn.sigmoid(gx2[:, 0:Hp] + gh2[:, 0:Hp])
        z2 = jax.nn.sigmoid(gx2[:, Hp:2 * Hp] + gh2[:, Hp:2 * Hp])
        n2 = jnp.tanh(gx2[:, 2 * Hp:3 * Hp] + r2 * gh2[:, 2 * Hp:3 * Hp])
        mem_ref[...] = (1.0 - z2) * n2 + z2 * m


def episodic_memory(facts_t, enc_q, gate, att, mem_gru, n_episode):
    nfact, Bp, Hp = facts_t.shape
    gw1, gb1, gw2r, gb2b = gate
    awih, awhh, abih, abhh = att
    mwih, mwhh, mbih, mbhh = mem_gru
    H3 = awih.shape[1]

    def const2(ep, t):
        return (0, 0)

    grid_spec = pltpu.PrefetchScalarGridSpec(
        num_scalar_prefetch=0,
        grid=(n_episode, nfact),
        in_specs=[
            pl.BlockSpec((1, Bp, Hp), lambda ep, t: (t, 0, 0)),
            pl.BlockSpec((Bp, Hp), const2),
            pl.BlockSpec((4 * Hp, Hp), const2),
            pl.BlockSpec((1, Hp), const2),
            pl.BlockSpec((1, Hp), const2),
            pl.BlockSpec((1, Hp), const2),
            pl.BlockSpec((Hp, H3), const2),
            pl.BlockSpec((Hp, H3), const2),
            pl.BlockSpec((1, H3), const2),
            pl.BlockSpec((1, H3), const2),
            pl.BlockSpec((Hp, H3), const2),
            pl.BlockSpec((Hp, H3), const2),
            pl.BlockSpec((1, H3), const2),
            pl.BlockSpec((1, H3), const2),
        ],
        out_specs=pl.BlockSpec((Bp, Hp), const2),
        scratch_shapes=[pltpu.VMEM((Bp, Hp), jnp.float32)],
    )
    return pl.pallas_call(
        functools.partial(_episodic_kernel, Hp=Hp),
        out_shape=jax.ShapeDtypeStruct((Bp, Hp), jnp.float32),
        grid_spec=grid_spec,
        compiler_params=pltpu.CompilerParams(
            dimension_semantics=("arbitrary", "arbitrary")),
    )(facts_t, enc_q, gw1, gb1, gw2r, gb2b,
      awih, awhh, abih, abhh, mwih, mwhh, mbih, mbhh)


# ---------------------------------------------------------------------------
# Kernel 3: fused greedy answer decode: grid=(alen,).
# ---------------------------------------------------------------------------
def _decode_kernel(q_ref, emb_ref, w0_ref, mem_ref,
                   wihw_ref, wihq_ref, whh_ref, bih_ref, bhh_ref,
                   fcw_ref, fcb_ref,
                   out_ref, h_ref, lw_ref, qproj_ref, *, Hp, Vp):
    t = pl.program_id(0)

    @pl.when(t == 0)
    def _():
        h_ref[...] = mem_ref[...]
        lw_ref[...] = w0_ref[...]
        # loop-invariant projection of encoded_q (hoisted out of the decode loop)
        qproj_ref[...] = (jnp.dot(q_ref[...], wihq_ref[...],
                                  preferred_element_type=jnp.float32) + bih_ref[...])

    h = h_ref[...]
    lw = lw_ref[...]
    gx = jnp.dot(lw, wihw_ref[...], preferred_element_type=jnp.float32) + qproj_ref[...]
    gh = jnp.dot(h, whh_ref[...], preferred_element_type=jnp.float32) + bhh_ref[...]
    r = jax.nn.sigmoid(gx[:, 0:Hp] + gh[:, 0:Hp])
    z = jax.nn.sigmoid(gx[:, Hp:2 * Hp] + gh[:, Hp:2 * Hp])
    n = jnp.tanh(gx[:, 2 * Hp:3 * Hp] + r * gh[:, 2 * Hp:3 * Hp])
    h_new = (1.0 - z) * n + z * h
    h_ref[...] = h_new

    # answer FC + log_softmax (padded vocab lanes carry a -1e30 bias)
    logits = jnp.dot(h_new, fcw_ref[...], preferred_element_type=jnp.float32) + fcb_ref[...]
    mx = jnp.max(logits, axis=-1, keepdims=True)
    sh = logits - mx
    lse = jnp.log(jnp.sum(jnp.exp(sh), axis=-1, keepdims=True))
    logp = sh - lse
    out_ref[0] = logp

    # in-kernel greedy argmax + next-token embedding via one-hot matmul
    col = jax.lax.broadcasted_iota(jnp.int32, logp.shape, 1)
    is_max = logp == jnp.max(logp, axis=-1, keepdims=True)
    idx = jnp.min(jnp.where(is_max, col, Vp), axis=-1, keepdims=True)   # [B, 1]
    onehot = (col == idx).astype(jnp.float32)                           # [B, Vp]
    lw_ref[...] = jnp.dot(onehot, emb_ref[...], preferred_element_type=jnp.float32)


def answer_decode(enc_q, emb_pad, w0, memory, agru, afc, alen):
    Bp, Hp = enc_q.shape
    Vp, Ep = emb_pad.shape
    wihw, wihq, whh, bih, bhh = agru
    fcw, fcb = afc
    H3 = whh.shape[1]

    def const1(t):
        return (0, 0)

    grid_spec = pltpu.PrefetchScalarGridSpec(
        num_scalar_prefetch=0,
        grid=(alen,),
        in_specs=[
            pl.BlockSpec((Bp, Hp), const1),
            pl.BlockSpec((Vp, Ep), const1),
            pl.BlockSpec((Bp, Ep), const1),
            pl.BlockSpec((Bp, Hp), const1),
            pl.BlockSpec((Ep, H3), const1),
            pl.BlockSpec((Hp, H3), const1),
            pl.BlockSpec((Hp, H3), const1),
            pl.BlockSpec((1, H3), const1),
            pl.BlockSpec((1, H3), const1),
            pl.BlockSpec((Hp, Vp), const1),
            pl.BlockSpec((1, Vp), const1),
        ],
        out_specs=pl.BlockSpec((1, Bp, Vp), lambda t: (t, 0, 0)),
        scratch_shapes=[
            pltpu.VMEM((Bp, Hp), jnp.float32),
            pltpu.VMEM((Bp, Ep), jnp.float32),
            pltpu.VMEM((Bp, H3), jnp.float32),
        ],
    )
    return pl.pallas_call(
        functools.partial(_decode_kernel, Hp=Hp, Vp=Vp),
        out_shape=jax.ShapeDtypeStruct((alen, Bp, Vp), jnp.float32),
        grid_spec=grid_spec,
        compiler_params=pltpu.CompilerParams(dimension_semantics=("arbitrary",)),
    )(enc_q, emb_pad, w0, memory, wihw, wihq, whh, bih, bhh, fcw, fcb)


# ---------------------------------------------------------------------------
# DMN forward (thin glue around the three kernels)
# ---------------------------------------------------------------------------
@functools.partial(jax.jit,
                   static_argnames=("alen", "seqbegin_id", "vocab_size", "n_episode"))
def dmn_forward(params, allfacts, allfacts_mask, questions, questions_mask,
                alen, seqbegin_id, vocab_size, n_episode=3):
    b, nfact, flen = allfacts.shape
    emb_pad = params["embed_pad"]
    Vp, Ep = emb_pad.shape
    Hp = params["memory_grucell"][1].shape[0]
    V = vocab_size

    # ---- encode facts (input GRU), one fused kernel over flen ----
    N = b * nfact
    Np = round_up(N, SUBLANE)
    facts_flat = allfacts.reshape(N, flen)
    fmask_flat = allfacts_mask.reshape(N, flen)
    xf = jnp.transpose(emb_pad[facts_flat], (1, 0, 2))              # [flen, N, Ep]
    xf = jnp.pad(xf, ((0, 0), (0, Np - N), (0, 0)))
    keepf = (fmask_flat == 0).astype(jnp.float32).T[:, :, None]     # [flen, N, 1]
    keepf = jnp.pad(keepf, ((0, 0), (0, Np - N), (0, 0)))
    enc_facts = seq_gru(xf, keepf, params["input_gru"])             # [Np, Hp]
    enc_facts = enc_facts[:N].reshape(b, nfact, Hp)

    # ---- encode question (question GRU), one fused kernel over qlen ----
    Bp = round_up(b, SUBLANE)
    xq = jnp.transpose(emb_pad[questions], (1, 0, 2))               # [qlen, b, Ep]
    xq = jnp.pad(xq, ((0, 0), (0, Bp - b), (0, 0)))
    keepq = (questions_mask == 0).astype(jnp.float32).T[:, :, None]
    keepq = jnp.pad(keepq, ((0, 0), (0, Bp - b), (0, 0)))
    enc_q = seq_gru(xq, keepq, params["question_gru"])              # [Bp, Hp]

    # ---- episodic memory, one fused kernel over (n_episode, nfact) ----
    facts_t = jnp.pad(jnp.transpose(enc_facts, (1, 0, 2)),
                      ((0, 0), (0, Bp - b), (0, 0)))                # [nfact, Bp, Hp]
    memory = episodic_memory(facts_t, enc_q, params["gate"],
                             params["attention_grucell"],
                             params["memory_grucell"], n_episode)   # [Bp, Hp]

    # ---- greedy answer decode, one fused kernel over alen ----
    w0 = jnp.broadcast_to(emb_pad[seqbegin_id][None, :], (Bp, Ep))
    preds = answer_decode(enc_q, emb_pad, w0, memory,
                          params["answer_grucell"], params["answer_fc"], alen)
    preds = jnp.transpose(preds, (1, 0, 2))[:b, :, :V]              # [b, alen, V]
    return preds.reshape(b * alen, V)


# ---------------------------------------------------------------------------
# Deterministic parameter construction (padded, lane-aligned layouts)
# ---------------------------------------------------------------------------
def make_params(key, vocab_size, embed_size, hidden_size, padding_idx):
    H, E, V = hidden_size, embed_size, vocab_size
    Hp, Ep, Vp = round_up(H, LANE), round_up(E, LANE), round_up(V, LANE)

    keys = iter(jax.random.split(key, 40))

    def nrm(shape, scale=0.1):
        return scale * jax.random.normal(next(keys), shape, jnp.float32)

    def gru_logical(in_size):
        # transposed PyTorch layout: W_ih^T [in, 3H], W_hh^T [H, 3H], biases [1, 3H]
        return (nrm((in_size, 3 * H)), nrm((H, 3 * H)),
                nrm((1, 3 * H)), nrm((1, 3 * H)))

    def pad_gate_blocks(w, in_pad):
        # [in_real, 3H] -> [in_pad, 3*Hp]; each (r, z, n) block in its own 128-lane slot
        return jnp.concatenate(
            [pad2(w[:, k * H:(k + 1) * H], (in_pad, Hp)) for k in range(3)], axis=1)

    def pad_gru(w_ih, w_hh, b_ih, b_hh, in_pad):
        return (pad_gate_blocks(w_ih, in_pad), pad_gate_blocks(w_hh, Hp),
                pad_gate_blocks(b_ih, 1), pad_gate_blocks(b_hh, 1))

    embed = nrm((V, E)).at[padding_idx].set(0.0)
    embed_pad = pad2(embed, (Vp, Ep))

    input_gru = pad_gru(*gru_logical(E), Ep)
    question_gru = pad_gru(*gru_logical(E), Ep)
    attention_grucell = pad_gru(*gru_logical(H), Hp)
    memory_grucell = pad_gru(*gru_logical(H), Hp)

    # answer GRUCell: input = concat([last_word (E), encoded_q (H)]); W_ih is split
    # so the per-step jnp.concatenate disappears and the q half can be hoisted.
    a_wih, a_whh, a_bih, a_bhh = gru_logical(E + H)
    answer_grucell = (
        pad_gate_blocks(a_wih[:E, :], Ep),     # last-word half
        pad_gate_blocks(a_wih[E:, :], Hp),     # encoded-question half
        pad_gate_blocks(a_whh, Hp),
        pad_gate_blocks(a_bih, 1),
        pad_gate_blocks(a_bhh, 1),
    )

    # gate MLP: Linear(4H -> H), Tanh, Linear(H -> 1), Sigmoid
    gw1, gb1 = nrm((4 * H, H)), nrm((1, H))
    gw2, gb2 = nrm((H, 1)), nrm((1, 1))
    gw1_pad = jnp.concatenate(
        [pad2(gw1[k * H:(k + 1) * H, :], (Hp, Hp)) for k in range(4)], axis=0)  # [4Hp, Hp]
    gate = (gw1_pad, pad2(gb1, (1, Hp)), pad2(gw2.T, (1, Hp)),
            jnp.broadcast_to(gb2, (1, Hp)))

    # answer head: Linear(H -> V); padded vocab lanes get a -1e30 bias so they never
    # win the softmax / argmax.
    fcw, fcb = nrm((H, V)), jnp.zeros((1, V), jnp.float32)
    answer_fc = (pad2(fcw, (Hp, Vp)),
                 jnp.pad(fcb, ((0, 0), (0, Vp - V)), constant_values=-1e30))

    return {
        "embed_pad": embed_pad,
        "input_gru": input_gru,
        "question_gru": question_gru,
        "gate": gate,
        "attention_grucell": attention_grucell,
        "memory_grucell": memory_grucell,
        "answer_grucell": answer_grucell,
        "answer_fc": answer_fc,
    }


# ---------------------------------------------------------------------------
# Main
# ---------------------------------------------------------------------------
if __name__ == "__main__":
    vocab_size = 50
    embed_size = 32       # == hidden_size (required by answer_grucell(hidden*2, hidden))
    hidden_size = 32
    padding_idx = 0
    seqbegin_id = 1
    b, nfact, flen, qlen, alen = 2, 3, 6, 5, 4
    n_episode = 2

    key = jax.random.PRNGKey(0)
    k_params, k_f, k_q, k_flen, k_qlen = jax.random.split(key, 5)
    params = make_params(k_params, vocab_size, embed_size, hidden_size, padding_idx)

    # facts: random token ids, with pad (id 0) after a random real length >= 2
    fact_lens = jax.random.randint(k_flen, (b, nfact), 2, flen + 1)           # [b, nfact]
    pos_f = jnp.arange(flen)[None, None, :]
    allfacts_mask = (pos_f >= fact_lens[:, :, None]).astype(jnp.int32)        # 1 = pad
    allfacts = jax.random.randint(k_f, (b, nfact, flen), 2, vocab_size)
    allfacts = jnp.where(allfacts_mask == 1, padding_idx, allfacts).astype(jnp.int32)

    q_lens = jax.random.randint(k_qlen, (b,), 2, qlen + 1)                    # [b]
    pos_q = jnp.arange(qlen)[None, :]
    questions_mask = (pos_q >= q_lens[:, None]).astype(jnp.int32)
    questions = jax.random.randint(k_q, (b, qlen), 2, vocab_size)
    questions = jnp.where(questions_mask == 1, padding_idx, questions).astype(jnp.int32)

    preds = dmn_forward(params, allfacts, allfacts_mask, questions, questions_mask,
                        alen=alen, seqbegin_id=seqbegin_id, vocab_size=vocab_size,
                        n_episode=n_episode)
    preds = jax.block_until_ready(preds)

    assert preds.shape == (b * alen, vocab_size), preds.shape
    assert bool(jnp.all(jnp.isfinite(preds)))
    # each row is a log-softmax -> exp sums to 1 (pad vocab columns carry ~0 mass)
    row_sums = jnp.exp(preds).sum(axis=-1)
    assert bool(jnp.allclose(row_sums, 1.0, atol=1e-4)), row_sums

    print("KERNEL_OK")
</pallas_src>

<mosaic_0001>
module attributes {stable_mosaic.version = 11 : i64} {
  func.func @_seq_gru_kernel(%arg0: i32, %arg1: memref<1x8x128xf32, #tpu.memory_space<vmem>>, %arg2: memref<1x8x1xf32, #tpu.memory_space<vmem>>, %arg3: memref<128x384xf32, #tpu.memory_space<vmem>>, %arg4: memref<128x384xf32, #tpu.memory_space<vmem>>, %arg5: memref<1x384xf32, #tpu.memory_space<vmem>>, %arg6: memref<1x384xf32, #tpu.memory_space<vmem>>, %arg7: memref<8x128xf32, #tpu.memory_space<vmem>>) attributes {dimension_semantics = [#tpu.dimension_semantics<arbitrary>], iteration_bounds = array<i64: 5>, scalar_prefetch = 0 : i64, scratch_operands = 0 : i64, tpu.core_type = #tpu.core_type<tc>, window_params = [{transform_indices = @transform_0, window_bounds = array<i64: 1, 8, 128>}, {transform_indices = @transform_1, window_bounds = array<i64: 1, 8, 1>}, {pipeline_mode = #tpu.pipeline_mode<synchronous>, transform_indices = @transform_2, window_bounds = array<i64: 128, 384>}, {pipeline_mode = #tpu.pipeline_mode<synchronous>, transform_indices = @transform_3, window_bounds = array<i64: 128, 384>}, {pipeline_mode = #tpu.pipeline_mode<synchronous>, transform_indices = @transform_4, window_bounds = array<i64: 1, 384>}, {pipeline_mode = #tpu.pipeline_mode<synchronous>, transform_indices = @transform_5, window_bounds = array<i64: 1, 384>}, {pipeline_mode = #tpu.pipeline_mode<synchronous>, transform_indices = @transform_6, window_bounds = array<i64: 8, 128>}]} {
    %c0_i32 = arith.constant 0 : i32
    %0 = arith.cmpi eq, %arg0, %c0_i32 : i32
    %1 = arith.extui %0 : i1 to i32
    %c0_i32_0 = arith.constant 0 : i32
    %2 = arith.cmpi ne, %1, %c0_i32_0 : i32
    scf.if %2 {
      %cst_23 = arith.constant 0.000000e+00 : f32
      %52 = vector.broadcast %cst_23 : f32 to vector<8x128xf32>
      %c0_24 = arith.constant 0 : index
      %c0_25 = arith.constant 0 : index
      %53 = vector.load %arg7[%c0_24, %c0_25] : memref<8x128xf32, #tpu.memory_space<vmem>>, vector<8x128xf32>
      tpu.vector_store %arg7[%c0_24, %c0_25], %52 {strides = array<i32>} : memref<8x128xf32, #tpu.memory_space<vmem>>, vector<8x128xf32>,
    } else {
    }
    %c0 = arith.constant 0 : index
    %c0_1 = arith.constant 0 : index
    %3 = vector.load %arg7[%c0, %c0_1] : memref<8x128xf32, #tpu.memory_space<vmem>>, vector<8x128xf32>
    %c0_2 = arith.constant 0 : index
    %c0_3 = arith.constant 0 : index
    %c0_4 = arith.constant 0 : index
    %4 = vector.load %arg1[%c0_2, %c0_3, %c0_4] : memref<1x8x128xf32, #tpu.memory_space<vmem>>, vector<1x8x128xf32>
    %5 = vector.shape_cast %4 : vector<1x8x128xf32> to vector<8x128xf32>
    %c0_5 = arith.constant 0 : index
    %c0_6 = arith.constant 0 : index
    %6 = vector.load %arg3[%c0_5, %c0_6] : memref<128x384xf32, #tpu.memory_space<vmem>>, vector<128x384xf32>
    %cst = arith.constant dense<0.000000e+00> : vector<8x384xf32>
    %7 = tpu.matmul %5, %6, %cst {dimension_numbers = #tpu.dot_dimension_numbers<[1], [0], [0], [1], [0, 0, 1, 1], [], []>} : vector<8x128xf32>, vector<128x384xf32>, vector<8x384xf32> -> vector<8x384xf32>
    %c0_7 = arith.constant 0 : index
    %c0_8 = arith.constant 0 : index
    %8 = vector.load %arg5[%c0_7, %c0_8] : memref<1x384xf32, #tpu.memory_space<vmem>>, vector<1x384xf32>
    %9 = vector.broadcast %8 : vector<1x384xf32> to vector<8x384xf32>
    %10 = arith.addf %7, %9 : vector<8x384xf32>
    %c0_9 = arith.constant 0 : index
    %c0_10 = arith.constant 0 : index
    %11 = vector.load %arg4[%c0_9, %c0_10] : memref<128x384xf32, #tpu.memory_space<vmem>>, vector<128x384xf32>
    %cst_11 = arith.constant dense<0.000000e+00> : vector<8x384xf32>
    %12 = tpu.matmul %3, %11, %cst_11 {dimension_numbers = #tpu.dot_dimension_numbers<[1], [0], [0], [1], [0, 0, 1, 1], [], []>} : vector<8x128xf32>, vector<128x384xf32>, vector<8x384xf32> -> vector<8x384xf32>
    %c0_12 = arith.constant 0 : index
    %c0_13 = arith.constant 0 : index
    %13 = vector.load %arg6[%c0_12, %c0_13] : memref<1x384xf32, #tpu.memory_space<vmem>>, vector<1x384xf32>
    %14 = vector.broadcast %13 : vector<1x384xf32> to vector<8x384xf32>
    %15 = arith.addf %12, %14 : vector<8x384xf32>
    %16 = vector.extract_strided_slice %10 {offsets = [0, 0], sizes = [8, 128], strides = [1, 1]} : vector<8x384xf32> to vector<8x128xf32>
    %17 = vector.extract_strided_slice %15 {offsets = [0, 0], sizes = [8, 128], strides = [1, 1]} : vector<8x384xf32> to vector<8x128xf32>
    %18 = arith.addf %16, %17 : vector<8x128xf32>
    %19 = arith.negf %18 : vector<8x128xf32>
    %20 = math.exp %19 : vector<8x128xf32>
    %cst_14 = arith.constant 1.000000e+00 : f32
    %21 = vector.broadcast %cst_14 : f32 to vector<8x128xf32>
    %22 = arith.addf %21, %20 : vector<8x128xf32>
    %23 = arith.divf %21, %22 : vector<8x128xf32>
    %24 = vector.extract_strided_slice %10 {offsets = [0, 128], sizes = [8, 128], strides = [1, 1]} : vector<8x384xf32> to vector<8x128xf32>
    %25 = vector.extract_strided_slice %15 {offsets = [0, 128], sizes = [8, 128], strides = [1, 1]} : vector<8x384xf32> to vector<8x128xf32>
    %26 = arith.addf %24, %25 : vector<8x128xf32>
    %27 = arith.negf %26 : vector<8x128xf32>
    %28 = math.exp %27 : vector<8x128xf32>
    %cst_15 = arith.constant 1.000000e+00 : f32
    %29 = vector.broadcast %cst_15 : f32 to vector<8x128xf32>
    %30 = arith.addf %29, %28 : vector<8x128xf32>
    %31 = arith.divf %29, %30 : vector<8x128xf32>
    %32 = vector.extract_strided_slice %10 {offsets = [0, 256], sizes = [8, 128], strides = [1, 1]} : vector<8x384xf32> to vector<8x128xf32>
    %33 = vector.extract_strided_slice %15 {offsets = [0, 256], sizes = [8, 128], strides = [1, 1]} : vector<8x384xf32> to vector<8x128xf32>
    %34 = arith.mulf %23, %33 : vector<8x128xf32>
    %35 = arith.addf %32, %34 : vector<8x128xf32>
    %36 = math.tanh %35 : vector<8x128xf32>
    %cst_16 = arith.constant 1.000000e+00 : f32
    %37 = vector.broadcast %cst_16 : f32 to vector<8x128xf32>
    %38 = arith.subf %37, %31 : vector<8x128xf32>
    %39 = arith.mulf %38, %36 : vector<8x128xf32>
    %40 = arith.mulf %31, %3 : vector<8x128xf32>
    %41 = arith.addf %39, %40 : vector<8x128xf32>
    %c0_17 = arith.constant 0 : index
    %c0_18 = arith.constant 0 : index
    %c0_19 = arith.constant 0 : index
    %42 = vector.load %arg2[%c0_17, %c0_18, %c0_19] : memref<1x8x1xf32, #tpu.memory_space<vmem>>, vector<1x8x1xf32>
    %43 = vector.shape_cast %42 : vector<1x8x1xf32> to vector<8x1xf32>
    %44 = vector.broadcast %43 : vector<8x1xf32> to vector<8x128xf32>
    %45 = arith.mulf %44, %41 : vector<8x128xf32>
    %cst_20 = arith.constant 1.000000e+00 : f32
    %46 = vector.broadcast %cst_20 : f32 to vector<8x1xf32>
    %47 = arith.subf %46, %43 : vector<8x1xf32>
    %48 = vector.broadcast %47 : vector<8x1xf32> to vector<8x128xf32>
    %49 = arith.mulf %48, %3 : vector<8x128xf32>
    %50 = arith.addf %45, %49 : vector<8x128xf32>
    %c0_21 = arith.constant 0 : index
    %c0_22 = arith.constant 0 : index
    %51 = vector.load %arg7[%c0_21, %c0_22] : memref<8x128xf32, #tpu.memory_space<vmem>>, vector<8x128xf32>
    tpu.vector_store %arg7[%c0_21, %c0_22], %50 {strides = array<i32>} : memref<8x128xf32, #tpu.memory_space<vmem>>, vector<8x128xf32>,
    return
  }
  func.func @transform_0(%arg0: i32) -> (i32, i32, i32) {
    %c0_i32 = arith.constant 0 : i32
    %c0_i32_0 = arith.constant 0 : i32
    %c0_i32_1 = arith.constant 0 : i32
    return %arg0, %c0_i32, %c0_i32_0 : i32, i32, i32
  }
  func.func @transform_1(%arg0: i32) -> (i32, i32, i32) {
    %c0_i32 = arith.constant 0 : i32
    %c0_i32_0 = arith.constant 0 : i32
    %c0_i32_1 = arith.constant 0 : i32
    return %arg0, %c0_i32, %c0_i32_0 : i32, i32, i32
  }
  func.func @transform_2(%arg0: i32) -> (i32, i32) {
    %c0_i32 = arith.constant 0 : i32
    %c0_i32_0 = arith.constant 0 : i32
    %c0_i32_1 = arith.constant 0 : i32
    return %c0_i32, %c0_i32_0 : i32, i32
  }
  func.func @transform_3(%arg0: i32) -> (i32, i32) {
    %c0_i32 = arith.constant 0 : i32
    %c0_i32_0 = arith.constant 0 : i32
    %c0_i32_1 = arith.constant 0 : i32
    return %c0_i32, %c0_i32_0 : i32, i32
  }
  func.func @transform_4(%arg0: i32) -> (i32, i32) {
    %c0_i32 = arith.constant 0 : i32
    %c0_i32_0 = arith.constant 0 : i32
    %c0_i32_1 = arith.constant 0 : i32
    return %c0_i32, %c0_i32_0 : i32, i32
  }
  func.func @transform_5(%arg0: i32) -> (i32, i32) {
    %c0_i32 = arith.constant 0 : i32
    %c0_i32_0 = arith.constant 0 : i32
    %c0_i32_1 = arith.constant 0 : i32
    return %c0_i32, %c0_i32_0 : i32, i32
  }
  func.func @transform_6(%arg0: i32) -> (i32, i32) {
    %c0_i32 = arith.constant 0 : i32
    %c0_i32_0 = arith.constant 0 : i32
    %c0_i32_1 = arith.constant 0 : i32
    return %c0_i32, %c0_i32_0 : i32, i32
  }
}

module attributes {stable_mosaic.version = 11 : i64} {
  func.func @_seq_gru_kernel(%arg0: i32, %arg1: memref<1x8x128xf32, #tpu.memory_space<vmem>>, %arg2: memref<1x8x1xf32, #tpu.memory_space<vmem>>, %arg3: memref<128x384xf32, #tpu.memory_space<vmem>>, %arg4: memref<128x384xf32, #tpu.memory_space<vmem>>, %arg5: memref<1x384xf32, #tpu.memory_space<vmem>>, %arg6: memref<1x384xf32, #tpu.memory_space<vmem>>, %arg7: memref<8x128xf32, #tpu.memory_space<vmem>>) attributes {dimension_semantics = [#tpu.dimension_semantics<arbitrary>], iteration_bounds = array<i64: 6>, scalar_prefetch = 0 : i64, scratch_operands = 0 : i64, tpu.core_type = #tpu.core_type<tc>, window_params = [{transform_indices = @transform_0, window_bounds = array<i64: 1, 8, 128>}, {transform_indices = @transform_1, window_bounds = array<i64: 1, 8, 1>}, {pipeline_mode = #tpu.pipeline_mode<synchronous>, transform_indices = @transform_2, window_bounds = array<i64: 128, 384>}, {pipeline_mode = #tpu.pipeline_mode<synchronous>, transform_indices = @transform_3, window_bounds = array<i64: 128, 384>}, {pipeline_mode = #tpu.pipeline_mode<synchronous>, transform_indices = @transform_4, window_bounds = array<i64: 1, 384>}, {pipeline_mode = #tpu.pipeline_mode<synchronous>, transform_indices = @transform_5, window_bounds = array<i64: 1, 384>}, {pipeline_mode = #tpu.pipeline_mode<synchronous>, transform_indices = @transform_6, window_bounds = array<i64: 8, 128>}]} {
    %c0_i32 = arith.constant 0 : i32
    %0 = arith.cmpi eq, %arg0, %c0_i32 : i32
    %1 = arith.extui %0 : i1 to i32
    %c0_i32_0 = arith.constant 0 : i32
    %2 = arith.cmpi ne, %1, %c0_i32_0 : i32
    scf.if %2 {
      %cst_23 = arith.constant 0.000000e+00 : f32
      %52 = vector.broadcast %cst_23 : f32 to vector<8x128xf32>
      %c0_24 = arith.constant 0 : index
      %c0_25 = arith.constant 0 : index
      %53 = vector.load %arg7[%c0_24, %c0_25] : memref<8x128xf32, #tpu.memory_space<vmem>>, vector<8x128xf32>
      tpu.vector_store %arg7[%c0_24, %c0_25], %52 {strides = array<i32>} : memref<8x128xf32, #tpu.memory_space<vmem>>, vector<8x128xf32>,
    } else {
    }
    %c0 = arith.constant 0 : index
    %c0_1 = arith.constant 0 : index
    %3 = vector.load %arg7[%c0, %c0_1] : memref<8x128xf32, #tpu.memory_space<vmem>>, vector<8x128xf32>
    %c0_2 = arith.constant 0 : index
    %c0_3 = arith.constant 0 : index
    %c0_4 = arith.constant 0 : index
    %4 = vector.load %arg1[%c0_2, %c0_3, %c0_4] : memref<1x8x128xf32, #tpu.memory_space<vmem>>, vector<1x8x128xf32>
    %5 = vector.shape_cast %4 : vector<1x8x128xf32> to vector<8x128xf32>
    %c0_5 = arith.constant 0 : index
    %c0_6 = arith.constant 0 : index
    %6 = vector.load %arg3[%c0_5, %c0_6] : memref<128x384xf32, #tpu.memory_space<vmem>>, vector<128x384xf32>
    %cst = arith.constant dense<0.000000e+00> : vector<8x384xf32>
    %7 = tpu.matmul %5, %6, %cst {dimension_numbers = #tpu.dot_dimension_numbers<[1], [0], [0], [1], [0, 0, 1, 1], [], []>} : vector<8x128xf32>, vector<128x384xf32>, vector<8x384xf32> -> vector<8x384xf32>
    %c0_7 = arith.constant 0 : index
    %c0_8 = arith.constant 0 : index
    %8 = vector.load %arg5[%c0_7, %c0_8] : memref<1x384xf32, #tpu.memory_space<vmem>>, vector<1x384xf32>
    %9 = vector.broadcast %8 : vector<1x384xf32> to vector<8x384xf32>
    %10 = arith.addf %7, %9 : vector<8x384xf32>
    %c0_9 = arith.constant 0 : index
    %c0_10 = arith.constant 0 : index
    %11 = vector.load %arg4[%c0_9, %c0_10] : memref<128x384xf32, #tpu.memory_space<vmem>>, vector<128x384xf32>
    %cst_11 = arith.constant dense<0.000000e+00> : vector<8x384xf32>
    %12 = tpu.matmul %3, %11, %cst_11 {dimension_numbers = #tpu.dot_dimension_numbers<[1], [0], [0], [1], [0, 0, 1, 1], [], []>} : vector<8x128xf32>, vector<128x384xf32>, vector<8x384xf32> -> vector<8x384xf32>
    %c0_12 = arith.constant 0 : index
    %c0_13 = arith.constant 0 : index
    %13 = vector.load %arg6[%c0_12, %c0_13] : memref<1x384xf32, #tpu.memory_space<vmem>>, vector<1x384xf32>
    %14 = vector.broadcast %13 : vector<1x384xf32> to vector<8x384xf32>
    %15 = arith.addf %12, %14 : vector<8x384xf32>
    %16 = vector.extract_strided_slice %10 {offsets = [0, 0], sizes = [8, 128], strides = [1, 1]} : vector<8x384xf32> to vector<8x128xf32>
    %17 = vector.extract_strided_slice %15 {offsets = [0, 0], sizes = [8, 128], strides = [1, 1]} : vector<8x384xf32> to vector<8x128xf32>
    %18 = arith.addf %16, %17 : vector<8x128xf32>
    %19 = arith.negf %18 : vector<8x128xf32>
    %20 = math.exp %19 : vector<8x128xf32>
    %cst_14 = arith.constant 1.000000e+00 : f32
    %21 = vector.broadcast %cst_14 : f32 to vector<8x128xf32>
    %22 = arith.addf %21, %20 : vector<8x128xf32>
    %23 = arith.divf %21, %22 : vector<8x128xf32>
    %24 = vector.extract_strided_slice %10 {offsets = [0, 128], sizes = [8, 128], strides = [1, 1]} : vector<8x384xf32> to vector<8x128xf32>
    %25 = vector.extract_strided_slice %15 {offsets = [0, 128], sizes = [8, 128], strides = [1, 1]} : vector<8x384xf32> to vector<8x128xf32>
    %26 = arith.addf %24, %25 : vector<8x128xf32>
    %27 = arith.negf %26 : vector<8x128xf32>
    %28 = math.exp %27 : vector<8x128xf32>
    %cst_15 = arith.constant 1.000000e+00 : f32
    %29 = vector.broadcast %cst_15 : f32 to vector<8x128xf32>
    %30 = arith.addf %29, %28 : vector<8x128xf32>
    %31 = arith.divf %29, %30 : vector<8x128xf32>
    %32 = vector.extract_strided_slice %10 {offsets = [0, 256], sizes = [8, 128], strides = [1, 1]} : vector<8x384xf32> to vector<8x128xf32>
    %33 = vector.extract_strided_slice %15 {offsets = [0, 256], sizes = [8, 128], strides = [1, 1]} : vector<8x384xf32> to vector<8x128xf32>
    %34 = arith.mulf %23, %33 : vector<8x128xf32>
    %35 = arith.addf %32, %34 : vector<8x128xf32>
    %36 = math.tanh %35 : vector<8x128xf32>
    %cst_16 = arith.constant 1.000000e+00 : f32
    %37 = vector.broadcast %cst_16 : f32 to vector<8x128xf32>
    %38 = arith.subf %37, %31 : vector<8x128xf32>
    %39 = arith.mulf %38, %36 : vector<8x128xf32>
    %40 = arith.mulf %31, %3 : vector<8x128xf32>
    %41 = arith.addf %39, %40 : vector<8x128xf32>
    %c0_17 = arith.constant 0 : index
    %c0_18 = arith.constant 0 : index
    %c0_19 = arith.constant 0 : index
    %42 = vector.load %arg2[%c0_17, %c0_18, %c0_19] : memref<1x8x1xf32, #tpu.memory_space<vmem>>, vector<1x8x1xf32>
    %43 = vector.shape_cast %42 : vector<1x8x1xf32> to vector<8x1xf32>
    %44 = vector.broadcast %43 : vector<8x1xf32> to vector<8x128xf32>
    %45 = arith.mulf %44, %41 : vector<8x128xf32>
    %cst_20 = arith.constant 1.000000e+00 : f32
    %46 = vector.broadcast %cst_20 : f32 to vector<8x1xf32>
    %47 = arith.subf %46, %43 : vector<8x1xf32>
    %48 = vector.broadcast %47 : vector<8x1xf32> to vector<8x128xf32>
    %49 = arith.mulf %48, %3 : vector<8x128xf32>
    %50 = arith.addf %45, %49 : vector<8x128xf32>
    %c0_21 = arith.constant 0 : index
    %c0_22 = arith.constant 0 : index
    %51 = vector.load %arg7[%c0_21, %c0_22] : memref<8x128xf32, #tpu.memory_space<vmem>>, vector<8x128xf32>
    tpu.vector_store %arg7[%c0_21, %c0_22], %50 {strides = array<i32>} : memref<8x128xf32, #tpu.memory_space<vmem>>, vector<8x128xf32>,
    return
  }
  func.func @transform_0(%arg0: i32) -> (i32, i32, i32) {
    %c0_i32 = arith.constant 0 : i32
    %c0_i32_0 = arith.constant 0 : i32
    %c0_i32_1 = arith.constant 0 : i32
    return %arg0, %c0_i32, %c0_i32_0 : i32, i32, i32
  }
  func.func @transform_1(%arg0: i32) -> (i32, i32, i32) {
    %c0_i32 = arith.constant 0 : i32
    %c0_i32_0 = arith.constant 0 : i32
    %c0_i32_1 = arith.constant 0 : i32
    return %arg0, %c0_i32, %c0_i32_0 : i32, i32, i32
  }
  func.func @transform_2(%arg0: i32) -> (i32, i32) {
    %c0_i32 = arith.constant 0 : i32
    %c0_i32_0 = arith.constant 0 : i32
    %c0_i32_1 = arith.constant 0 : i32
    return %c0_i32, %c0_i32_0 : i32, i32
  }
  func.func @transform_3(%arg0: i32) -> (i32, i32) {
    %c0_i32 = arith.constant 0 : i32
    %c0_i32_0 = arith.constant 0 : i32
    %c0_i32_1 = arith.constant 0 : i32
    return %c0_i32, %c0_i32_0 : i32, i32
  }
  func.func @transform_4(%arg0: i32) -> (i32, i32) {
    %c0_i32 = arith.constant 0 : i32
    %c0_i32_0 = arith.constant 0 : i32
    %c0_i32_1 = arith.constant 0 : i32
    return %c0_i32, %c0_i32_0 : i32, i32
  }
  func.func @transform_5(%arg0: i32) -> (i32, i32) {
    %c0_i32 = arith.constant 0 : i32
    %c0_i32_0 = arith.constant 0 : i32
    %c0_i32_1 = arith.constant 0 : i32
    return %c0_i32, %c0_i32_0 : i32, i32
  }
  func.func @transform_6(%arg0: i32) -> (i32, i32) {
    %c0_i32 = arith.constant 0 : i32
    %c0_i32_0 = arith.constant 0 : i32
    %c0_i32_1 = arith.constant 0 : i32
    return %c0_i32, %c0_i32_0 : i32, i32
  }
}

module attributes {stable_mosaic.version = 11 : i64} {
  func.func @_episodic_kernel(%arg0: i32, %arg1: i32, %arg2: memref<1x8x128xf32, #tpu.memory_space<vmem>>, %arg3: memref<8x128xf32, #tpu.memory_space<vmem>>, %arg4: memref<512x128xf32, #tpu.memory_space<vmem>>, %arg5: memref<1x128xf32, #tpu.memory_space<vmem>>, %arg6: memref<1x128xf32, #tpu.memory_space<vmem>>, %arg7: memref<1x128xf32, #tpu.memory_space<vmem>>, %arg8: memref<128x384xf32, #tpu.memory_space<vmem>>, %arg9: memref<128x384xf32, #tpu.memory_space<vmem>>, %arg10: memref<1x384xf32, #tpu.memory_space<vmem>>, %arg11: memref<1x384xf32, #tpu.memory_space<vmem>>, %arg12: memref<128x384xf32, #tpu.memory_space<vmem>>, %arg13: memref<128x384xf32, #tpu.memory_space<vmem>>, %arg14: memref<1x384xf32, #tpu.memory_space<vmem>>, %arg15: memref<1x384xf32, #tpu.memory_space<vmem>>, %arg16: memref<8x128xf32, #tpu.memory_space<vmem>>, %arg17: memref<8x128xf32, #tpu.memory_space<vmem>>) attributes {dimension_semantics = [#tpu.dimension_semantics<arbitrary>, #tpu.dimension_semantics<arbitrary>], iteration_bounds = array<i64: 2, 3>, scalar_prefetch = 0 : i64, scratch_operands = 1 : i64, tpu.core_type = #tpu.core_type<tc>, window_params = [{transform_indices = @transform_0, window_bounds = array<i64: 1, 8, 128>}, {pipeline_mode = #tpu.pipeline_mode<synchronous>, transform_indices = @transform_1, window_bounds = array<i64: 8, 128>}, {pipeline_mode = #tpu.pipeline_mode<synchronous>, transform_indices = @transform_2, window_bounds = array<i64: 512, 128>}, {pipeline_mode = #tpu.pipeline_mode<synchronous>, transform_indices = @transform_3, window_bounds = array<i64: 1, 128>}, {pipeline_mode = #tpu.pipeline_mode<synchronous>, transform_indices = @transform_4, window_bounds = array<i64: 1, 128>}, {pipeline_mode = #tpu.pipeline_mode<synchronous>, transform_indices = @transform_5, window_bounds = array<i64: 1, 128>}, {pipeline_mode = #tpu.pipeline_mode<synchronous>, transform_indices = @transform_6, window_bounds = array<i64: 128, 384>}, {pipeline_mode = #tpu.pipeline_mode<synchronous>, transform_indices = @transform_7, window_bounds = array<i64: 128, 384>}, {pipeline_mode = #tpu.pipeline_mode<synchronous>, transform_indices = @transform_8, window_bounds = array<i64: 1, 384>}, {pipeline_mode = #tpu.pipeline_mode<synchronous>, transform_indices = @transform_9, window_bounds = array<i64: 1, 384>}, {pipeline_mode = #tpu.pipeline_mode<synchronous>, transform_indices = @transform_10, window_bounds = array<i64: 128, 384>}, {pipeline_mode = #tpu.pipeline_mode<synchronous>, transform_indices = @transform_11, window_bounds = array<i64: 128, 384>}, {pipeline_mode = #tpu.pipeline_mode<synchronous>, transform_indices = @transform_12, window_bounds = array<i64: 1, 384>}, {pipeline_mode = #tpu.pipeline_mode<synchronous>, transform_indices = @transform_13, window_bounds = array<i64: 1, 384>}, {pipeline_mode = #tpu.pipeline_mode<synchronous>, transform_indices = @transform_14, window_bounds = array<i64: 8, 128>}]} {
    %c0_i32 = arith.constant 0 : i32
    %0 = arith.cmpi eq, %arg0, %c0_i32 : i32
    %c0_i32_0 = arith.constant 0 : i32
    %1 = arith.cmpi eq, %arg1, %c0_i32_0 : i32
    %2 = arith.andi %0, %1 : i1
    %3 = arith.extui %2 : i1 to i32
    %c0_i32_1 = arith.constant 0 : i32
    %4 = arith.cmpi ne, %3, %c0_i32_1 : i32
    scf.if %4 {
      %c0_42 = arith.constant 0 : index
      %c0_43 = arith.constant 0 : index
      %94 = vector.load %arg3[%c0_42, %c0_43] : memref<8x128xf32, #tpu.memory_space<vmem>>, vector<8x128xf32>
      %c0_44 = arith.constant 0 : index
      %c0_45 = arith.constant 0 : index
      %95 = vector.load %arg16[%c0_44, %c0_45] : memref<8x128xf32, #tpu.memory_space<vmem>>, vector<8x128xf32>
      tpu.vector_store %arg16[%c0_44, %c0_45], %94 {strides = array<i32>} : memref<8x128xf32, #tpu.memory_space<vmem>>, vector<8x128xf32>,
    } else {
    }
    %c0_i32_2 = arith.constant 0 : i32
    %5 = arith.cmpi eq, %arg1, %c0_i32_2 : i32
    %6 = arith.extui %5 : i1 to i32
    %c0_i32_3 = arith.constant 0 : i32
    %7 = arith.cmpi ne, %6, %c0_i32_3 : i32
    scf.if %7 {
      %cst_42 = arith.constant 0.000000e+00 : f32
      %94 = vector.broadcast %cst_42 : f32 to vector<8x128xf32>
      %c0_43 = arith.constant 0 : index
      %c0_44 = arith.constant 0 : index
      %95 = vector.load %arg17[%c0_43, %c0_44] : memref<8x128xf32, #tpu.memory_space<vmem>>, vector<8x128xf32>
      tpu.vector_store %arg17[%c0_43, %c0_44], %94 {strides = array<i32>} : memref<8x128xf32, #tpu.memory_space<vmem>>, vector<8x128xf32>,
    } else {
    }
    %c0 = arith.constant 0 : index
    %c0_4 = arith.constant 0 : index
    %c0_5 = arith.constant 0 : index
    %8 = vector.load %arg2[%c0, %c0_4, %c0_5] : memref<1x8x128xf32, #tpu.memory_space<vmem>>, vector<1x8x128xf32>
    %9 = vector.shape_cast %8 : vector<1x8x128xf32> to vector<8x128xf32>
    %c0_6 = arith.constant 0 : index
    %c0_7 = arith.constant 0 : index
    %10 = vector.load %arg3[%c0_6, %c0_7] : memref<8x128xf32, #tpu.memory_space<vmem>>, vector<8x128xf32>
    %c0_8 = arith.constant 0 : index
    %c0_9 = arith.constant 0 : index
    %11 = vector.load %arg16[%c0_8, %c0_9] : memref<8x128xf32, #tpu.memory_space<vmem>>, vector<8x128xf32>
    %c0_10 = arith.constant 0 : index
    %c0_11 = arith.constant 0 : index
    %12 = vector.load %arg17[%c0_10, %c0_11] : memref<8x128xf32, #tpu.memory_space<vmem>>, vector<8x128xf32>
    %c0_12 = arith.constant 0 : index
    %c0_13 = arith.constant 0 : index
    %13 = vector.load %arg4[%c0_12, %c0_13] : memref<512x128xf32, #tpu.memory_space<vmem>>, vector<512x128xf32>
    %14 = arith.mulf %9, %10 : vector<8x128xf32>
    %15 = vector.extract_strided_slice %13 {offsets = [0, 0], sizes = [128, 128], strides = [1, 1]} : vector<512x128xf32> to vector<128x128xf32>
    %cst = arith.constant dense<0.000000e+00> : vector<8x128xf32>
    %16 = tpu.matmul %14, %15, %cst {dimension_numbers = #tpu.dot_dimension_numbers<[1], [0], [0], [1], [0, 0, 1, 1], [], []>} : vector<8x128xf32>, vector<128x128xf32>, vector<8x128xf32> -> vector<8x128xf32>
    %17 = arith.mulf %9, %11 : vector<8x128xf32>
    %18 = vector.extract_strided_slice %13 {offsets = [128, 0], sizes = [128, 128], strides = [1, 1]} : vector<512x128xf32> to vector<128x128xf32>
    %cst_14 = arith.constant dense<0.000000e+00> : vector<8x128xf32>
    %19 = tpu.matmul %17, %18, %cst_14 {dimension_numbers = #tpu.dot_dimension_numbers<[1], [0], [0], [1], [0, 0, 1, 1], [], []>} : vector<8x128xf32>, vector<128x128xf32>, vector<8x128xf32> -> vector<8x128xf32>
    %20 = arith.addf %16, %19 : vector<8x128xf32>
    %21 = arith.subf %9, %10 : vector<8x128xf32>
    %22 = math.absf %21 : vector<8x128xf32>
    %23 = vector.extract_strided_slice %13 {offsets = [256, 0], sizes = [128, 128], strides = [1, 1]} : vector<512x128xf32> to vector<128x128xf32>
    %cst_15 = arith.constant dense<0.000000e+00> : vector<8x128xf32>
    %24 = tpu.matmul %22, %23, %cst_15 {dimension_numbers = #tpu.dot_dimension_numbers<[1], [0], [0], [1], [0, 0, 1, 1], [], []>} : vector<8x128xf32>, vector<128x128xf32>, vector<8x128xf32> -> vector<8x128xf32>
    %25 = arith.addf %20, %24 : vector<8x128xf32>
    %26 = arith.subf %9, %11 : vector<8x128xf32>
    %27 = math.absf %26 : vector<8x128xf32>
    %28 = vector.extract_strided_slice %13 {offsets = [384, 0], sizes = [128, 128], strides = [1, 1]} : vector<512x128xf32> to vector<128x128xf32>
    %cst_16 = arith.constant dense<0.000000e+00> : vector<8x128xf32>
    %29 = tpu.matmul %27, %28, %cst_16 {dimension_numbers = #tpu.dot_dimension_numbers<[1], [0], [0], [1], [0, 0, 1, 1], [], []>} : vector<8x128xf32>, vector<128x128xf32>, vector<8x128xf32> -> vector<8x128xf32>
    %30 = arith.addf %25, %29 : vector<8x128xf32>
    %c0_17 = arith.constant 0 : index
    %c0_18 = arith.constant 0 : index
    %31 = vector.load %arg5[%c0_17, %c0_18] : memref<1x128xf32, #tpu.memory_space<vmem>>, vector<1x128xf32>
    %32 = vector.broadcast %31 : vector<1x128xf32> to vector<8x128xf32>
    %33 = arith.addf %30, %32 : vector<8x128xf32>
    %34 = math.tanh %33 : vector<8x128xf32>
    %c0_19 = arith.constant 0 : index
    %c0_20 = arith.constant 0 : index
    %35 = vector.load %arg6[%c0_19, %c0_20] : memref<1x128xf32, #tpu.memory_space<vmem>>, vector<1x128xf32>
    %36 = vector.broadcast %35 : vector<1x128xf32> to vector<8x128xf32>
    %37 = arith.mulf %34, %36 : vector<8x128xf32>
    %cst_21 = arith.constant dense<0.000000e+00> : vector<8xf32>
    %38 = vector.multi_reduction <add>, %37, %cst_21 [1] : vector<8x128xf32> to vector<8xf32>
    %39 = vector.shape_cast %38 : vector<8xf32> to vector<8x1xf32>
    %c0_22 = arith.constant 0 : index
    %c0_23 = arith.constant 0 : index
    %40 = vector.load %arg7[%c0_22, %c0_23] : memref<1x128xf32, #tpu.memory_space<vmem>>, vector<1x128xf32>
    %41 = vector.broadcast %39 : vector<8x1xf32> to vector<8x128xf32>
    %42 = vector.broadcast %40 : vector<1x128xf32> to vector<8x128xf32>
    %43 = arith.addf %41, %42 : vector<8x128xf32>
    %44 = arith.negf %43 : vector<8x128xf32>
    %45 = math.exp %44 : vector<8x128xf32>
    %cst_24 = arith.constant 1.000000e+00 : f32
    %46 = vector.broadcast %cst_24 : f32 to vector<8x128xf32>
    %47 = arith.addf %46, %45 : vector<8x128xf32>
    %48 = arith.divf %46, %47 : vector<8x128xf32>
    %c0_25 = arith.constant 0 : index
    %c0_26 = arith.constant 0 : index
    %49 = vector.load %arg8[%c0_25, %c0_26] : memref<128x384xf32, #tpu.memory_space<vmem>>, vector<128x384xf32>
    %cst_27 = arith.constant dense<0.000000e+00> : vector<8x384xf32>
    %50 = tpu.matmul %9, %49, %cst_27 {dimension_numbers = #tpu.dot_dimension_numbers<[1], [0], [0], [1], [0, 0, 1, 1], [], []>} : vector<8x128xf32>, vector<128x384xf32>, vector<8x384xf32> -> vector<8x384xf32>
    %c0_28 = arith.constant 0 : index
    %c0_29 = arith.constant 0 : index
    %51 = vector.load %arg10[%c0_28, %c0_29] : memref<1x384xf32, #tpu.memory_space<vmem>>, vector<1x384xf32>
    %52 = vector.broadcast %51 : vector<1x384xf32> to vector<8x384xf32>
    %53 = arith.addf %50, %52 : vector<8x384xf32>
    %c0_30 = arith.constant 0 : index
    %c0_31 = arith.constant 0 : index
    %54 = vector.load %arg9[%c0_30, %c0_31] : memref<128x384xf32, #tpu.memory_space<vmem>>, vector<128x384xf32>
    %cst_32 = arith.constant dense<0.000000e+00> : vector<8x384xf32>
    %55 = tpu.matmul %12, %54, %cst_32 {dimension_numbers = #tpu.dot_dimension_numbers<[1], [0], [0], [1], [0, 0, 1, 1], [], []>} : vector<8x128xf32>, vector<128x384xf32>, vector<8x384xf32> -> vector<8x384xf32>
    %c0_33 = arith.constant 0 : index
    %c0_34 = arith.constant 0 : index
    %56 = vector.load %arg11[%c0_33, %c0_34] : memref<1x384xf32, #tpu.memory_space<vmem>>, vector<1x384xf32>
    %57 = vector.broadcast %56 : vector<1x384xf32> to vector<8x384xf32>
    %58 = arith.addf %55, %57 : vector<8x384xf32>
    %59 = vector.extract_strided_slice %53 {offsets = [0, 0], sizes = [8, 128], strides = [1, 1]} : vector<8x384xf32> to vector<8x128xf32>
    %60 = vector.extract_strided_slice %58 {offsets = [0, 0], sizes = [8, 128], strides = [1, 1]} : vector<8x384xf32> to vector<8x128xf32>
    %61 = arith.addf %59, %60 : vector<8x128xf32>
    %62 = arith.negf %61 : vector<8x128xf32>
    %63 = math.exp %62 : vector<8x128xf32>
    %cst_35 = arith.constant 1.000000e+00 : f32
    %64 = vector.broadcast %cst_35 : f32 to vector<8x128xf32>
    %65 = arith.addf %64, %63 : vector<8x128xf32>
    %66 = arith.divf %64, %65 : vector<8x128xf32>
    %67 = vector.extract_strided_slice %53 {offsets = [0, 128], sizes = [8, 128], strides = [1, 1]} : vector<8x384xf32> to vector<8x128xf32>
    %68 = vector.extract_strided_slice %58 {offsets = [0, 128], sizes = [8, 128], strides = [1, 1]} : vector<8x384xf32> to vector<8x128xf32>
    %69 = arith.addf %67, %68 : vector<8x128xf32>
    %70 = arith.negf %69 : vector<8x128xf32>
    %71 = math.exp %70 : vector<8x128xf32>
    %cst_36 = arith.constant 1.000000e+00 : f32
    %72 = vector.broadcast %cst_36 : f32 to vector<8x128xf32>
    %73 = arith.addf %72, %71 : vector<8x128xf32>
    %74 = arith.divf %72, %73 : vector<8x128xf32>
    %75 = vector.extract_strided_slice %53 {offsets = [0, 256], sizes = [8, 128], strides = [1, 1]} : vector<8x384xf32> to vector<8x128xf32>
    %76 = vector.extract_strided_slice %58 {offsets = [0, 256], sizes = [8, 128], strides = [1, 1]} : vector<8x384xf32> to vector<8x128xf32>
    %77 = arith.mulf %66, %76 : vector<8x128xf32>
    %78 = arith.addf %75, %77 : vector<8x128xf32>
    %79 = math.tanh %78 : vector<8x128xf32>
    %cst_37 = arith.constant 1.000000e+00 : f32
    %80 = vector.broadcast %cst_37 : f32 to vector<8x128xf32>
    %81 = arith.subf %80, %74 : vector<8x128xf32>
    %82 = arith.mulf %81, %79 : vector<8x128xf32>
    %83 = arith.mulf %74, %12 : vector<8x128xf32>
    %84 = arith.addf %82, %83 : vector<8x128xf32>
    %85 = arith.mulf %48, %84 : vector<8x128xf32>
    %cst_38 = arith.constant 1.000000e+00 : f32
    %86 = vector.broadcast %cst_38 : f32 to vector<8x128xf32>
    %87 = arith.subf %86, %48 : vector<8x128xf32>
    %88 = arith.mulf %87, %12 : vector<8x128xf32>
    %89 = arith.addf %85, %88 : vector<8x128xf32>
    %c0_39 = arith.constant 0 : index
    %c0_40 = arith.constant 0 : index
    %90 = vector.load %arg17[%c0_39, %c0_40] : memref<8x128xf32, #tpu.memory_space<vmem>>, vector<8x128xf32>
    tpu.vector_store %arg17[%c0_39, %c0_40], %89 {strides = array<i32>} : memref<8x128xf32, #tpu.memory_space<vmem>>, vector<8x128xf32>,
    %c2_i32 = arith.constant 2 : i32
    %91 = arith.cmpi eq, %arg1, %c2_i32 : i32
    %92 = arith.extui %91 : i1 to i32
    %c0_i32_41 = arith.constant 0 : i32
    %93 = arith.cmpi ne, %92, %c0_i32_41 : i32
    scf.if %93 {
      %c0_42 = arith.constant 0 : index
      %c0_43 = arith.constant 0 : index
      %94 = vector.load %arg12[%c0_42, %c0_43] : memref<128x384xf32, #tpu.memory_space<vmem>>, vector<128x384xf32>
      %cst_44 = arith.constant dense<0.000000e+00> : vector<8x384xf32>
      %95 = tpu.matmul %89, %94, %cst_44 {dimension_numbers = #tpu.dot_dimension_numbers<[1], [0], [0], [1], [0, 0, 1, 1], [], []>} : vector<8x128xf32>, vector<128x384xf32>, vector<8x384xf32> -> vector<8x384xf32>
      %c0_45 = arith.constant 0 : index
      %c0_46 = arith.constant 0 : index
      %96 = vector.load %arg14[%c0_45, %c0_46] : memref<1x384xf32, #tpu.memory_space<vmem>>, vector<1x384xf32>
      %97 = vector.broadcast %96 : vector<1x384xf32> to vector<8x384xf32>
      %98 = arith.addf %95, %97 : vector<8x384xf32>
      %c0_47 = arith.constant 0 : index
      %c0_48 = arith.constant 0 : index
      %99 = vector.load %arg13[%c0_47, %c0_48] : memref<128x384xf32, #tpu.memory_space<vmem>>, vector<128x384xf32>
      %cst_49 = arith.constant dense<0.000000e+00> : vector<8x384xf32>
      %100 = tpu.matmul %11, %99, %cst_49 {dimension_numbers = #tpu.dot_dimension_numbers<[1], [0], [0], [1], [0, 0, 1, 1], [], []>} : vector<8x128xf32>, vector<128x384xf32>, vector<8x384xf32> -> vector<8x384xf32>
      %c0_50 = arith.constant 0 : index
      %c0_51 = arith.constant 0 : index
      %101 = vector.load %arg15[%c0_50, %c0_51] : memref<1x384xf32, #tpu.memory_space<vmem>>, vector<1x384xf32>
      %102 = vector.broadcast %101 : vector<1x384xf32> to vector<8x384xf32>
      %103 = arith.addf %100, %102 : vector<8x384xf32>
      %104 = vector.extract_strided_slice %98 {offsets = [0, 0], sizes = [8, 128], strides = [1, 1]} : vector<8x384xf32> to vector<8x128xf32>
      %105 = vector.extract_strided_slice %103 {offsets = [0, 0], sizes = [8, 128], strides = [1, 1]} : vector<8x384xf32> to vector<8x128xf32>
      %106 = arith.addf %104, %105 : vector<8x128xf32>
      %107 = arith.negf %106 : vector<8x128xf32>
      %108 = math.exp %107 : vector<8x128xf32>
      %cst_52 = arith.constant 1.000000e+00 : f32
      %109 = vector.broadcast %cst_52 : f32 to vector<8x128xf32>
      %110 = arith.addf %109, %108 : vector<8x128xf32>
      %111 = arith.divf %109, %110 : vector<8x128xf32>
      %112 = vector.extract_strided_slice %98 {offsets = [0, 128], sizes = [8, 128], strides = [1, 1]} : vector<8x384xf32> to vector<8x128xf32>
      %113 = vector.extract_strided_slice %103 {offsets = [0, 128], sizes = [8, 128], strides = [1, 1]} : vector<8x384xf32> to vector<8x128xf32>
      %114 = arith.addf %112, %113 : vector<8x128xf32>
      %115 = arith.negf %114 : vector<8x128xf32>
      %116 = math.exp %115 : vector<8x128xf32>
      %cst_53 = arith.constant 1.000000e+00 : f32
      %117 = vector.broadcast %cst_53 : f32 to vector<8x128xf32>
      %118 = arith.addf %117, %116 : vector<8x128xf32>
      %119 = arith.divf %117, %118 : vector<8x128xf32>
      %120 = vector.extract_strided_slice %98 {offsets = [0, 256], sizes = [8, 128], strides = [1, 1]} : vector<8x384xf32> to vector<8x128xf32>
      %121 = vector.extract_strided_slice %103 {offsets = [0, 256], sizes = [8, 128], strides = [1, 1]} : vector<8x384xf32> to vector<8x128xf32>
      %122 = arith.mulf %111, %121 : vector<8x128xf32>
      %123 = arith.addf %120, %122 : vector<8x128xf32>
      %124 = math.tanh %123 : vector<8x128xf32>
      %cst_54 = arith.constant 1.000000e+00 : f32
      %125 = vector.broadcast %cst_54 : f32 to vector<8x128xf32>
      %126 = arith.subf %125, %119 : vector<8x128xf32>
      %127 = arith.mulf %126, %124 : vector<8x128xf32>
      %128 = arith.mulf %119, %11 : vector<8x128xf32>
      %129 = arith.addf %127, %128 : vector<8x128xf32>
      %c0_55 = arith.constant 0 : index
      %c0_56 = arith.constant 0 : index
      %130 = vector.load %arg16[%c0_55, %c0_56] : memref<8x128xf32, #tpu.memory_space<vmem>>, vector<8x128xf32>
      tpu.vector_store %arg16[%c0_55, %c0_56], %129 {strides = array<i32>} : memref<8x128xf32, #tpu.memory_space<vmem>>, vector<8x128xf32>,
    } else {
    }
    return
  }
  func.func @transform_0(%arg0: i32, %arg1: i32) -> (i32, i32, i32) {
    %c0_i32 = arith.constant 0 : i32
    %c0_i32_0 = arith.constant 0 : i32
    %c0_i32_1 = arith.constant 0 : i32
    return %arg1, %c0_i32, %c0_i32_0 : i32, i32, i32
  }
  func.func @transform_1(%arg0: i32, %arg1: i32) -> (i32, i32) {
    %c0_i32 = arith.constant 0 : i32
    %c0_i32_0 = arith.constant 0 : i32
    %c0_i32_1 = arith.constant 0 : i32
    return %c0_i32, %c0_i32_0 : i32, i32
  }
  func.func @transform_2(%arg0: i32, %arg1: i32) -> (i32, i32) {
    %c0_i32 = arith.constant 0 : i32
    %c0_i32_0 = arith.constant 0 : i32
    %c0_i32_1 = arith.constant 0 : i32
    return %c0_i32, %c0_i32_0 : i32, i32
  }
  func.func @transform_3(%arg0: i32, %arg1: i32) -> (i32, i32) {
    %c0_i32 = arith.constant 0 : i32
    %c0_i32_0 = arith.constant 0 : i32
    %c0_i32_1 = arith.constant 0 : i32
    return %c0_i32, %c0_i32_0 : i32, i32
  }
  func.func @transform_4(%arg0: i32, %arg1: i32) -> (i32, i32) {
    %c0_i32 = arith.constant 0 : i32
    %c0_i32_0 = arith.constant 0 : i32
    %c0_i32_1 = arith.constant 0 : i32
    return %c0_i32, %c0_i32_0 : i32, i32
  }
  func.func @transform_5(%arg0: i32, %arg1: i32) -> (i32, i32) {
    %c0_i32 = arith.constant 0 : i32
    %c0_i32_0 = arith.constant 0 : i32
    %c0_i32_1 = arith.constant 0 : i32
    return %c0_i32, %c0_i32_0 : i32, i32
  }
  func.func @transform_6(%arg0: i32, %arg1: i32) -> (i32, i32) {
    %c0_i32 = arith.constant 0 : i32
    %c0_i32_0 = arith.constant 0 : i32
    %c0_i32_1 = arith.constant 0 : i32
    return %c0_i32, %c0_i32_0 : i32, i32
  }
  func.func @transform_7(%arg0: i32, %arg1: i32) -> (i32, i32) {
    %c0_i32 = arith.constant 0 : i32
    %c0_i32_0 = arith.constant 0 : i32
    %c0_i32_1 = arith.constant 0 : i32
    return %c0_i32, %c0_i32_0 : i32, i32
  }
  func.func @transform_8(%arg0: i32, %arg1: i32) -> (i32, i32) {
    %c0_i32 = arith.constant 0 : i32
    %c0_i32_0 = arith.constant 0 : i32
    %c0_i32_1 = arith.constant 0 : i32
    return %c0_i32, %c0_i32_0 : i32, i32
  }
  func.func @transform_9(%arg0: i32, %arg1: i32) -> (i32, i32) {
    %c0_i32 = arith.constant 0 : i32
    %c0_i32_0 = arith.constant 0 : i32
    %c0_i32_1 = arith.constant 0 : i32
    return %c0_i32, %c0_i32_0 : i32, i32
  }
  func.func @transform_10(%arg0: i32, %arg1: i32) -> (i32, i32) {
    %c0_i32 = arith.constant 0 : i32
    %c0_i32_0 = arith.constant 0 : i32
    %c0_i32_1 = arith.constant 0 : i32
    return %c0_i32, %c0_i32_0 : i32, i32
  }
  func.func @transform_11(%arg0: i32, %arg1: i32) -> (i32, i32) {
    %c0_i32 = arith.constant 0 : i32
    %c0_i32_0 = arith.constant 0 : i32
    %c0_i32_1 = arith.constant 0 : i32
    return %c0_i32, %c0_i32_0 : i32, i32
  }
  func.func @transform_12(%arg0: i32, %arg1: i32) -> (i32, i32) {
    %c0_i32 = arith.constant 0 : i32
    %c0_i32_0 = arith.constant 0 : i32
    %c0_i32_1 = arith.constant 0 : i32
    return %c0_i32, %c0_i32_0 : i32, i32
  }
  func.func @transform_13(%arg0: i32, %arg1: i32) -> (i32, i32) {
    %c0_i32 = arith.constant 0 : i32
    %c0_i32_0 = arith.constant 0 : i32
    %c0_i32_1 = arith.constant 0 : i32
    return %c0_i32, %c0_i32_0 : i32, i32
  }
  func.func @transform_14(%arg0: i32, %arg1: i32) -> (i32, i32) {
    %c0_i32 = arith.constant 0 : i32
    %c0_i32_0 = arith.constant 0 : i32
    %c0_i32_1 = arith.constant 0 : i32
    return %c0_i32, %c0_i32_0 : i32, i32
  }
}

module attributes {stable_mosaic.version = 11 : i64} {
  func.func @_decode_kernel(%arg0: i32, %arg1: memref<8x128xf32, #tpu.memory_space<vmem>>, %arg2: memref<128x128xf32, #tpu.memory_space<vmem>>, %arg3: memref<8x128xf32, #tpu.memory_space<vmem>>, %arg4: memref<8x128xf32, #tpu.memory_space<vmem>>, %arg5: memref<128x384xf32, #tpu.memory_space<vmem>>, %arg6: memref<128x384xf32, #tpu.memory_space<vmem>>, %arg7: memref<128x384xf32, #tpu.memory_space<vmem>>, %arg8: memref<1x384xf32, #tpu.memory_space<vmem>>, %arg9: memref<1x384xf32, #tpu.memory_space<vmem>>, %arg10: memref<128x128xf32, #tpu.memory_space<vmem>>, %arg11: memref<1x128xf32, #tpu.memory_space<vmem>>, %arg12: memref<1x8x128xf32, #tpu.memory_space<vmem>>, %arg13: memref<8x128xf32, #tpu.memory_space<vmem>>, %arg14: memref<8x128xf32, #tpu.memory_space<vmem>>, %arg15: memref<8x384xf32, #tpu.memory_space<vmem>>) attributes {dimension_semantics = [#tpu.dimension_semantics<arbitrary>], iteration_bounds = array<i64: 4>, scalar_prefetch = 0 : i64, scratch_operands = 3 : i64, tpu.core_type = #tpu.core_type<tc>, window_params = [{pipeline_mode = #tpu.pipeline_mode<synchronous>, transform_indices = @transform_0, window_bounds = array<i64: 8, 128>}, {pipeline_mode = #tpu.pipeline_mode<synchronous>, transform_indices = @transform_1, window_bounds = array<i64: 128, 128>}, {pipeline_mode = #tpu.pipeline_mode<synchronous>, transform_indices = @transform_2, window_bounds = array<i64: 8, 128>}, {pipeline_mode = #tpu.pipeline_mode<synchronous>, transform_indices = @transform_3, window_bounds = array<i64: 8, 128>}, {pipeline_mode = #tpu.pipeline_mode<synchronous>, transform_indices = @transform_4, window_bounds = array<i64: 128, 384>}, {pipeline_mode = #tpu.pipeline_mode<synchronous>, transform_indices = @transform_5, window_bounds = array<i64: 128, 384>}, {pipeline_mode = #tpu.pipeline_mode<synchronous>, transform_indices = @transform_6, window_bounds = array<i64: 128, 384>}, {pipeline_mode = #tpu.pipeline_mode<synchronous>, transform_indices = @transform_7, window_bounds = array<i64: 1, 384>}, {pipeline_mode = #tpu.pipeline_mode<synchronous>, transform_indices = @transform_8, window_bounds = array<i64: 1, 384>}, {pipeline_mode = #tpu.pipeline_mode<synchronous>, transform_indices = @transform_9, window_bounds = array<i64: 128, 128>}, {pipeline_mode = #tpu.pipeline_mode<synchronous>, transform_indices = @transform_10, window_bounds = array<i64: 1, 128>}, {transform_indices = @transform_11, window_bounds = array<i64: 1, 8, 128>}]} {
    %c0_i32 = arith.constant 0 : i32
    %0 = arith.cmpi eq, %arg0, %c0_i32 : i32
    %1 = arith.extui %0 : i1 to i32
    %c0_i32_0 = arith.constant 0 : i32
    %2 = arith.cmpi ne, %1, %c0_i32_0 : i32
    scf.if %2 {
      %c0_35 = arith.constant 0 : index
      %c0_36 = arith.constant 0 : index
      %75 = vector.load %arg4[%c0_35, %c0_36] : memref<8x128xf32, #tpu.memory_space<vmem>>, vector<8x128xf32>
      %c0_37 = arith.constant 0 : index
      %c0_38 = arith.constant 0 : index
      %76 = vector.load %arg13[%c0_37, %c0_38] : memref<8x128xf32, #tpu.memory_space<vmem>>, vector<8x128xf32>
      tpu.vector_store %arg13[%c0_37, %c0_38], %75 {strides = array<i32>} : memref<8x128xf32, #tpu.memory_space<vmem>>, vector<8x128xf32>,
      %c0_39 = arith.constant 0 : index
      %c0_40 = arith.constant 0 : index
      %77 = vector.load %arg3[%c0_39, %c0_40] : memref<8x128xf32, #tpu.memory_space<vmem>>, vector<8x128xf32>
      %c0_41 = arith.constant 0 : index
      %c0_42 = arith.constant 0 : index
      %78 = vector.load %arg14[%c0_41, %c0_42] : memref<8x128xf32, #tpu.memory_space<vmem>>, vector<8x128xf32>
      tpu.vector_store %arg14[%c0_41, %c0_42], %77 {strides = array<i32>} : memref<8x128xf32, #tpu.memory_space<vmem>>, vector<8x128xf32>,
      %c0_43 = arith.constant 0 : index
      %c0_44 = arith.constant 0 : index
      %79 = vector.load %arg1[%c0_43, %c0_44] : memref<8x128xf32, #tpu.memory_space<vmem>>, vector<8x128xf32>
      %c0_45 = arith.constant 0 : index
      %c0_46 = arith.constant 0 : index
      %80 = vector.load %arg6[%c0_45, %c0_46] : memref<128x384xf32, #tpu.memory_space<vmem>>, vector<128x384xf32>
      %cst_47 = arith.constant dense<0.000000e+00> : vector<8x384xf32>
      %81 = tpu.matmul %79, %80, %cst_47 {dimension_numbers = #tpu.dot_dimension_numbers<[1], [0], [0], [1], [0, 0, 1, 1], [], []>} : vector<8x128xf32>, vector<128x384xf32>, vector<8x384xf32> -> vector<8x384xf32>
      %c0_48 = arith.constant 0 : index
      %c0_49 = arith.constant 0 : index
      %82 = vector.load %arg8[%c0_48, %c0_49] : memref<1x384xf32, #tpu.memory_space<vmem>>, vector<1x384xf32>
      %83 = vector.broadcast %82 : vector<1x384xf32> to vector<8x384xf32>
      %84 = arith.addf %81, %83 : vector<8x384xf32>
      %c0_50 = arith.constant 0 : index
      %c0_51 = arith.constant 0 : index
      %85 = vector.load %arg15[%c0_50, %c0_51] : memref<8x384xf32, #tpu.memory_space<vmem>>, vector<8x384xf32>
      tpu.vector_store %arg15[%c0_50, %c0_51], %84 {strides = array<i32>} : memref<8x384xf32, #tpu.memory_space<vmem>>, vector<8x384xf32>,
    } else {
    }
    %c0 = arith.constant 0 : index
    %c0_1 = arith.constant 0 : index
    %3 = vector.load %arg13[%c0, %c0_1] : memref<8x128xf32, #tpu.memory_space<vmem>>, vector<8x128xf32>
    %c0_2 = arith.constant 0 : index
    %c0_3 = arith.constant 0 : index
    %4 = vector.load %arg14[%c0_2, %c0_3] : memref<8x128xf32, #tpu.memory_space<vmem>>, vector<8x128xf32>
    %c0_4 = arith.constant 0 : index
    %c0_5 = arith.constant 0 : index
    %5 = vector.load %arg5[%c0_4, %c0_5] : memref<128x384xf32, #tpu.memory_space<vmem>>, vector<128x384xf32>
    %cst = arith.constant dense<0.000000e+00> : vector<8x384xf32>
    %6 = tpu.matmul %4, %5, %cst {dimension_numbers = #tpu.dot_dimension_numbers<[1], [0], [0], [1], [0, 0, 1, 1], [], []>} : vector<8x128xf32>, vector<128x384xf32>, vector<8x384xf32> -> vector<8x384xf32>
    %c0_6 = arith.constant 0 : index
    %c0_7 = arith.constant 0 : index
    %7 = vector.load %arg15[%c0_6, %c0_7] : memref<8x384xf32, #tpu.memory_space<vmem>>, vector<8x384xf32>
    %8 = arith.addf %6, %7 : vector<8x384xf32>
    %c0_8 = arith.constant 0 : index
    %c0_9 = arith.constant 0 : index
    %9 = vector.load %arg7[%c0_8, %c0_9] : memref<128x384xf32, #tpu.memory_space<vmem>>, vector<128x384xf32>
    %cst_10 = arith.constant dense<0.000000e+00> : vector<8x384xf32>
    %10 = tpu.matmul %3, %9, %cst_10 {dimension_numbers = #tpu.dot_dimension_numbers<[1], [0], [0], [1], [0, 0, 1, 1], [], []>} : vector<8x128xf32>, vector<128x384xf32>, vector<8x384xf32> -> vector<8x384xf32>
    %c0_11 = arith.constant 0 : index
    %c0_12 = arith.constant 0 : index
    %11 = vector.load %arg9[%c0_11, %c0_12] : memref<1x384xf32, #tpu.memory_space<vmem>>, vector<1x384xf32>
    %12 = vector.broadcast %11 : vector<1x384xf32> to vector<8x384xf32>
    %13 = arith.addf %10, %12 : vector<8x384xf32>
    %14 = vector.extract_strided_slice %8 {offsets = [0, 0], sizes = [8, 128], strides = [1, 1]} : vector<8x384xf32> to vector<8x128xf32>
    %15 = vector.extract_strided_slice %13 {offsets = [0, 0], sizes = [8, 128], strides = [1, 1]} : vector<8x384xf32> to vector<8x128xf32>
    %16 = arith.addf %14, %15 : vector<8x128xf32>
    %17 = arith.negf %16 : vector<8x128xf32>
    %18 = math.exp %17 : vector<8x128xf32>
    %cst_13 = arith.constant 1.000000e+00 : f32
    %19 = vector.broadcast %cst_13 : f32 to vector<8x128xf32>
    %20 = arith.addf %19, %18 : vector<8x128xf32>
    %21 = arith.divf %19, %20 : vector<8x128xf32>
    %22 = vector.extract_strided_slice %8 {offsets = [0, 128], sizes = [8, 128], strides = [1, 1]} : vector<8x384xf32> to vector<8x128xf32>
    %23 = vector.extract_strided_slice %13 {offsets = [0, 128], sizes = [8, 128], strides = [1, 1]} : vector<8x384xf32> to vector<8x128xf32>
    %24 = arith.addf %22, %23 : vector<8x128xf32>
    %25 = arith.negf %24 : vector<8x128xf32>
    %26 = math.exp %25 : vector<8x128xf32>
    %cst_14 = arith.constant 1.000000e+00 : f32
    %27 = vector.broadcast %cst_14 : f32 to vector<8x128xf32>
    %28 = arith.addf %27, %26 : vector<8x128xf32>
    %29 = arith.divf %27, %28 : vector<8x128xf32>
    %30 = vector.extract_strided_slice %8 {offsets = [0, 256], sizes = [8, 128], strides = [1, 1]} : vector<8x384xf32> to vector<8x128xf32>
    %31 = vector.extract_strided_slice %13 {offsets = [0, 256], sizes = [8, 128], strides = [1, 1]} : vector<8x384xf32> to vector<8x128xf32>
    %32 = arith.mulf %21, %31 : vector<8x128xf32>
    %33 = arith.addf %30, %32 : vector<8x128xf32>
    %34 = math.tanh %33 : vector<8x128xf32>
    %cst_15 = arith.constant 1.000000e+00 : f32
    %35 = vector.broadcast %cst_15 : f32 to vector<8x128xf32>
    %36 = arith.subf %35, %29 : vector<8x128xf32>
    %37 = arith.mulf %36, %34 : vector<8x128xf32>
    %38 = arith.mulf %29, %3 : vector<8x128xf32>
    %39 = arith.addf %37, %38 : vector<8x128xf32>
    %c0_16 = arith.constant 0 : index
    %c0_17 = arith.constant 0 : index
    %40 = vector.load %arg13[%c0_16, %c0_17] : memref<8x128xf32, #tpu.memory_space<vmem>>, vector<8x128xf32>
    tpu.vector_store %arg13[%c0_16, %c0_17], %39 {strides = array<i32>} : memref<8x128xf32, #tpu.memory_space<vmem>>, vector<8x128xf32>,
    %c0_18 = arith.constant 0 : index
    %c0_19 = arith.constant 0 : index
    %41 = vector.load %arg10[%c0_18, %c0_19] : memref<128x128xf32, #tpu.memory_space<vmem>>, vector<128x128xf32>
    %cst_20 = arith.constant dense<0.000000e+00> : vector<8x128xf32>
    %42 = tpu.matmul %39, %41, %cst_20 {dimension_numbers = #tpu.dot_dimension_numbers<[1], [0], [0], [1], [0, 0, 1, 1], [], []>} : vector<8x128xf32>, vector<128x128xf32>, vector<8x128xf32> -> vector<8x128xf32>
    %c0_21 = arith.constant 0 : index
    %c0_22 = arith.constant 0 : index
    %43 = vector.load %arg11[%c0_21, %c0_22] : memref<1x128xf32, #tpu.memory_space<vmem>>, vector<1x128xf32>
    %44 = vector.broadcast %43 : vector<1x128xf32> to vector<8x128xf32>
    %45 = arith.addf %42, %44 : vector<8x128xf32>
    %cst_23 = arith.constant dense<0xFF800000> : vector<8xf32>
    %46 = vector.multi_reduction <maximumf>, %45, %cst_23 [1] : vector<8x128xf32> to vector<8xf32>
    %47 = vector.shape_cast %46 : vector<8xf32> to vector<8x1xf32>
    %48 = vector.broadcast %47 : vector<8x1xf32> to vector<8x128xf32>
    %49 = arith.subf %45, %48 : vector<8x128xf32>
    %50 = math.exp %49 : vector<8x128xf32>
    %cst_24 = arith.constant dense<0.000000e+00> : vector<8xf32>
    %51 = vector.multi_reduction <add>, %50, %cst_24 [1] : vector<8x128xf32> to vector<8xf32>
    %52 = vector.shape_cast %51 : vector<8xf32> to vector<8x1xf32>
    %53 = math.log %52 : vector<8x1xf32>
    %54 = vector.broadcast %53 : vector<8x1xf32> to vector<8x128xf32>
    %55 = arith.subf %49, %54 : vector<8x128xf32>
    %c0_25 = arith.constant 0 : index
    %c0_26 = arith.constant 0 : index
    %c0_27 = arith.constant 0 : index
    %56 = vector.load %arg12[%c0_25, %c0_26, %c0_27] : memref<1x8x128xf32, #tpu.memory_space<vmem>>, vector<1x8x128xf32>
    %57 = vector.shape_cast %56 : vector<1x8x128xf32> to vector<8x128xf32>
    %58 = vector.shape_cast %55 : vector<8x128xf32> to vector<1x8x128xf32>
    tpu.vector_store %arg12[%c0_25, %c0_26, %c0_27], %58 {strides = array<i32>} : memref<1x8x128xf32, #tpu.memory_space<vmem>>, vector<1x8x128xf32>,
    %59 = tpu.iota {dimensions = array<i32: 1>} : vector<8x128xi32>
    %cst_28 = arith.constant dense<0xFF800000> : vector<8xf32>
    %60 = vector.multi_reduction <maximumf>, %55, %cst_28 [1] : vector<8x128xf32> to vector<8xf32>
    %61 = vector.shape_cast %60 : vector<8xf32> to vector<8x1xf32>
    %62 = vector.broadcast %61 : vector<8x1xf32> to vector<8x128xf32>
    %63 = arith.cmpf oeq, %55, %62 : vector<8x128xf32>
    %c128_i32 = arith.constant 128 : i32
    %64 = vector.broadcast %c128_i32 : i32 to vector<8x128xi32>
    %65 = arith.select %63, %59, %64 : vector<8x128xi1>, vector<8x128xi32>
    %cst_29 = arith.constant dense<2147483647> : vector<8xi32>
    %66 = vector.multi_reduction <minsi>, %65, %cst_29 [1] : vector<8x128xi32> to vector<8xi32>
    %67 = vector.shape_cast %66 : vector<8xi32> to vector<8x1xi32>
    %68 = vector.broadcast %67 : vector<8x1xi32> to vector<8x128xi32>
    %69 = arith.cmpi eq, %59, %68 : vector<8x128xi32>
    %70 = arith.extui %69 : vector<8x128xi1> to vector<8x128xi32>
    %71 = arith.sitofp %70 : vector<8x128xi32> to vector<8x128xf32>
    %c0_30 = arith.constant 0 : index
    %c0_31 = arith.constant 0 : index
    %72 = vector.load %arg2[%c0_30, %c0_31] : memref<128x128xf32, #tpu.memory_space<vmem>>, vector<128x128xf32>
    %cst_32 = arith.constant dense<0.000000e+00> : vector<8x128xf32>
    %73 = tpu.matmul %71, %72, %cst_32 {dimension_numbers = #tpu.dot_dimension_numbers<[1], [0], [0], [1], [0, 0, 1, 1], [], []>} : vector<8x128xf32>, vector<128x128xf32>, vector<8x128xf32> -> vector<8x128xf32>
    %c0_33 = arith.constant 0 : index
    %c0_34 = arith.constant 0 : index
    %74 = vector.load %arg14[%c0_33, %c0_34] : memref<8x128xf32, #tpu.memory_space<vmem>>, vector<8x128xf32>
    tpu.vector_store %arg14[%c0_33, %c0_34], %73 {strides = array<i32>} : memref<8x128xf32, #tpu.memory_space<vmem>>, vector<8x128xf32>,
    return
  }
  func.func @transform_0(%arg0: i32) -> (i32, i32) {
    %c0_i32 = arith.constant 0 : i32
    %c0_i32_0 = arith.constant 0 : i32
    %c0_i32_1 = arith.constant 0 : i32
    return %c0_i32, %c0_i32_0 : i32, i32
  }
  func.func @transform_1(%arg0: i32) -> (i32, i32) {
    %c0_i32 = arith.constant 0 : i32
    %c0_i32_0 = arith.constant 0 : i32
    %c0_i32_1 = arith.constant 0 : i32
    return %c0_i32, %c0_i32_0 : i32, i32
  }
  func.func @transform_2(%arg0: i32) -> (i32, i32) {
    %c0_i32 = arith.constant 0 : i32
    %c0_i32_0 = arith.constant 0 : i32
    %c0_i32_1 = arith.constant 0 : i32
    return %c0_i32, %c0_i32_0 : i32, i32
  }
  func.func @transform_3(%arg0: i32) -> (i32, i32) {
    %c0_i32 = arith.constant 0 : i32
    %c0_i32_0 = arith.constant 0 : i32
    %c0_i32_1 = arith.constant 0 : i32
    return %c0_i32, %c0_i32_0 : i32, i32
  }
  func.func @transform_4(%arg0: i32) -> (i32, i32) {
    %c0_i32 = arith.constant 0 : i32
    %c0_i32_0 = arith.constant 0 : i32
    %c0_i32_1 = arith.constant 0 : i32
    return %c0_i32, %c0_i32_0 : i32, i32
  }
  func.func @transform_5(%arg0: i32) -> (i32, i32) {
    %c0_i32 = arith.constant 0 : i32
    %c0_i32_0 = arith.constant 0 : i32
    %c0_i32_1 = arith.constant 0 : i32
    return %c0_i32, %c0_i32_0 : i32, i32
  }
  func.func @transform_6(%arg0: i32) -> (i32, i32) {
    %c0_i32 = arith.constant 0 : i32
    %c0_i32_0 = arith.constant 0 : i32
    %c0_i32_1 = arith.constant 0 : i32
    return %c0_i32, %c0_i32_0 : i32, i32
  }
  func.func @transform_7(%arg0: i32) -> (i32, i32) {
    %c0_i32 = arith.constant 0 : i32
    %c0_i32_0 = arith.constant 0 : i32
    %c0_i32_1 = arith.constant 0 : i32
    return %c0_i32, %c0_i32_0 : i32, i32
  }
  func.func @transform_8(%arg0: i32) -> (i32, i32) {
    %c0_i32 = arith.constant 0 : i32
    %c0_i32_0 = arith.constant 0 : i32
    %c0_i32_1 = arith.constant 0 : i32
    return %c0_i32, %c0_i32_0 : i32, i32
  }
  func.func @transform_9(%arg0: i32) -> (i32, i32) {
    %c0_i32 = arith.constant 0 : i32
    %c0_i32_0 = arith.constant 0 : i32
    %c0_i32_1 = arith.constant 0 : i32
    return %c0_i32, %c0_i32_0 : i32, i32
  }
  func.func @transform_10(%arg0: i32) -> (i32, i32) {
    %c0_i32 = arith.constant 0 : i32
    %c0_i32_0 = arith.constant 0 : i32
    %c0_i32_1 = arith.constant 0 : i32
    return %c0_i32, %c0_i32_0 : i32, i32
  }
  func.func @transform_11(%arg0: i32) -> (i32, i32, i32) {
    %c0_i32 = arith.constant 0 : i32
    %c0_i32_0 = arith.constant 0 : i32
    %c0_i32_1 = arith.constant 0 : i32
    return %arg0, %c0_i32, %c0_i32_0 : i32, i32, i32
  }
}

</mosaic_0001>

<llo_original>
// kernel: dmn_forward.5
$region0: #{dmn_forward.5}
  #allocation0 [shape = 'u32[]', space=smem, size = 0x4, offset = 0x4, fixed_abs, tag = 'smem constant byte address 0x4 - core index']
  #allocation1 [shape = 'u32[144,128]{1,0:T(1,128)}', space=vmem, size = 0x12000, scoped, tag = 'internal scratch']
  %s0 = inlined_call_operand.vmem [shape: f32[5,8,128], index: 0, kind: input, shape index: {}]
  %s1 = inlined_call_operand.vmem [shape: f32[5,8,1], index: 1, kind: input, shape index: {}]
  %s2 = inlined_call_operand.hbm [shape: f32[128,384], index: 2, kind: input, shape index: {}]
  %s3 = inlined_call_operand.hbm [shape: f32[128,384], index: 3, kind: input, shape index: {}]
  %s4 = inlined_call_operand.vmem [shape: f32[1,384], index: 4, kind: input, shape index: {}]
  %s5 = inlined_call_operand.vmem [shape: f32[1,384], index: 5, kind: input, shape index: {}]
  %s6 = inlined_call_operand.vmem [shape: f32[8,128], index: 6, kind: output, shape index: {}]
  %s7 = sld [smem:[#allocation0]]
  $region69: #{dmn_forward.5} parent=0
    _
  %s9 = ssub.s32 1, %s7
  %s10 = scalar_select 0, %s9, %s7
  $region1: #{dmn_forward.5} parent=0
    #allocation2 [shape = 'u8[196608]{0}', space=vmem, size = 0x30000, scoped, tag = 'input window, operand 2, single buffered']
    #allocation3 [shape = 's32[2]{0}', space=sflag, size = 0x8, scoped, tag = 'scoped memory for dmn_forward.5']
    #allocation4 [shape = 'u8[196608]{0}', space=vmem, size = 0x30000, scoped, tag = 'input window, operand 3, single buffered']
    #allocation5 [shape = 's32[1]{0}', space=sflag, size = 0x4, scoped, tag = 'scoped memory for dmn_forward.5']
    %11 = vsyncpa [#allocation3], 0
    %12 = vsyncpa [#allocation5], 0
    loop: start=0, step=1, limit=7
    $region2: #{dmn_forward.5} parent=1 // loop_pre_header
      _
    $region3: #{dmn_forward.5} parent=1 // loop_header
      %s14 = sphi 0, %s18
      %p15 = scmp.ge.s32.totalorder %s14, 7
      %s24 = sphi 0, %s26
      %s27 = sphi 0, %s24
      %s28 = sphi 0, %s27
      %s44 = sphi 0, %s28
      %s50 = sphi 0, %s52
      %s53 = sphi 0, %s50
      %s54 = sphi 0, %s53
      %s70 = sphi 0, %s54
      %s74 = sphi 0, %s74
      %s76 = sphi 0, %s74
      %s77 = sphi 0, %s76
      %s91 = sphi 0, %s77
      %s95 = sphi 0, %s95
      %s97 = sphi 0, %s95
      %s98 = sphi 0, %s97
      %s112 = sphi 0, %s98
      %s116 = sphi 0, %s116
      %s118 = sphi 0, %s116
      %s119 = sphi 0, %s118
      %s133 = sphi 0, %s119
      %s137 = sphi 0, %s137
      %s139 = sphi 0, %s137
      %s140 = sphi 0, %s139
      %s154 = sphi 0, %s140
      %s158 = sphi 0, %s158
      %s160 = sphi 0, %s158
      %s161 = sphi 0, %s160
      %s175 = sphi 0, %s161
    $region4: #{dmn_forward.5} parent=1 // loop_header_branch
      %17 = sbr.rel (%p15) target = $region8
    $region5: #{dmn_forward.5} parent=1 // loop_body
      %s19 = ssub.s32 %s14, 1
      %s20 = ssub.s32 %s14, 2
      %s21 = sadd.s32 %s14, 1
      %s22 = ssub.s32 %s14, %s21
      %p23 = scmp.eq.s32.totalorder %s22, 0
      %s25 = sadd.s32 %s24, 1
      %s26 = scalar_select %p23, %s24, %s25
      %p29 = pneg %p23
      %p30 = scmp.eq.s32.totalorder %s14, 4
      %p31 = por %p29, %p30
      %p32 = scmp.ne.s32.totalorder %s24, %s27
      %p33 = scmp.eq.s32.totalorder %s14, 0
      %p34 = por %p32, %p33
      %p35 = scmp.ne.s32.totalorder %s24, %s27
      %p36 = scmp.eq.s32.totalorder %s19, 4
      %p37 = por %p35, %p36
      %p38 = scmp.ne.s32.totalorder %s27, %s28
      %p39 = scmp.eq.s32.totalorder %s19, 0
      %p40 = por %p38, %p39
      %p41 = scmp.ne.s32.totalorder %s27, %s28
      %p42 = scmp.eq.s32.totalorder %s20, 4
      %p43 = por %p41, %p42
      %p45 = scmp.ne.s32.totalorder %s28, %s44
      %p46 = scmp.eq.s32.totalorder %s20, 0
      %p47 = por %p45, %p46
      %s48 = ssub.s32 %s14, %s21
      %p49 = scmp.eq.s32.totalorder %s48, 0
      %s51 = sadd.s32 %s50, 1
      %s52 = scalar_select %p49, %s50, %s51
      %p55 = pneg %p49
      %p56 = scmp.eq.s32.totalorder %s14, 4
      %p57 = por %p55, %p56
      %p58 = scmp.ne.s32.totalorder %s50, %s53
      %p59 = scmp.eq.s32.totalorder %s14, 0
      %p60 = por %p58, %p59
      %p61 = scmp.ne.s32.totalorder %s50, %s53
      %p62 = scmp.eq.s32.totalorder %s19, 4
      %p63 = por %p61, %p62
      %p64 = scmp.ne.s32.totalorder %s53, %s54
      %p65 = scmp.eq.s32.totalorder %s19, 0
      %p66 = por %p64, %p65
      %p67 = scmp.ne.s32.totalorder %s53, %s54
      %p68 = scmp.eq.s32.totalorder %s20, 4
      %p69 = por %p67, %p68
      %p71 = scmp.ne.s32.totalorder %s54, %s70
      %p72 = scmp.eq.s32.totalorder %s20, 0
      %p73 = por %p71, %p72
      %s75 = sadd.s32 %s74, 1
      %p78 = scmp.eq.s32.totalorder %s14, 4
      %p79 = scmp.ne.s32.totalorder %s74, %s76
      %p80 = scmp.eq.s32.totalorder %s14, 0
      %p81 = por %p79, %p80
      %p82 = scmp.ne.s32.totalorder %s74, %s76
      %p83 = scmp.eq.s32.totalorder %s19, 4
      %p84 = por %p82, %p83
      %p85 = scmp.ne.s32.totalorder %s76, %s77
      %p86 = scmp.eq.s32.totalorder %s19, 0
      %p87 = por %p85, %p86
      %p88 = scmp.ne.s32.totalorder %s76, %s77
      %p89 = scmp.eq.s32.totalorder %s20, 4
      %p90 = por %p88, %p89
      %p92 = scmp.ne.s32.totalorder %s77, %s91
      %p93 = scmp.eq.s32.totalorder %s20, 0
      %p94 = por %p92, %p93
      %s96 = sadd.s32 %s95, 1
      %p99 = scmp.eq.s32.totalorder %s14, 4
      %p100 = scmp.ne.s32.totalorder %s95, %s97
      %p101 = scmp.eq.s32.totalorder %s14, 0
      %p102 = por %p100, %p101
      %p103 = scmp.ne.s32.totalorder %s95, %s97
      %p104 = scmp.eq.s32.totalorder %s19, 4
      %p105 = por %p103, %p104
      %p106 = scmp.ne.s32.totalorder %s97, %s98
      %p107 = scmp.eq.s32.totalorder %s19, 0
      %p108 = por %p106, %p107
      %p109 = scmp.ne.s32.totalorder %s97, %s98
      %p110 = scmp.eq.s32.totalorder %s20, 4
      %p111 = por %p109, %p110
      %p113 = scmp.ne.s32.totalorder %s98, %s112
      %p114 = scmp.eq.s32.totalorder %s20, 0
      %p115 = por %p113, %p114
      %s117 = sadd.s32 %s116, 1
      %p120 = scmp.eq.s32.totalorder %s14, 4
      %p121 = scmp.ne.s32.totalorder %s116, %s118
      %p122 = scmp.eq.s32.totalorder %s14, 0
      %p123 = por %p121, %p122
      %p124 = scmp.ne.s32.totalorder %s116, %s118
      %p125 = scmp.eq.s32.totalorder %s19, 4
      %p126 = por %p124, %p125
      %p127 = scmp.ne.s32.totalorder %s118, %s119
      %p128 = scmp.eq.s32.totalorder %s19, 0
      %p129 = por %p127, %p128
      %p130 = scmp.ne.s32.totalorder %s118, %s119
      %p131 = scmp.eq.s32.totalorder %s20, 4
      %p132 = por %p130, %p131
      %p134 = scmp.ne.s32.totalorder %s119, %s133
      %p135 = scmp.eq.s32.totalorder %s20, 0
      %p136 = por %p134, %p135
      %s138 = sadd.s32 %s137, 1
      %p141 = scmp.eq.s32.totalorder %s14, 4
      %p142 = scmp.ne.s32.totalorder %s137, %s139
      %p143 = scmp.eq.s32.totalorder %s14, 0
      %p144 = por %p142, %p143
      %p145 = scmp.ne.s32.totalorder %s137, %s139
      %p146 = scmp.eq.s32.totalorder %s19, 4
      %p147 = por %p145, %p146
      %p148 = scmp.ne.s32.totalorder %s139, %s140
      %p149 = scmp.eq.s32.totalorder %s19, 0
      %p150 = por %p148, %p149
      %p151 = scmp.ne.s32.totalorder %s139, %s140
      %p152 = scmp.eq.s32.totalorder %s20, 4
      %p153 = por %p151, %p152
      %p155 = scmp.ne.s32.totalorder %s140, %s154
      %p156 = scmp.eq.s32.totalorder %s20, 0
      %p157 = por %p155, %p156
      %s159 = sadd.s32 %s158, 1
      %p162 = scmp.eq.s32.totalorder %s14, 4
      %p163 = scmp.ne.s32.totalorder %s158, %s160
      %p164 = scmp.eq.s32.totalorder %s14, 0
      %p165 = por %p163, %p164
      %p166 = scmp.ne.s32.totalorder %s158, %s160
      %p167 = scmp.eq.s32.totalorder %s19, 4
      %p168 = por %p166, %p167
      %p169 = scmp.ne.s32.totalorder %s160, %s161
      %p170 = scmp.eq.s32.totalorder %s19, 0
      %p171 = por %p169, %p170
      %p172 = scmp.ne.s32.totalorder %s160, %s161
      %p173 = scmp.eq.s32.totalorder %s20, 4
      %p174 = por %p172, %p173
      %p176 = scmp.ne.s32.totalorder %s161, %s175
      %p177 = scmp.eq.s32.totalorder %s20, 0
      %p178 = por %p176, %p177
      %p179 = scmp.le.s32.totalorder 1, %s14
      %p180 = scmp.lt.s32.totalorder %s14, 6
      %p181 = pnand %p179, %p180
      %p182 = pneg %p181
      // Predicated region
      $region9: #{dmn_forward.5} parent=5 // pred_check
        _
      $region10: #{dmn_forward.5} parent=5 // pred_check_branch
        %184 = sbr.rel (%p181) target = $region12
      $region11: #{dmn_forward.5} parent=5 // pred_region
        %s185 = ssub.s32 %s14, 1
        // Predicated region
        $region13: #{dmn_forward.5} parent=11 // pred_check
          %p186 = pneg %p87
        $region14: #{dmn_forward.5} parent=11 // pred_check_branch
          %188 = sbr.rel (%p186) target = $region16
        $region15: #{dmn_forward.5} parent=11 // pred_region
          %s190 = ssub.s32 6144, 6144
          %191 = vsyncadd [#allocation3], %s190
          %s192 = sshll.u32 [#allocation2], 4
          %s193 = int_to_ptr.vmem [resolvable:$true] %s192
          %198 = dma.hbm_to_vmem [thread:$0]  %s2, 6144, %s193, [#allocation3], 384, 384, 24
        $region16: #{dmn_forward.5} parent=11 // pred_fallthru
          _
        // Predicated region
        $region17: #{dmn_forward.5} parent=11 // pred_check
          %p199 = pneg %p108
        $region18: #{dmn_forward.5} parent=11 // pred_check_branch
          %201 = sbr.rel (%p199) target = $region20
        $region19: #{dmn_forward.5} parent=11 // pred_region
          %s203 = ssub.s32 6144, 6144
          %204 = vsyncadd [#allocation5], %s203
          %s205 = sshll.u32 [#allocation4], 4
          %s206 = int_to_ptr.vmem [resolvable:$true] %s205
          %211 = dma.hbm_to_vmem [thread:$0]  %s3, 6144, %s206, [#allocation5], 384, 384, 24
        $region20: #{dmn_forward.5} parent=11 // pred_fallthru
          _
        // Predicated region
        $region21: #{dmn_forward.5} parent=11 // pred_check
          %p212 = pneg %p129
        $region22: #{dmn_forward.5} parent=11 // pred_check_branch
          %214 = sbr.rel (%p212) target = $region24
        $region23: #{dmn_forward.5} parent=11 // pred_region
          _
        $region24: #{dmn_forward.5} parent=11 // pred_fallthru
          _
        // Predicated region
        $region25: #{dmn_forward.5} parent=11 // pred_check
          %p215 = pneg %p150
        $region26: #{dmn_forward.5} parent=11 // pred_check_branch
          %217 = sbr.rel (%p215) target = $region28
        $region27: #{dmn_forward.5} parent=11 // pred_region
          _
        $region28: #{dmn_forward.5} parent=11 // pred_fallthru
          _
      $region12: #{dmn_forward.5} parent=5 // pred_fallthru
        _
      %p218 = scmp.lt.s32.totalorder %s14, 5
      // Predicated region
      $region29: #{dmn_forward.5} parent=5 // pred_check
        %p219 = pneg %p218
      $region30: #{dmn_forward.5} parent=5 // pred_check_branch
        %221 = sbr.rel (%p219) target = $region32
      $region31: #{dmn_forward.5} parent=5 // pred_region
        // Predicated region
        $region33: #{dmn_forward.5} parent=31 // pred_check
          %p222 = pneg %p34
        $region34: #{dmn_forward.5} parent=31 // pred_check_branch
          %224 = sbr.rel (%p222) target = $region36
        $region35: #{dmn_forward.5} parent=31 // pred_region
          %p225 = scmp.lt.s32.totalorder %s14, 4
          %s226 = scalar_select %p225, %s14, 4
          %s227 = smul.addr %s226, 8
          %s228 = scalar_lea.vmem %s0, %s227
        $region36: #{dmn_forward.5} parent=31 // pred_fallthru
          _
        // Predicated region
        $region37: #{dmn_forward.5} parent=31 // pred_check
          %p229 = pneg %p60
        $region38: #{dmn_forward.5} parent=31 // pred_check_branch
          %231 = sbr.rel (%p229) target = $region40
        $region39: #{dmn_forward.5} parent=31 // pred_region
          %p232 = scmp.lt.s32.totalorder %s14, 4
          %s233 = scalar_select %p232, %s14, 4
          %s234 = smul.addr %s233, 8
          %s235 = scalar_lea.vmem %s1, %s234
        $region40: #{dmn_forward.5} parent=31 // pred_fallthru
          _
      $region32: #{dmn_forward.5} parent=5 // pred_fallthru
        _
      %p236 = scmp.le.s32.totalorder 1, %s14
      %p237 = scmp.lt.s32.totalorder %s14, 6
      %p238 = pnand %p236, %p237
      %p239 = pneg %p238
      // Predicated region
      $region41: #{dmn_forward.5} parent=5 // pred_check
        _
      $region42: #{dmn_forward.5} parent=5 // pred_check_branch
        %241 = sbr.rel (%p238) target = $region44
      $region43: #{dmn_forward.5} parent=5 // pred_region
        %s242 = ssub.s32 %s14, 1
        // Predicated region
        $region45: #{dmn_forward.5} parent=43 // pred_check
          %p243 = pneg %p87
        $region46: #{dmn_forward.5} parent=43 // pred_check_branch
          %245 = sbr.rel (%p243) target = $region48
        $region47: #{dmn_forward.5} parent=43 // pred_region
          %246 = dma.done [#allocation3], 6144
        $region48: #{dmn_forward.5} parent=43 // pred_fallthru
          _
        // Predicated region
        $region49: #{dmn_forward.5} parent=43 // pred_check
          %p247 = pneg %p108
        $region50: #{dmn_forward.5} parent=43 // pred_check_branch
          %249 = sbr.rel (%p247) target = $region52
        $region51: #{dmn_forward.5} parent=43 // pred_region
          %250 = dma.done [#allocation5], 6144
        $region52: #{dmn_forward.5} parent=43 // pred_fallthru
          _
        %p251 = scmp.lt.s32.totalorder %s19, 4
        %s252 = scalar_select %p251, %s19, 4
        %s253 = smul.addr %s252, 8
        %s254 = scalar_lea.vmem %s0, %s253
        %p255 = pneg %p40
        %p256 = pneg %p37
        %p257 = scmp.lt.s32.totalorder %s19, 4
        %s258 = scalar_select %p257, %s19, 4
        %s259 = smul.addr %s258, 8
        %s260 = scalar_lea.vmem %s1, %s259
        %p261 = pneg %p66
        %p262 = pneg %p63
        %p263 = pneg %p87
        %p264 = pneg %p84
        %p265 = pneg %p108
        %p266 = pneg %p105
        %p267 = pneg %p129
        %p268 = pneg %p126
        %p269 = pneg %p150
        %p270 = pneg %p147
        %p271 = pneg %p171
        %p272 = pneg %p168
        %p273 = scmp.lt.s32.totalorder %s19, 4
        %s274 = scalar_select %p273, %s19, 4
        %s275 = smul.addr %s274, 8
        %s276 = scalar_lea.vmem %s0, %s275
        %p277 = scmp.lt.s32.totalorder %s19, 4
        %s278 = scalar_select %p277, %s19, 4
        %s279 = smul.addr %s278, 8
        %s280 = scalar_lea.vmem %s1, %s279
        %p281 = scmp.eq.s32.totalorder %s19, 0
        // Predicated region
        $region53: #{dmn_forward.5} parent=43 // pred_check
          %p282 = pneg %p281
        $region54: #{dmn_forward.5} parent=43 // pred_check_branch
          %284 = sbr.rel (%p282) target = $region56
        $region55: #{dmn_forward.5} parent=43 // pred_region
          %285 = vst [vmem:[%s6] sm:$0xff] 0.0
        $region56: #{dmn_forward.5} parent=43 // pred_fallthru
          _
        %v286 = vld [vmem:[%s6] sm:$0xff]
        %v287 = vld [vmem:[%s276] sm:$0xff]
        %v288 = vld [vmem:[#allocation2] sm:$0xff]
        %v289 = vld [vmem:[#allocation2 + $0x8] sm:$0xff]
        %v290 = vld [vmem:[#allocation2 + $0x10] sm:$0xff]
        %v291 = vld [vmem:[#allocation2 + $0x18] sm:$0xff]
        %v292 = vld [vmem:[#allocation2 + $0x20] sm:$0xff]
        %v293 = vld [vmem:[#allocation2 + $0x28] sm:$0xff]
        %v294 = vld [vmem:[#allocation2 + $0x30] sm:$0xff]
        %v295 = vld [vmem:[#allocation2 + $0x38] sm:$0xff]
        %v296 = vld [vmem:[#allocation2 + $0x40] sm:$0xff]
        %v297 = vld [vmem:[#allocation2 + $0x48] sm:$0xff]
        %v298 = vld [vmem:[#allocation2 + $0x50] sm:$0xff]
        %v299 = vld [vmem:[#allocation2 + $0x58] sm:$0xff]
        %v300 = vld [vmem:[#allocation2 + $0x60] sm:$0xff]
        %v301 = vld [vmem:[#allocation2 + $0x68] sm:$0xff]
        %v302 = vld [vmem:[#allocation2 + $0x70] sm:$0xff]
        %v303 = vld [vmem:[#allocation2 + $0x78] sm:$0xff]
        %v304 = vld [vmem:[#allocation2 + $0x80] sm:$0xff]
        %v305 = vld [vmem:[#allocation2 + $0x88] sm:$0xff]
        %v306 = vld [vmem:[#allocation2 + $0x90] sm:$0xff]
        %v307 = vld [vmem:[#allocation2 + $0x98] sm:$0xff]
        %v308 = vld [vmem:[#allocation2 + $0xa0] sm:$0xff]
        %v309 = vld [vmem:[#allocation2 + $0xa8] sm:$0xff]
        %v310 = vld [vmem:[#allocation2 + $0xb0] sm:$0xff]
        %v311 = vld [vmem:[#allocation2 + $0xb8] sm:$0xff]
        %v312 = vld [vmem:[#allocation2 + $0xc0] sm:$0xff]
        %v313 = vld [vmem:[#allocation2 + $0xc8] sm:$0xff]
        %v314 = vld [vmem:[#allocation2 + $0xd0] sm:$0xff]
        %v315 = vld [vmem:[#allocation2 + $0xd8] sm:$0xff]
        %v316 = vld [vmem:[#allocation2 + $0xe0] sm:$0xff]
        %v317 = vld [vmem:[#allocation2 + $0xe8] sm:$0xff]
        %v318 = vld [vmem:[#allocation2 + $0xf0] sm:$0xff]
        %v319 = vld [vmem:[#allocation2 + $0xf8] sm:$0xff]
        %v320 = vld [vmem:[#allocation2 + $0x100] sm:$0xff]
        %v321 = vld [vmem:[#allocation2 + $0x108] sm:$0xff]
        %v322 = vld [vmem:[#allocation2 + $0x110] sm:$0xff]
        %v323 = vld [vmem:[#allocation2 + $0x118] sm:$0xff]
        %v324 = vld [vmem:[#allocation2 + $0x120] sm:$0xff]
        %v325 = vld [vmem:[#allocation2 + $0x128] sm:$0xff]
        %v326 = vld [vmem:[#allocation2 + $0x130] sm:$0xff]
        %v327 = vld [vmem:[#allocation2 + $0x138] sm:$0xff]
        %v328 = vld [vmem:[#allocation2 + $0x140] sm:$0xff]
        %v329 = vld [vmem:[#allocation2 + $0x148] sm:$0xff]
        %v330 = vld [vmem:[#allocation2 + $0x150] sm:$0xff]
        %v331 = vld [vmem:[#allocation2 + $0x158] sm:$0xff]
        %v332 = vld [vmem:[#allocation2 + $0x160] sm:$0xff]
        %v333 = vld [vmem:[#allocation2 + $0x168] sm:$0xff]
        %v334 = vld [vmem:[#allocation2 + $0x170] sm:$0xff]
        %v335 = vld [vmem:[#allocation2 + $0x178] sm:$0xff]
        %v336 = vld [vmem:[%s4] sm:$0x7]
        %v338 = vlaneseq
        %v339 = vshrl.u32 %v338, 7
        %v340 = vsub.s32 0, %v339
        %v341 = vrot.slane %v336, %v340
        %v342 = vlaneseq
        %v343 = vshrl.u32 %v342, 7
        %v344 = vsub.s32 1, %v343
        %v345 = vrot.slane %v336, %v344
        %v346 = vlaneseq
        %v347 = vshrl.u32 %v346, 7
        %v348 = vsub.s32 2, %v347
        %v349 = vrot.slane %v336, %v348
        %353 = vmatprep.subr.mxu0 %v289
        %354 = vmatpush1.msra.mxu0 %v288
        %355 = vmatprep.subr.mxu0 %v292
        %356 = vmatpush1.msra.mxu0 %v291
        %357 = vmatprep.subr.mxu0 %v295
        %358 = vmatpush1.msra.mxu0 %v294
        %359 = vmatprep.subr.mxu0 %v298
        %360 = vmatpush1.msra.mxu0 %v297
        %361 = vmatprep.subr.mxu0 %v301
        %362 = vmatpush1.msra.mxu0 %v300
        %363 = vmatprep.subr.mxu0 %v304
        %364 = vmatpush1.msra.mxu0 %v303
        %365 = vmatprep.subr.mxu0 %v307
        %366 = vmatpush1.msra.mxu0 %v306
        %367 = vmatprep.subr.mxu0 %v310
        %368 = vmatpush1.msra.mxu0 %v309
        %369 = vmatprep.subr.mxu0 %v313
        %370 = vmatpush1.msra.mxu0 %v312
        %371 = vmatprep.subr.mxu0 %v316
        %372 = vmatpush1.msra.mxu0 %v315
        %373 = vmatprep.subr.mxu0 %v319
        %374 = vmatpush1.msra.mxu0 %v318
        %375 = vmatprep.subr.mxu0 %v322
        %376 = vmatpush1.msra.mxu0 %v321
        %377 = vmatprep.subr.mxu0 %v325
        %378 = vmatpush1.msra.mxu0 %v324
        %379 = vmatprep.subr.mxu0 %v328
        %380 = vmatpush1.msra.mxu0 %v327
        %381 = vmatprep.subr.mxu0 %v331
        %382 = vmatpush1.msra.mxu0 %v330
        %383 = vmatprep.subr.mxu0 %v334
        %384 = vmatpush1.msra.mxu0 %v333
        %385 = vmatprep.subr.mxu0 0.0
        %386 = vmatpush1.msra.mxu0 0.0
        %387 = vmatprep.subr.mxu0 0.0
        %388 = vmatpush1.msra.mxu0 0.0
        %389 = vmatprep.subr.mxu0 0.0
        %390 = vmatpush1.msra.mxu0 0.0
        %391 = vmatprep.subr.mxu0 0.0
        %392 = vmatpush1.msra.mxu0 0.0
        %393 = vmatprep.subr.mxu0 0.0
        %394 = vmatpush1.msra.mxu0 0.0
        %395 = vmatprep.subr.mxu0 0.0
        %396 = vmatpush1.msra.mxu0 0.0
        %397 = vmatprep.subr.mxu0 0.0
        %398 = vmatpush1.msra.mxu0 0.0
        %399 = vmatprep.subr.mxu0 0.0
        %400 = vmatpush1.msra.mxu0 0.0
        %401 = vmatprep.subr.mxu0 0.0
        %402 = vmatpush1.msra.mxu0 0.0
        %403 = vmatprep.subr.mxu0 0.0
        %404 = vmatpush1.msra.mxu0 0.0
        %405 = vmatprep.subr.mxu0 0.0
        %406 = vmatpush1.msra.mxu0 0.0
        %407 = vmatprep.subr.mxu0 0.0
        %408 = vmatpush1.msra.mxu0 0.0
        %409 = vmatprep.subr.mxu0 0.0
        %410 = vmatpush1.msra.mxu0 0.0
        %411 = vmatprep.subr.mxu0 0.0
        %412 = vmatpush1.msra.mxu0 0.0
        %413 = vmatprep.subr.mxu0 0.0
        %414 = vmatpush1.msra.mxu0 0.0
        %415 = vmatprep.subr.mxu0 0.0
        %416 = vmatpush1.msra.mxu0 0.0
        %417 = vmatprep.mubr.f32.mxu0 0.0
        %418 = vmatmul.mubr.f32.gmra.mrb[0].mxu0 %v287
        %v419 = vpop.f32.mrb[0].mxu0
        %v420 = vadd.f32 %v341, %v419
        %v421 = vpop.f32.mrb[0].mxu0
        %v422 = vadd.f32 %v345, %v421
        %423 = vdwg.mxu0
        %424 = vmatprep.subr.mxu0 0.0
        %425 = vmatpush1.msra.mxu0 %v290
        %426 = vmatprep.subr.mxu0 0.0
        %427 = vmatpush1.msra.mxu0 %v293
        %428 = vmatprep.subr.mxu0 0.0
        %429 = vmatpush1.msra.mxu0 %v296
        %430 = vmatprep.subr.mxu0 0.0
        %431 = vmatpush1.msra.mxu0 %v299
        %432 = vmatprep.subr.mxu0 0.0
        %433 = vmatpush1.msra.mxu0 %v302
        %434 = vmatprep.subr.mxu0 0.0
        %435 = vmatpush1.msra.mxu0 %v305
        %436 = vmatprep.subr.mxu0 0.0
        %437 = vmatpush1.msra.mxu0 %v308
        %438 = vmatprep.subr.mxu0 0.0
        %439 = vmatpush1.msra.mxu0 %v311
        %440 = vmatprep.subr.mxu0 0.0
        %441 = vmatpush1.msra.mxu0 %v314
        %442 = vmatprep.subr.mxu0 0.0
        %443 = vmatpush1.msra.mxu0 %v317
        %444 = vmatprep.subr.mxu0 0.0
        %445 = vmatpush1.msra.mxu0 %v320
        %446 = vmatprep.subr.mxu0 0.0
        %447 = vmatpush1.msra.mxu0 %v323
        %448 = vmatprep.subr.mxu0 0.0
        %449 = vmatpush1.msra.mxu0 %v326
        %450 = vmatprep.subr.mxu0 0.0
        %451 = vmatpush1.msra.mxu0 %v329
        %452 = vmatprep.subr.mxu0 0.0
        %453 = vmatpush1.msra.mxu0 %v332
        %454 = vmatprep.subr.mxu0 0.0
        %455 = vmatpush1.msra.mxu0 %v335
        %456 = vmatprep.subr.mxu0 0.0
        %457 = vmatpush1.msra.mxu0 0.0
        %458 = vmatprep.subr.mxu0 0.0
        %459 = vmatpush1.msra.mxu0 0.0
        %460 = vmatprep.subr.mxu0 0.0
        %461 = vmatpush1.msra.mxu0 0.0
        %462 = vmatprep.subr.mxu0 0.0
        %463 = vmatpush1.msra.mxu0 0.0
        %464 = vmatprep.subr.mxu0 0.0
        %465 = vmatpush1.msra.mxu0 0.0
        %466 = vmatprep.subr.mxu0 0.0
        %467 = vmatpush1.msra.mxu0 0.0
        %468 = vmatprep.subr.mxu0 0.0
        %469 = vmatpush1.msra.mxu0 0.0
        %470 = vmatprep.subr.mxu0 0.0
        %471 = vmatpush1.msra.mxu0 0.0
        %472 = vmatprep.subr.mxu0 0.0
        %473 = vmatpush1.msra.mxu0 0.0
        %474 = vmatprep.subr.mxu0 0.0
        %475 = vmatpush1.msra.mxu0 0.0
        %476 = vmatprep.subr.mxu0 0.0
        %477 = vmatpush1.msra.mxu0 0.0
        %478 = vmatprep.subr.mxu0 0.0
        %479 = vmatpush1.msra.mxu0 0.0
        %480 = vmatprep.subr.mxu0 0.0
        %481 = vmatpush1.msra.mxu0 0.0
        %482 = vmatprep.subr.mxu0 0.0
        %483 = vmatpush1.msra.mxu0 0.0
        %484 = vmatprep.subr.mxu0 0.0
        %485 = vmatpush1.msra.mxu0 0.0
        %486 = vmatprep.subr.mxu0 0.0
        %487 = vmatpush1.msra.mxu0 0.0
        %488 = vmatprep.mubr.f32.mxu0 0.0
        %489 = vmatmul.mubr.f32.gmra.mrb[0].mxu0 %v287
        %v490 = vpop.f32.mrb[0].mxu0
        %v491 = vadd.f32 %v349, %v490
        %v492 = vpop.f32.mrb[0].mxu0
        %493 = vdwg.mxu0
        %v494 = vld [vmem:[#allocation4] sm:$0xff]
        %v495 = vld [vmem:[#allocation4 + $0x8] sm:$0xff]
        %v496 = vld [vmem:[#allocation4 + $0x10] sm:$0xff]
        %v497 = vld [vmem:[#allocation4 + $0x18] sm:$0xff]
        %v498 = vld [vmem:[#allocation4 + $0x20] sm:$0xff]
        %v499 = vld [vmem:[#allocation4 + $0x28] sm:$0xff]
        %v500 = vld [vmem:[#allocation4 + $0x30] sm:$0xff]
        %v501 = vld [vmem:[#allocation4 + $0x38] sm:$0xff]
        %v502 = vld [vmem:[#allocation4 + $0x40] sm:$0xff]
        %v503 = vld [vmem:[#allocation4 + $0x48] sm:$0xff]
        %v504 = vld [vmem:[#allocation4 + $0x50] sm:$0xff]
        %v505 = vld [vmem:[#allocation4 + $0x58] sm:$0xff]
        %v506 = vld [vmem:[#allocation4 + $0x60] sm:$0xff]
        %v507 = vld [vmem:[#allocation4 + $0x68] sm:$0xff]
        %v508 = vld [vmem:[#allocation4 + $0x70] sm:$0xff]
        %v509 = vld [vmem:[#allocation4 + $0x78] sm:$0xff]
        %v510 = vld [vmem:[#allocation4 + $0x80] sm:$0xff]
        %v511 = vld [vmem:[#allocation4 + $0x88] sm:$0xff]
        %v512 = vld [vmem:[#allocation4 + $0x90] sm:$0xff]
        %v513 = vld [vmem:[#allocation4 + $0x98] sm:$0xff]
        %v514 = vld [vmem:[#allocation4 + $0xa0] sm:$0xff]
        %v515 = vld [vmem:[#allocation4 + $0xa8] sm:$0xff]
        %v516 = vld [vmem:[#allocation4 + $0xb0] sm:$0xff]
        %v517 = vld [vmem:[#allocation4 + $0xb8] sm:$0xff]
        %v518 = vld [vmem:[#allocation4 + $0xc0] sm:$0xff]
        %v519 = vld [vmem:[#allocation4 + $0xc8] sm:$0xff]
        %v520 = vld [vmem:[#allocation4 + $0xd0] sm:$0xff]
        %v521 = vld [vmem:[#allocation4 + $0xd8] sm:$0xff]
        %v522 = vld [vmem:[#allocation4 + $0xe0] sm:$0xff]
        %v523 = vld [vmem:[#allocation4 + $0xe8] sm:$0xff]
        %v524 = vld [vmem:[#allocation4 + $0xf0] sm:$0xff]
        %v525 = vld [vmem:[#allocation4 + $0xf8] sm:$0xff]
        %v526 = vld [vmem:[#allocation4 + $0x100] sm:$0xff]
        %v527 = vld [vmem:[#allocation4 + $0x108] sm:$0xff]
        %v528 = vld [vmem:[#allocation4 + $0x110] sm:$0xff]
        %v529 = vld [vmem:[#allocation4 + $0x118] sm:$0xff]
        %v530 = vld [vmem:[#allocation4 + $0x120] sm:$0xff]
        %v531 = vld [vmem:[#allocation4 + $0x128] sm:$0xff]
        %v532 = vld [vmem:[#allocation4 + $0x130] sm:$0xff]
        %v533 = vld [vmem:[#allocation4 + $0x138] sm:$0xff]
        %v534 = vld [vmem:[#allocation4 + $0x140] sm:$0xff]
        %v535 = vld [vmem:[#allocation4 + $0x148] sm:$0xff]
        %v536 = vld [vmem:[#allocation4 + $0x150] sm:$0xff]
        %v537 = vld [vmem:[#allocation4 + $0x158] sm:$0xff]
        %v538 = vld [vmem:[#allocation4 + $0x160] sm:$0xff]
        %v539 = vld [vmem:[#allocation4 + $0x168] sm:$0xff]
        %v540 = vld [vmem:[#allocation4 + $0x170] sm:$0xff]
        %v541 = vld [vmem:[#allocation4 + $0x178] sm:$0xff]
        %v542 = vld [vmem:[%s5] sm:$0x7]
        %v544 = vlaneseq
        %v545 = vshrl.u32 %v544, 7
        %v546 = vsub.s32 0, %v545
        %v547 = vrot.slane %v542, %v546
        %v548 = vlaneseq
        %v549 = vshrl.u32 %v548, 7
        %v550 = vsub.s32 1, %v549
        %v551 = vrot.slane %v542, %v550
        %v552 = vlaneseq
        %v553 = vshrl.u32 %v552, 7
        %v554 = vsub.s32 2, %v553
        %v555 = vrot.slane %v542, %v554
        %559 = vmatprep.subr.mxu0 %v495
        %560 = vmatpush1.msra.mxu0 %v494
        %561 = vmatprep.subr.mxu0 %v498
        %562 = vmatpush1.msra.mxu0 %v497
        %563 = vmatprep.subr.mxu0 %v501
        %564 = vmatpush1.msra.mxu0 %v500
        %565 = vmatprep.subr.mxu0 %v504
        %566 = vmatpush1.msra.mxu0 %v503
        %567 = vmatprep.subr.mxu0 %v507
        %568 = vmatpush1.msra.mxu0 %v506
        %569 = vmatprep.subr.mxu0 %v510
        %570 = vmatpush1.msra.mxu0 %v509
        %571 = vmatprep.subr.mxu0 %v513
        %572 = vmatpush1.msra.mxu0 %v512
        %573 = vmatprep.subr.mxu0 %v516
        %574 = vmatpush1.msra.mxu0 %v515
        %575 = vmatprep.subr.mxu0 %v519
        %576 = vmatpush1.msra.mxu0 %v518
        %577 = vmatprep.subr.mxu0 %v522
        %578 = vmatpush1.msra.mxu0 %v521
        %579 = vmatprep.subr.mxu0 %v525
        %580 = vmatpush1.msra.mxu0 %v524
        %581 = vmatprep.subr.mxu0 %v528
        %582 = vmatpush1.msra.mxu0 %v527
        %583 = vmatprep.subr.mxu0 %v531
        %584 = vmatpush1.msra.mxu0 %v530
        %585 = vmatprep.subr.mxu0 %v534
        %586 = vmatpush1.msra.mxu0 %v533
        %587 = vmatprep.subr.mxu0 %v537
        %588 = vmatpush1.msra.mxu0 %v536
        %589 = vmatprep.subr.mxu0 %v540
        %590 = vmatpush1.msra.mxu0 %v539
        %591 = vmatprep.subr.mxu0 0.0
        %592 = vmatpush1.msra.mxu0 0.0
        %593 = vmatprep.subr.mxu0 0.0
        %594 = vmatpush1.msra.mxu0 0.0
        %595 = vmatprep.subr.mxu0 0.0
        %596 = vmatpush1.msra.mxu0 0.0
        %597 = vmatprep.subr.mxu0 0.0
        %598 = vmatpush1.msra.mxu0 0.0
        %599 = vmatprep.subr.mxu0 0.0
        %600 = vmatpush1.msra.mxu0 0.0
        %601 = vmatprep.subr.mxu0 0.0
        %602 = vmatpush1.msra.mxu0 0.0
        %603 = vmatprep.subr.mxu0 0.0
        %604 = vmatpush1.msra.mxu0 0.0
        %605 = vmatprep.subr.mxu0 0.0
        %606 = vmatpush1.msra.mxu0 0.0
        %607 = vmatprep.subr.mxu0 0.0
        %608 = vmatpush1.msra.mxu0 0.0
        %609 = vmatprep.subr.mxu0 0.0
        %610 = vmatpush1.msra.mxu0 0.0
        %611 = vmatprep.subr.mxu0 0.0
        %612 = vmatpush1.msra.mxu0 0.0
        %613 = vmatprep.subr.mxu0 0.0
        %614 = vmatpush1.msra.mxu0 0.0
        %615 = vmatprep.subr.mxu0 0.0
        %616 = vmatpush1.msra.mxu0 0.0
        %617 = vmatprep.subr.mxu0 0.0
        %618 = vmatpush1.msra.mxu0 0.0
        %619 = vmatprep.subr.mxu0 0.0
        %620 = vmatpush1.msra.mxu0 0.0
        %621 = vmatprep.subr.mxu0 0.0
        %622 = vmatpush1.msra.mxu0 0.0
        %623 = vmatprep.mubr.f32.mxu0 0.0
        %624 = vmatmul.mubr.f32.gmra.mrb[0].mxu0 %v286
        %v625 = vpop.f32.mrb[0].mxu0
        %v626 = vadd.f32 %v547, %v625
        %v627 = vpop.f32.mrb[0].mxu0
        %v628 = vadd.f32 %v551, %v627
        %629 = vdwg.mxu0
        %630 = vmatprep.subr.mxu0 0.0
        %631 = vmatpush1.msra.mxu0 %v496
        %632 = vmatprep.subr.mxu0 0.0
        %633 = vmatpush1.msra.mxu0 %v499
        %634 = vmatprep.subr.mxu0 0.0
        %635 = vmatpush1.msra.mxu0 %v502
        %636 = vmatprep.subr.mxu0 0.0
        %637 = vmatpush1.msra.mxu0 %v505
        %638 = vmatprep.subr.mxu0 0.0
        %639 = vmatpush1.msra.mxu0 %v508
        %640 = vmatprep.subr.mxu0 0.0
        %641 = vmatpush1.msra.mxu0 %v511
        %642 = vmatprep.subr.mxu0 0.0
        %643 = vmatpush1.msra.mxu0 %v514
        %644 = vmatprep.subr.mxu0 0.0
        %645 = vmatpush1.msra.mxu0 %v517
        %646 = vmatprep.subr.mxu0 0.0
        %647 = vmatpush1.msra.mxu0 %v520
        %648 = vmatprep.subr.mxu0 0.0
        %649 = vmatpush1.msra.mxu0 %v523
        %650 = vmatprep.subr.mxu0 0.0
        %651 = vmatpush1.msra.mxu0 %v526
        %652 = vmatprep.subr.mxu0 0.0
        %653 = vmatpush1.msra.mxu0 %v529
        %654 = vmatprep.subr.mxu0 0.0
        %655 = vmatpush1.msra.mxu0 %v532
        %656 = vmatprep.subr.mxu0 0.0
        %657 = vmatpush1.msra.mxu0 %v535
        %658 = vmatprep.subr.mxu0 0.0
        %659 = vmatpush1.msra.mxu0 %v538
        %660 = vmatprep.subr.mxu0 0.0
        %661 = vmatpush1.msra.mxu0 %v541
        %662 = vmatprep.subr.mxu0 0.0
        %663 = vmatpush1.msra.mxu0 0.0
        %664 = vmatprep.subr.mxu0 0.0
        %665 = vmatpush1.msra.mxu0 0.0
        %666 = vmatprep.subr.mxu0 0.0
        %667 = vmatpush1.msra.mxu0 0.0
        %668 = vmatprep.subr.mxu0 0.0
        %669 = vmatpush1.msra.mxu0 0.0
        %670 = vmatprep.subr.mxu0 0.0
        %671 = vmatpush1.msra.mxu0 0.0
        %672 = vmatprep.subr.mxu0 0.0
        %673 = vmatpush1.msra.mxu0 0.0
        %674 = vmatprep.subr.mxu0 0.0
        %675 = vmatpush1.msra.mxu0 0.0
        %676 = vmatprep.subr.mxu0 0.0
        %677 = vmatpush1.msra.mxu0 0.0
        %678 = vmatprep.subr.mxu0 0.0
        %679 = vmatpush1.msra.mxu0 0.0
        %680 = vmatprep.subr.mxu0 0.0
        %681 = vmatpush1.msra.mxu0 0.0
        %682 = vmatprep.subr.mxu0 0.0
        %683 = vmatpush1.msra.mxu0 0.0
        %684 = vmatprep.subr.mxu0 0.0
        %685 = vmatpush1.msra.mxu0 0.0
        %686 = vmatprep.subr.mxu0 0.0
        %687 = vmatpush1.msra.mxu0 0.0
        %688 = vmatprep.subr.mxu0 0.0
        %689 = vmatpush1.msra.mxu0 0.0
        %690 = vmatprep.subr.mxu0 0.0
        %691 = vmatpush1.msra.mxu0 0.0
        %692 = vmatprep.subr.mxu0 0.0
        %693 = vmatpush1.msra.mxu0 0.0
        %694 = vmatprep.mubr.f32.mxu0 0.0
        %695 = vmatmul.mubr.f32.gmra.mrb[0].mxu0 %v286
        %v696 = vpop.f32.mrb[0].mxu0
        %v697 = vadd.f32 %v555, %v696
        %v698 = vpop.f32.mrb[0].mxu0
        %699 = vdwg.mxu0
        %v700 = vadd.f32 %v420, %v626
        %v701 = vxor.u32 %v700, 2147483648
        %v702 = vmul.f32 %v701, 1.442695
        %v703 = vpow.pop %v702
        %v704 = vadd.f32 %v703, 1.0
        %v705 = vrcp.pop %v704
        %v706 = vmul.f32 1.0, %v705
        %v707 = vadd.f32 %v422, %v628
        %v708 = vxor.u32 %v707, 2147483648
        %v709 = vmul.f32 %v708, 1.442695
        %v710 = vpow.pop %v709
        %v711 = vadd.f32 %v710, 1.0
        %v712 = vrcp.pop %v711
        %v713 = vmul.f32 1.0, %v712
        %v714 = vmul.f32 %v706, %v697
        %v715 = vadd.f32 %v491, %v714
        %v716 = vtanh.pop %v715
        %v717 = vsub.f32 1.0, %v713
        %v718 = vmul.f32 %v717, %v716
        %v719 = vmul.f32 %v713, %v286
        %v720 = vadd.f32 %v718, %v719
        %v721 = vld [vmem:[%s280] sm:$0xff]
        %723 = vset.pattern.permute.xlu0 0
        %724 = vperm.xlu0 %723, %v721
        %v725 = vpop.permute.xlu0 %724
        %v727 = vmul.f32 %v725, %v720
        %v728 = vsub.f32 1.0, %v721
        %730 = vset.pattern.permute.xlu0 0
        %731 = vperm.xlu0 %730, %v728
        %v732 = vpop.permute.xlu0 %731
        %v734 = vmul.f32 %v732, %v286
        %v735 = vadd.f32 %v727, %v734
        %736 = vst [vmem:[%s6] sm:$0xff] %v735
        // Predicated region
        $region57: #{dmn_forward.5} parent=43 // pred_check
          %p737 = pneg %p168
        $region58: #{dmn_forward.5} parent=43 // pred_check_branch
          %739 = sbr.rel (%p737) target = $region60
        $region59: #{dmn_forward.5} parent=43 // pred_region
          _
        $region60: #{dmn_forward.5} parent=43 // pred_fallthru
          _
        // Predicated region
        $region61: #{dmn_forward.5} parent=43 // pred_check
          %p740 = pneg %p168
        $region62: #{dmn_forward.5} parent=43 // pred_check_branch
          %742 = sbr.rel (%p740) target = $region64
        $region63: #{dmn_forward.5} parent=43 // pred_region
          _
        $region64: #{dmn_forward.5} parent=43 // pred_fallthru
          _
      $region44: #{dmn_forward.5} parent=5 // pred_fallthru
        _
      %p743 = scmp.le.s32.totalorder 2, %s14
      // Predicated region
      $region65: #{dmn_forward.5} parent=5 // pred_check
        %p744 = pneg %p743
      $region66: #{dmn_forward.5} parent=5 // pred_check_branch
        %746 = sbr.rel (%p744) target = $region68
      $region67: #{dmn_forward.5} parent=5 // pred_region
        %s747 = ssub.s32 %s14, 2
      $region68: #{dmn_forward.5} parent=5 // pred_fallthru
        _
    $region6: #{dmn_forward.5} parent=1 // loop_footer
      %s18 = sadd.s32 1, %s14
    $region7: #{dmn_forward.5} parent=1 // loop_footer_branch
      %13 = sbr.rel target = $region3
    $region8: #{dmn_forward.5} parent=1 // loop_exit
      _
    %748 = vsyncpa [#allocation3], 1
    %s749 = scalar_lea.sflag [#allocation3], 1
    %750 = vsyncpa %s749, 1
    %751 = vsyncpa [#allocation5], 1

// kernel: dmn_forward.4
$region0: #{dmn_forward.4}
  #allocation0 [shape = 'u32[]', space=smem, size = 0x4, offset = 0x4, fixed_abs, tag = 'smem constant byte address 0x4 - core index']
  #allocation1 [shape = 'u32[144,128]{1,0:T(1,128)}', space=vmem, size = 0x12000, scoped, tag = 'internal scratch']
  %s0 = inlined_call_operand.vmem [shape: f32[6,8,128], index: 0, kind: input, shape index: {}]
  %s1 = inlined_call_operand.vmem [shape: f32[6,8,1], index: 1, kind: input, shape index: {}]
  %s2 = inlined_call_operand.vmem [shape: f32[128,384], index: 2, kind: input, shape index: {}]
  %s3 = inlined_call_operand.vmem [shape: f32[128,384], index: 3, kind: input, shape index: {}]
  %s4 = inlined_call_operand.vmem [shape: f32[1,384], index: 4, kind: input, shape index: {}]
  %s5 = inlined_call_operand.vmem [shape: f32[1,384], index: 5, kind: input, shape index: {}]
  %s6 = inlined_call_operand.vmem [shape: f32[8,128], index: 6, kind: output, shape index: {}]
  %s7 = sld [smem:[#allocation0]]
  $region61: #{dmn_forward.4} parent=0
    _
  %s9 = ssub.s32 1, %s7
  %s10 = scalar_select 0, %s9, %s7
  loop: start=0, step=1, limit=8
  $region2: #{dmn_forward.4} parent=0 // loop_pre_header
    _
  $region3: #{dmn_forward.4} parent=0 // loop_header
    %s12 = sphi 0, %s16
    %p13 = scmp.ge.s32.totalorder %s12, 8
    %s22 = sphi 0, %s24
    %s25 = sphi 0, %s22
    %s26 = sphi 0, %s25
    %s42 = sphi 0, %s26
    %s48 = sphi 0, %s50
    %s51 = sphi 0, %s48
    %s52 = sphi 0, %s51
    %s68 = sphi 0, %s52
    %s72 = sphi 0, %s72
    %s74 = sphi 0, %s72
    %s75 = sphi 0, %s74
    %s89 = sphi 0, %s75
    %s93 = sphi 0, %s93
    %s95 = sphi 0, %s93
    %s96 = sphi 0, %s95
    %s110 = sphi 0, %s96
    %s114 = sphi 0, %s114
    %s116 = sphi 0, %s114
    %s117 = sphi 0, %s116
    %s131 = sphi 0, %s117
    %s135 = sphi 0, %s135
    %s137 = sphi 0, %s135
    %s138 = sphi 0, %s137
    %s152 = sphi 0, %s138
    %s156 = sphi 0, %s156
    %s158 = sphi 0, %s156
    %s159 = sphi 0, %s158
    %s173 = sphi 0, %s159
  $region4: #{dmn_forward.4} parent=0 // loop_header_branch
    %15 = sbr.rel (%p13) target = $region8
  $region5: #{dmn_forward.4} parent=0 // loop_body
    %s17 = ssub.s32 %s12, 1
    %s18 = ssub.s32 %s12, 2
    %s19 = sadd.s32 %s12, 1
    %s20 = ssub.s32 %s12, %s19
    %p21 = scmp.eq.s32.totalorder %s20, 0
    %s23 = sadd.s32 %s22, 1
    %s24 = scalar_select %p21, %s22, %s23
    %p27 = pneg %p21
    %p28 = scmp.eq.s32.totalorder %s12, 5
    %p29 = por %p27, %p28
    %p30 = scmp.ne.s32.totalorder %s22, %s25
    %p31 = scmp.eq.s32.totalorder %s12, 0
    %p32 = por %p30, %p31
    %p33 = scmp.ne.s32.totalorder %s22, %s25
    %p34 = scmp.eq.s32.totalorder %s17, 5
    %p35 = por %p33, %p34
    %p36 = scmp.ne.s32.totalorder %s25, %s26
    %p37 = scmp.eq.s32.totalorder %s17, 0
    %p38 = por %p36, %p37
    %p39 = scmp.ne.s32.totalorder %s25, %s26
    %p40 = scmp.eq.s32.totalorder %s18, 5
    %p41 = por %p39, %p40
    %p43 = scmp.ne.s32.totalorder %s26, %s42
    %p44 = scmp.eq.s32.totalorder %s18, 0
    %p45 = por %p43, %p44
    %s46 = ssub.s32 %s12, %s19
    %p47 = scmp.eq.s32.totalorder %s46, 0
    %s49 = sadd.s32 %s48, 1
    %s50 = scalar_select %p47, %s48, %s49
    %p53 = pneg %p47
    %p54 = scmp.eq.s32.totalorder %s12, 5
    %p55 = por %p53, %p54
    %p56 = scmp.ne.s32.totalorder %s48, %s51
    %p57 = scmp.eq.s32.totalorder %s12, 0
    %p58 = por %p56, %p57
    %p59 = scmp.ne.s32.totalorder %s48, %s51
    %p60 = scmp.eq.s32.totalorder %s17, 5
    %p61 = por %p59, %p60
    %p62 = scmp.ne.s32.totalorder %s51, %s52
    %p63 = scmp.eq.s32.totalorder %s17, 0
    %p64 = por %p62, %p63
    %p65 = scmp.ne.s32.totalorder %s51, %s52
    %p66 = scmp.eq.s32.totalorder %s18, 5
    %p67 = por %p65, %p66
    %p69 = scmp.ne.s32.totalorder %s52, %s68
    %p70 = scmp.eq.s32.totalorder %s18, 0
    %p71 = por %p69, %p70
    %s73 = sadd.s32 %s72, 1
    %p76 = scmp.eq.s32.totalorder %s12, 5
    %p77 = scmp.ne.s32.totalorder %s72, %s74
    %p78 = scmp.eq.s32.totalorder %s12, 0
    %p79 = por %p77, %p78
    %p80 = scmp.ne.s32.totalorder %s72, %s74
    %p81 = scmp.eq.s32.totalorder %s17, 5
    %p82 = por %p80, %p81
    %p83 = scmp.ne.s32.totalorder %s74, %s75
    %p84 = scmp.eq.s32.totalorder %s17, 0
    %p85 = por %p83, %p84
    %p86 = scmp.ne.s32.totalorder %s74, %s75
    %p87 = scmp.eq.s32.totalorder %s18, 5
    %p88 = por %p86, %p87
    %p90 = scmp.ne.s32.totalorder %s75, %s89
    %p91 = scmp.eq.s32.totalorder %s18, 0
    %p92 = por %p90, %p91
    %s94 = sadd.s32 %s93, 1
    %p97 = scmp.eq.s32.totalorder %s12, 5
    %p98 = scmp.ne.s32.totalorder %s93, %s95
    %p99 = scmp.eq.s32.totalorder %s12, 0
    %p100 = por %p98, %p99
    %p101 = scmp.ne.s32.totalorder %s93, %s95
    %p102 = scmp.eq.s32.totalorder %s17, 5
    %p103 = por %p101, %p102
    %p104 = scmp.ne.s32.totalorder %s95, %s96
    %p105 = scmp.eq.s32.totalorder %s17, 0
    %p106 = por %p104, %p105
    %p107 = scmp.ne.s32.totalorder %s95, %s96
    %p108 = scmp.eq.s32.totalorder %s18, 5
    %p109 = por %p107, %p108
    %p111 = scmp.ne.s32.totalorder %s96, %s110
    %p112 = scmp.eq.s32.totalorder %s18, 0
    %p113 = por %p111, %p112
    %s115 = sadd.s32 %s114, 1
    %p118 = scmp.eq.s32.totalorder %s12, 5
    %p119 = scmp.ne.s32.totalorder %s114, %s116
    %p120 = scmp.eq.s32.totalorder %s12, 0
    %p121 = por %p119, %p120
    %p122 = scmp.ne.s32.totalorder %s114, %s116
    %p123 = scmp.eq.s32.totalorder %s17, 5
    %p124 = por %p122, %p123
    %p125 = scmp.ne.s32.totalorder %s116, %s117
    %p126 = scmp.eq.s32.totalorder %s17, 0
    %p127 = por %p125, %p126
    %p128 = scmp.ne.s32.totalorder %s116, %s117
    %p129 = scmp.eq.s32.totalorder %s18, 5
    %p130 = por %p128, %p129
    %p132 = scmp.ne.s32.totalorder %s117, %s131
    %p133 = scmp.eq.s32.totalorder %s18, 0
    %p134 = por %p132, %p133
    %s136 = sadd.s32 %s135, 1
    %p139 = scmp.eq.s32.totalorder %s12, 5
    %p140 = scmp.ne.s32.totalorder %s135, %s137
    %p141 = scmp.eq.s32.totalorder %s12, 0
    %p142 = por %p140, %p141
    %p143 = scmp.ne.s32.totalorder %s135, %s137
    %p144 = scmp.eq.s32.totalorder %s17, 5
    %p145 = por %p143, %p144
    %p146 = scmp.ne.s32.totalorder %s137, %s138
    %p147 = scmp.eq.s32.totalorder %s17, 0
    %p148 = por %p146, %p147
    %p149 = scmp.ne.s32.totalorder %s137, %s138
    %p150 = scmp.eq.s32.totalorder %s18, 5
    %p151 = por %p149, %p150
    %p153 = scmp.ne.s32.totalorder %s138, %s152
    %p154 = scmp.eq.s32.totalorder %s18, 0
    %p155 = por %p153, %p154
    %s157 = sadd.s32 %s156, 1
    %p160 = scmp.eq.s32.totalorder %s12, 5
    %p161 = scmp.ne.s32.totalorder %s156, %s158
    %p162 = scmp.eq.s32.totalorder %s12, 0
    %p163 = por %p161, %p162
    %p164 = scmp.ne.s32.totalorder %s156, %s158
    %p165 = scmp.eq.s32.totalorder %s17, 5
    %p166 = por %p164, %p165
    %p167 = scmp.ne.s32.totalorder %s158, %s159
    %p168 = scmp.eq.s32.totalorder %s17, 0
    %p169 = por %p167, %p168
    %p170 = scmp.ne.s32.totalorder %s158, %s159
    %p171 = scmp.eq.s32.totalorder %s18, 5
    %p172 = por %p170, %p171
    %p174 = scmp.ne.s32.totalorder %s159, %s173
    %p175 = scmp.eq.s32.totalorder %s18, 0
    %p176 = por %p174, %p175
    %p177 = scmp.le.s32.totalorder 1, %s12
    %p178 = scmp.lt.s32.totalorder %s12, 7
    %p179 = pnand %p177, %p178
    %p180 = pneg %p179
    // Predicated region
    $region9: #{dmn_forward.4} parent=5 // pred_check
      _
    $region10: #{dmn_forward.4} parent=5 // pred_check_branch
      %182 = sbr.rel (%p179) target = $region12
    $region11: #{dmn_forward.4} parent=5 // pred_region
      %s183 = ssub.s32 %s12, 1
      // Predicated region
      $region13: #{dmn_forward.4} parent=11 // pred_check
        %p184 = pneg %p85
      $region14: #{dmn_forward.4} parent=11 // pred_check_branch
        %186 = sbr.rel (%p184) target = $region16
      $region15: #{dmn_forward.4} parent=11 // pred_region
        _
      $region16: #{dmn_forward.4} parent=11 // pred_fallthru
        _
      // Predicated region
      $region17: #{dmn_forward.4} parent=11 // pred_check
        %p187 = pneg %p106
      $region18: #{dmn_forward.4} parent=11 // pred_check_branch
        %189 = sbr.rel (%p187) target = $region20
      $region19: #{dmn_forward.4} parent=11 // pred_region
        _
      $region20: #{dmn_forward.4} parent=11 // pred_fallthru
        _
      // Predicated region
      $region21: #{dmn_forward.4} parent=11 // pred_check
        %p190 = pneg %p127
      $region22: #{dmn_forward.4} parent=11 // pred_check_branch
        %192 = sbr.rel (%p190) target = $region24
      $region23: #{dmn_forward.4} parent=11 // pred_region
        _
      $region24: #{dmn_forward.4} parent=11 // pred_fallthru
        _
      // Predicated region
      $region25: #{dmn_forward.4} parent=11 // pred_check
        %p193 = pneg %p148
      $region26: #{dmn_forward.4} parent=11 // pred_check_branch
        %195 = sbr.rel (%p193) target = $region28
      $region27: #{dmn_forward.4} parent=11 // pred_region
        _
      $region28: #{dmn_forward.4} parent=11 // pred_fallthru
        _
    $region12: #{dmn_forward.4} parent=5 // pred_fallthru
      _
    %p196 = scmp.lt.s32.totalorder %s12, 6
    // Predicated region
    $region29: #{dmn_forward.4} parent=5 // pred_check
      %p197 = pneg %p196
    $region30: #{dmn_forward.4} parent=5 // pred_check_branch
      %199 = sbr.rel (%p197) target = $region32
    $region31: #{dmn_forward.4} parent=5 // pred_region
      // Predicated region
      $region33: #{dmn_forward.4} parent=31 // pred_check
        %p200 = pneg %p32
      $region34: #{dmn_forward.4} parent=31 // pred_check_branch
        %202 = sbr.rel (%p200) target = $region36
      $region35: #{dmn_forward.4} parent=31 // pred_region
        %p203 = scmp.lt.s32.totalorder %s12, 5
        %s204 = scalar_select %p203, %s12, 5
        %s205 = smul.addr %s204, 8
        %s206 = scalar_lea.vmem %s0, %s205
      $region36: #{dmn_forward.4} parent=31 // pred_fallthru
        _
      // Predicated region
      $region37: #{dmn_forward.4} parent=31 // pred_check
        %p207 = pneg %p58
      $region38: #{dmn_forward.4} parent=31 // pred_check_branch
        %209 = sbr.rel (%p207) target = $region40
      $region39: #{dmn_forward.4} parent=31 // pred_region
        %p210 = scmp.lt.s32.totalorder %s12, 5
        %s211 = scalar_select %p210, %s12, 5
        %s212 = smul.addr %s211, 8
        %s213 = scalar_lea.vmem %s1, %s212
      $region40: #{dmn_forward.4} parent=31 // pred_fallthru
        _
    $region32: #{dmn_forward.4} parent=5 // pred_fallthru
      _
    %p214 = scmp.le.s32.totalorder 1, %s12
    %p215 = scmp.lt.s32.totalorder %s12, 7
    %p216 = pnand %p214, %p215
    %p217 = pneg %p216
    // Predicated region
    $region41: #{dmn_forward.4} parent=5 // pred_check
      _
    $region42: #{dmn_forward.4} parent=5 // pred_check_branch
      %219 = sbr.rel (%p216) target = $region44
    $region43: #{dmn_forward.4} parent=5 // pred_region
      %s220 = ssub.s32 %s12, 1
      %p221 = scmp.lt.s32.totalorder %s17, 5
      %s222 = scalar_select %p221, %s17, 5
      %s223 = smul.addr %s222, 8
      %s224 = scalar_lea.vmem %s0, %s223
      %p225 = pneg %p38
      %p226 = pneg %p35
      %p227 = scmp.lt.s32.totalorder %s17, 5
      %s228 = scalar_select %p227, %s17, 5
      %s229 = smul.addr %s228, 8
      %s230 = scalar_lea.vmem %s1, %s229
      %p231 = pneg %p64
      %p232 = pneg %p61
      %p233 = pneg %p85
      %p234 = pneg %p82
      %p235 = pneg %p106
      %p236 = pneg %p103
      %p237 = pneg %p127
      %p238 = pneg %p124
      %p239 = pneg %p148
      %p240 = pneg %p145
      %p241 = pneg %p169
      %p242 = pneg %p166
      %p243 = scmp.lt.s32.totalorder %s17, 5
      %s244 = scalar_select %p243, %s17, 5
      %s245 = smul.addr %s244, 8
      %s246 = scalar_lea.vmem %s0, %s245
      %p247 = scmp.lt.s32.totalorder %s17, 5
      %s248 = scalar_select %p247, %s17, 5
      %s249 = smul.addr %s248, 8
      %s250 = scalar_lea.vmem %s1, %s249
      %p251 = scmp.eq.s32.totalorder %s17, 0
      // Predicated region
      $region45: #{dmn_forward.4} parent=43 // pred_check
        %p252 = pneg %p251
      $region46: #{dmn_forward.4} parent=43 // pred_check_branch
        %254 = sbr.rel (%p252) target = $region48
      $region47: #{dmn_forward.4} parent=43 // pred_region
        %255 = vst [vmem:[%s6] sm:$0xff] 0.0
      $region48: #{dmn_forward.4} parent=43 // pred_fallthru
        _
      %v256 = vld [vmem:[%s6] sm:$0xff]
      %v257 = vld [vmem:[%s246] sm:$0xff]
      %v258 = vld [vmem:[%s2] sm:$0xff]
      %v259 = vld [vmem:[%s2 + $0x8] sm:$0xff]
      %v260 = vld [vmem:[%s2 + $0x10] sm:$0xff]
      %v261 = vld [vmem:[%s2 + $0x18] sm:$0xff]
      %v262 = vld [vmem:[%s2 + $0x20] sm:$0xff]
      %v263 = vld [vmem:[%s2 + $0x28] sm:$0xff]
      %v264 = vld [vmem:[%s2 + $0x30] sm:$0xff]
      %v265 = vld [vmem:[%s2 + $0x38] sm:$0xff]
      %v266 = vld [vmem:[%s2 + $0x40] sm:$0xff]
      %v267 = vld [vmem:[%s2 + $0x48] sm:$0xff]
      %v268 = vld [vmem:[%s2 + $0x50] sm:$0xff]
      %v269 = vld [vmem:[%s2 + $0x58] sm:$0xff]
      %v270 = vld [vmem:[%s2 + $0x60] sm:$0xff]
      %v271 = vld [vmem:[%s2 + $0x68] sm:$0xff]
      %v272 = vld [vmem:[%s2 + $0x70] sm:$0xff]
      %v273 = vld [vmem:[%s2 + $0x78] sm:$0xff]
      %v274 = vld [vmem:[%s2 + $0x80] sm:$0xff]
      %v275 = vld [vmem:[%s2 + $0x88] sm:$0xff]
      %v276 = vld [vmem:[%s2 + $0x90] sm:$0xff]
      %v277 = vld [vmem:[%s2 + $0x98] sm:$0xff]
      %v278 = vld [vmem:[%s2 + $0xa0] sm:$0xff]
      %v279 = vld [vmem:[%s2 + $0xa8] sm:$0xff]
      %v280 = vld [vmem:[%s2 + $0xb0] sm:$0xff]
      %v281 = vld [vmem:[%s2 + $0xb8] sm:$0xff]
      %v282 = vld [vmem:[%s2 + $0xc0] sm:$0xff]
      %v283 = vld [vmem:[%s2 + $0xc8] sm:$0xff]
      %v284 = vld [vmem:[%s2 + $0xd0] sm:$0xff]
      %v285 = vld [vmem:[%s2 + $0xd8] sm:$0xff]
      %v286 = vld [vmem:[%s2 + $0xe0] sm:$0xff]
      %v287 = vld [vmem:[%s2 + $0xe8] sm:$0xff]
      %v288 = vld [vmem:[%s2 + $0xf0] sm:$0xff]
      %v289 = vld [vmem:[%s2 + $0xf8] sm:$0xff]
      %v290 = vld [vmem:[%s2 + $0x100] sm:$0xff]
      %v291 = vld [vmem:[%s2 + $0x108] sm:$0xff]
      %v292 = vld [vmem:[%s2 + $0x110] sm:$0xff]
      %v293 = vld [vmem:[%s2 + $0x118] sm:$0xff]
      %v294 = vld [vmem:[%s2 + $0x120] sm:$0xff]
      %v295 = vld [vmem:[%s2 + $0x128] sm:$0xff]
      %v296 = vld [vmem:[%s2 + $0x130] sm:$0xff]
      %v297 = vld [vmem:[%s2 + $0x138] sm:$0xff]
      %v298 = vld [vmem:[%s2 + $0x140] sm:$0xff]
      %v299 = vld [vmem:[%s2 + $0x148] sm:$0xff]
      %v300 = vld [vmem:[%s2 + $0x150] sm:$0xff]
      %v301 = vld [vmem:[%s2 + $0x158] sm:$0xff]
      %v302 = vld [vmem:[%s2 + $0x160] sm:$0xff]
      %v303 = vld [vmem:[%s2 + $0x168] sm:$0xff]
      %v304 = vld [vmem:[%s2 + $0x170] sm:$0xff]
      %v305 = vld [vmem:[%s2 + $0x178] sm:$0xff]
      %v306 = vld [vmem:[%s4] sm:$0x7]
      %v308 = vlaneseq
      %v309 = vshrl.u32 %v308, 7
      %v310 = vsub.s32 0, %v309
      %v311 = vrot.slane %v306, %v310
      %v312 = vlaneseq
      %v313 = vshrl.u32 %v312, 7
      %v314 = vsub.s32 1, %v313
      %v315 = vrot.slane %v306, %v314
      %v316 = vlaneseq
      %v317 = vshrl.u32 %v316, 7
      %v318 = vsub.s32 2, %v317
      %v319 = vrot.slane %v306, %v318
      %323 = vmatprep.subr.mxu0 %v259
      %324 = vmatpush1.msra.mxu0 %v258
      %325 = vmatprep.subr.mxu0 %v262
      %326 = vmatpush1.msra.mxu0 %v261
      %327 = vmatprep.subr.mxu0 %v265
      %328 = vmatpush1.msra.mxu0 %v264
      %329 = vmatprep.subr.mxu0 %v268
      %330 = vmatpush1.msra.mxu0 %v267
      %331 = vmatprep.subr.mxu0 %v271
      %332 = vmatpush1.msra.mxu0 %v270
      %333 = vmatprep.subr.mxu0 %v274
      %334 = vmatpush1.msra.mxu0 %v273
      %335 = vmatprep.subr.mxu0 %v277
      %336 = vmatpush1.msra.mxu0 %v276
      %337 = vmatprep.subr.mxu0 %v280
      %338 = vmatpush1.msra.mxu0 %v279
      %339 = vmatprep.subr.mxu0 %v283
      %340 = vmatpush1.msra.mxu0 %v282
      %341 = vmatprep.subr.mxu0 %v286
      %342 = vmatpush1.msra.mxu0 %v285
      %343 = vmatprep.subr.mxu0 %v289
      %344 = vmatpush1.msra.mxu0 %v288
      %345 = vmatprep.subr.mxu0 %v292
      %346 = vmatpush1.msra.mxu0 %v291
      %347 = vmatprep.subr.mxu0 %v295
      %348 = vmatpush1.msra.mxu0 %v294
      %349 = vmatprep.subr.mxu0 %v298
      %350 = vmatpush1.msra.mxu0 %v297
      %351 = vmatprep.subr.mxu0 %v301
      %352 = vmatpush1.msra.mxu0 %v300
      %353 = vmatprep.subr.mxu0 %v304
      %354 = vmatpush1.msra.mxu0 %v303
      %355 = vmatprep.subr.mxu0 0.0
      %356 = vmatpush1.msra.mxu0 0.0
      %357 = vmatprep.subr.mxu0 0.0
      %358 = vmatpush1.msra.mxu0 0.0
      %359 = vmatprep.subr.mxu0 0.0
      %360 = vmatpush1.msra.mxu0 0.0
      %361 = vmatprep.subr.mxu0 0.0
      %362 = vmatpush1.msra.mxu0 0.0
      %363 = vmatprep.subr.mxu0 0.0
      %364 = vmatpush1.msra.mxu0 0.0
      %365 = vmatprep.subr.mxu0 0.0
      %366 = vmatpush1.msra.mxu0 0.0
      %367 = vmatprep.subr.mxu0 0.0
      %368 = vmatpush1.msra.mxu0 0.0
      %369 = vmatprep.subr.mxu0 0.0
      %370 = vmatpush1.msra.mxu0 0.0
      %371 = vmatprep.subr.mxu0 0.0
      %372 = vmatpush1.msra.mxu0 0.0
      %373 = vmatprep.subr.mxu0 0.0
      %374 = vmatpush1.msra.mxu0 0.0
      %375 = vmatprep.subr.mxu0 0.0
      %376 = vmatpush1.msra.mxu0 0.0
      %377 = vmatprep.subr.mxu0 0.0
      %378 = vmatpush1.msra.mxu0 0.0
      %379 = vmatprep.subr.mxu0 0.0
      %380 = vmatpush1.msra.mxu0 0.0
      %381 = vmatprep.subr.mxu0 0.0
      %382 = vmatpush1.msra.mxu0 0.0
      %383 = vmatprep.subr.mxu0 0.0
      %384 = vmatpush1.msra.mxu0 0.0
      %385 = vmatprep.subr.mxu0 0.0
      %386 = vmatpush1.msra.mxu0 0.0
      %387 = vmatprep.mubr.f32.mxu0 0.0
      %388 = vmatmul.mubr.f32.gmra.mrb[0].mxu0 %v257
      %v389 = vpop.f32.mrb[0].mxu0
      %v390 = vadd.f32 %v311, %v389
      %v391 = vpop.f32.mrb[0].mxu0
      %v392 = vadd.f32 %v315, %v391
      %393 = vdwg.mxu0
      %394 = vmatprep.subr.mxu0 0.0
      %395 = vmatpush1.msra.mxu0 %v260
      %396 = vmatprep.subr.mxu0 0.0
      %397 = vmatpush1.msra.mxu0 %v263
      %398 = vmatprep.subr.mxu0 0.0
      %399 = vmatpush1.msra.mxu0 %v266
      %400 = vmatprep.subr.mxu0 0.0
      %401 = vmatpush1.msra.mxu0 %v269
      %402 = vmatprep.subr.mxu0 0.0
      %403 = vmatpush1.msra.mxu0 %v272
      %404 = vmatprep.subr.mxu0 0.0
      %405 = vmatpush1.msra.mxu0 %v275
      %406 = vmatprep.subr.mxu0 0.0
      %407 = vmatpush1.msra.mxu0 %v278
      %408 = vmatprep.subr.mxu0 0.0
      %409 = vmatpush1.msra.mxu0 %v281
      %410 = vmatprep.subr.mxu0 0.0
      %411 = vmatpush1.msra.mxu0 %v284
      %412 = vmatprep.subr.mxu0 0.0
      %413 = vmatpush1.msra.mxu0 %v287
      %414 = vmatprep.subr.mxu0 0.0
      %415 = vmatpush1.msra.mxu0 %v290
      %416 = vmatprep.subr.mxu0 0.0
      %417 = vmatpush1.msra.mxu0 %v293
      %418 = vmatprep.subr.mxu0 0.0
      %419 = vmatpush1.msra.mxu0 %v296
      %420 = vmatprep.subr.mxu0 0.0
      %421 = vmatpush1.msra.mxu0 %v299
      %422 = vmatprep.subr.mxu0 0.0
      %423 = vmatpush1.msra.mxu0 %v302
      %424 = vmatprep.subr.mxu0 0.0
      %425 = vmatpush1.msra.mxu0 %v305
      %426 = vmatprep.subr.mxu0 0.0
      %427 = vmatpush1.msra.mxu0 0.0
      %428 = vmatprep.subr.mxu0 0.0
      %429 = vmatpush1.msra.mxu0 0.0
      %430 = vmatprep.subr.mxu0 0.0
      %431 = vmatpush1.msra.mxu0 0.0
      %432 = vmatprep.subr.mxu0 0.0
      %433 = vmatpush1.msra.mxu0 0.0
      %434 = vmatprep.subr.mxu0 0.0
      %435 = vmatpush1.msra.mxu0 0.0
      %436 = vmatprep.subr.mxu0 0.0
      %437 = vmatpush1.msra.mxu0 0.0
      %438 = vmatprep.subr.mxu0 0.0
      %439 = vmatpush1.msra.mxu0 0.0
      %440 = vmatprep.subr.mxu0 0.0
      %441 = vmatpush1.msra.mxu0 0.0
      %442 = vmatprep.subr.mxu0 0.0
      %443 = vmatpush1.msra.mxu0 0.0
      %444 = vmatprep.subr.mxu0 0.0
      %445 = vmatpush1.msra.mxu0 0.0
      %446 = vmatprep.subr.mxu0 0.0
      %447 = vmatpush1.msra.mxu0 0.0
      %448 = vmatprep.subr.mxu0 0.0
      %449 = vmatpush1.msra.mxu0 0.0
      %450 = vmatprep.subr.mxu0 0.0
      %451 = vmatpush1.msra.mxu0 0.0
      %452 = vmatprep.subr.mxu0 0.0
      %453 = vmatpush1.msra.mxu0 0.0
      %454 = vmatprep.subr.mxu0 0.0
      %455 = vmatpush1.msra.mxu0 0.0
      %456 = vmatprep.subr.mxu0 0.0
      %457 = vmatpush1.msra.mxu0 0.0
      %458 = vmatprep.mubr.f32.mxu0 0.0
      %459 = vmatmul.mubr.f32.gmra.mrb[0].mxu0 %v257
      %v460 = vpop.f32.mrb[0].mxu0
      %v461 = vadd.f32 %v319, %v460
      %v462 = vpop.f32.mrb[0].mxu0
      %463 = vdwg.mxu0
      %v464 = vld [vmem:[%s3] sm:$0xff]
      %v465 = vld [vmem:[%s3 + $0x8] sm:$0xff]
      %v466 = vld [vmem:[%s3 + $0x10] sm:$0xff]
      %v467 = vld [vmem:[%s3 + $0x18] sm:$0xff]
      %v468 = vld [vmem:[%s3 + $0x20] sm:$0xff]
      %v469 = vld [vmem:[%s3 + $0x28] sm:$0xff]
      %v470 = vld [vmem:[%s3 + $0x30] sm:$0xff]
      %v471 = vld [vmem:[%s3 + $0x38] sm:$0xff]
      %v472 = vld [vmem:[%s3 + $0x40] sm:$0xff]
      %v473 = vld [vmem:[%s3 + $0x48] sm:$0xff]
      %v474 = vld [vmem:[%s3 + $0x50] sm:$0xff]
      %v475 = vld [vmem:[%s3 + $0x58] sm:$0xff]
      %v476 = vld [vmem:[%s3 + $0x60] sm:$0xff]
      %v477 = vld [vmem:[%s3 + $0x68] sm:$0xff]
      %v478 = vld [vmem:[%s3 + $0x70] sm:$0xff]
      %v479 = vld [vmem:[%s3 + $0x78] sm:$0xff]
      %v480 = vld [vmem:[%s3 + $0x80] sm:$0xff]
      %v481 = vld [vmem:[%s3 + $0x88] sm:$0xff]
      %v482 = vld [vmem:[%s3 + $0x90] sm:$0xff]
      %v483 = vld [vmem:[%s3 + $0x98] sm:$0xff]
      %v484 = vld [vmem:[%s3 + $0xa0] sm:$0xff]
      %v485 = vld [vmem:[%s3 + $0xa8] sm:$0xff]
      %v486 = vld [vmem:[%s3 + $0xb0] sm:$0xff]
      %v487 = vld [vmem:[%s3 + $0xb8] sm:$0xff]
      %v488 = vld [vmem:[%s3 + $0xc0] sm:$0xff]
      %v489 = vld [vmem:[%s3 + $0xc8] sm:$0xff]
      %v490 = vld [vmem:[%s3 + $0xd0] sm:$0xff]
      %v491 = vld [vmem:[%s3 + $0xd8] sm:$0xff]
      %v492 = vld [vmem:[%s3 + $0xe0] sm:$0xff]
      %v493 = vld [vmem:[%s3 + $0xe8] sm:$0xff]
      %v494 = vld [vmem:[%s3 + $0xf0] sm:$0xff]
      %v495 = vld [vmem:[%s3 + $0xf8] sm:$0xff]
      %v496 = vld [vmem:[%s3 + $0x100] sm:$0xff]
      %v497 = vld [vmem:[%s3 + $0x108] sm:$0xff]
      %v498 = vld [vmem:[%s3 + $0x110] sm:$0xff]
      %v499 = vld [vmem:[%s3 + $0x118] sm:$0xff]
      %v500 = vld [vmem:[%s3 + $0x120] sm:$0xff]
      %v501 = vld [vmem:[%s3 + $0x128] sm:$0xff]
      %v502 = vld [vmem:[%s3 + $0x130] sm:$0xff]
      %v503 = vld [vmem:[%s3 + $0x138] sm:$0xff]
      %v504 = vld [vmem:[%s3 + $0x140] sm:$0xff]
      %v505 = vld [vmem:[%s3 + $0x148] sm:$0xff]
      %v506 = vld [vmem:[%s3 + $0x150] sm:$0xff]
      %v507 = vld [vmem:[%s3 + $0x158] sm:$0xff]
      %v508 = vld [vmem:[%s3 + $0x160] sm:$0xff]
      %v509 = vld [vmem:[%s3 + $0x168] sm:$0xff]
      %v510 = vld [vmem:[%s3 + $0x170] sm:$0xff]
      %v511 = vld [vmem:[%s3 + $0x178] sm:$0xff]
      %v512 = vld [vmem:[%s5] sm:$0x7]
      %v514 = vlaneseq
      %v515 = vshrl.u32 %v514, 7
      %v516 = vsub.s32 0, %v515
      %v517 = vrot.slane %v512, %v516
      %v518 = vlaneseq
      %v519 = vshrl.u32 %v518, 7
      %v520 = vsub.s32 1, %v519
      %v521 = vrot.slane %v512, %v520
      %v522 = vlaneseq
      %v523 = vshrl.u32 %v522, 7
      %v524 = vsub.s32 2, %v523
      %v525 = vrot.slane %v512, %v524
      %529 = vmatprep.subr.mxu0 %v465
      %530 = vmatpush1.msra.mxu0 %v464
      %531 = vmatprep.subr.mxu0 %v468
      %532 = vmatpush1.msra.mxu0 %v467
      %533 = vmatprep.subr.mxu0 %v471
      %534 = vmatpush1.msra.mxu0 %v470
      %535 = vmatprep.subr.mxu0 %v474
      %536 = vmatpush1.msra.mxu0 %v473
      %537 = vmatprep.subr.mxu0 %v477
      %538 = vmatpush1.msra.mxu0 %v476
      %539 = vmatprep.subr.mxu0 %v480
      %540 = vmatpush1.msra.mxu0 %v479
      %541 = vmatprep.subr.mxu0 %v483
      %542 = vmatpush1.msra.mxu0 %v482
      %543 = vmatprep.subr.mxu0 %v486
      %544 = vmatpush1.msra.mxu0 %v485
      %545 = vmatprep.subr.mxu0 %v489
      %546 = vmatpush1.msra.mxu0 %v488
      %547 = vmatprep.subr.mxu0 %v492
      %548 = vmatpush1.msra.mxu0 %v491
      %549 = vmatprep.subr.mxu0 %v495
      %550 = vmatpush1.msra.mxu0 %v494
      %551 = vmatprep.subr.mxu0 %v498
      %552 = vmatpush1.msra.mxu0 %v497
      %553 = vmatprep.subr.mxu0 %v501
      %554 = vmatpush1.msra.mxu0 %v500
      %555 = vmatprep.subr.mxu0 %v504
      %556 = vmatpush1.msra.mxu0 %v503
      %557 = vmatprep.subr.mxu0 %v507
      %558 = vmatpush1.msra.mxu0 %v506
      %559 = vmatprep.subr.mxu0 %v510
      %560 = vmatpush1.msra.mxu0 %v509
      %561 = vmatprep.subr.mxu0 0.0
      %562 = vmatpush1.msra.mxu0 0.0
      %563 = vmatprep.subr.mxu0 0.0
      %564 = vmatpush1.msra.mxu0 0.0
      %565 = vmatprep.subr.mxu0 0.0
      %566 = vmatpush1.msra.mxu0 0.0
      %567 = vmatprep.subr.mxu0 0.0
      %568 = vmatpush1.msra.mxu0 0.0
      %569 = vmatprep.subr.mxu0 0.0
      %570 = vmatpush1.msra.mxu0 0.0
      %571 = vmatprep.subr.mxu0 0.0
      %572 = vmatpush1.msra.mxu0 0.0
      %573 = vmatprep.subr.mxu0 0.0
      %574 = vmatpush1.msra.mxu0 0.0
      %575 = vmatprep.subr.mxu0 0.0
      %576 = vmatpush1.msra.mxu0 0.0
      %577 = vmatprep.subr.mxu0 0.0
      %578 = vmatpush1.msra.mxu0 0.0
      %579 = vmatprep.subr.mxu0 0.0
      %580 = vmatpush1.msra.mxu0 0.0
      %581 = vmatprep.subr.mxu0 0.0
      %582 = vmatpush1.msra.mxu0 0.0
      %583 = vmatprep.subr.mxu0 0.0
      %584 = vmatpush1.msra.mxu0 0.0
      %585 = vmatprep.subr.mxu0 0.0
      %586 = vmatpush1.msra.mxu0 0.0
      %587 = vmatprep.subr.mxu0 0.0
      %588 = vmatpush1.msra.mxu0 0.0
      %589 = vmatprep.subr.mxu0 0.0
      %590 = vmatpush1.msra.mxu0 0.0
      %591 = vmatprep.subr.mxu0 0.0
      %592 = vmatpush1.msra.mxu0 0.0
      %593 = vmatprep.mubr.f32.mxu0 0.0
      %594 = vmatmul.mubr.f32.gmra.mrb[0].mxu0 %v256
      %v595 = vpop.f32.mrb[0].mxu0
      %v596 = vadd.f32 %v517, %v595
      %v597 = vpop.f32.mrb[0].mxu0
      %v598 = vadd.f32 %v521, %v597
      %599 = vdwg.mxu0
      %600 = vmatprep.subr.mxu0 0.0
      %601 = vmatpush1.msra.mxu0 %v466
      %602 = vmatprep.subr.mxu0 0.0
      %603 = vmatpush1.msra.mxu0 %v469
      %604 = vmatprep.subr.mxu0 0.0
      %605 = vmatpush1.msra.mxu0 %v472
      %606 = vmatprep.subr.mxu0 0.0
      %607 = vmatpush1.msra.mxu0 %v475
      %608 = vmatprep.subr.mxu0 0.0
      %609 = vmatpush1.msra.mxu0 %v478
      %610 = vmatprep.subr.mxu0 0.0
      %611 = vmatpush1.msra.mxu0 %v481
      %612 = vmatprep.subr.mxu0 0.0
      %613 = vmatpush1.msra.mxu0 %v484
      %614 = vmatprep.subr.mxu0 0.0
      %615 = vmatpush1.msra.mxu0 %v487
      %616 = vmatprep.subr.mxu0 0.0
      %617 = vmatpush1.msra.mxu0 %v490
      %618 = vmatprep.subr.mxu0 0.0
      %619 = vmatpush1.msra.mxu0 %v493
      %620 = vmatprep.subr.mxu0 0.0
      %621 = vmatpush1.msra.mxu0 %v496
      %622 = vmatprep.subr.mxu0 0.0
      %623 = vmatpush1.msra.mxu0 %v499
      %624 = vmatprep.subr.mxu0 0.0
      %625 = vmatpush1.msra.mxu0 %v502
      %626 = vmatprep.subr.mxu0 0.0
      %627 = vmatpush1.msra.mxu0 %v505
      %628 = vmatprep.subr.mxu0 0.0
      %629 = vmatpush1.msra.mxu0 %v508
      %630 = vmatprep.subr.mxu0 0.0
      %631 = vmatpush1.msra.mxu0 %v511
      %632 = vmatprep.subr.mxu0 0.0
      %633 = vmatpush1.msra.mxu0 0.0
      %634 = vmatprep.subr.mxu0 0.0
      %635 = vmatpush1.msra.mxu0 0.0
      %636 = vmatprep.subr.mxu0 0.0
      %637 = vmatpush1.msra.mxu0 0.0
      %638 = vmatprep.subr.mxu0 0.0
      %639 = vmatpush1.msra.mxu0 0.0
      %640 = vmatprep.subr.mxu0 0.0
      %641 = vmatpush1.msra.mxu0 0.0
      %642 = vmatprep.subr.mxu0 0.0
      %643 = vmatpush1.msra.mxu0 0.0
      %644 = vmatprep.subr.mxu0 0.0
      %645 = vmatpush1.msra.mxu0 0.0
      %646 = vmatprep.subr.mxu0 0.0
      %647 = vmatpush1.msra.mxu0 0.0
      %648 = vmatprep.subr.mxu0 0.0
      %649 = vmatpush1.msra.mxu0 0.0
      %650 = vmatprep.subr.mxu0 0.0
      %651 = vmatpush1.msra.mxu0 0.0
      %652 = vmatprep.subr.mxu0 0.0
      %653 = vmatpush1.msra.mxu0 0.0
      %654 = vmatprep.subr.mxu0 0.0
      %655 = vmatpush1.msra.mxu0 0.0
      %656 = vmatprep.subr.mxu0 0.0
      %657 = vmatpush1.msra.mxu0 0.0
      %658 = vmatprep.subr.mxu0 0.0
      %659 = vmatpush1.msra.mxu0 0.0
      %660 = vmatprep.subr.mxu0 0.0
      %661 = vmatpush1.msra.mxu0 0.0
      %662 = vmatprep.subr.mxu0 0.0
      %663 = vmatpush1.msra.mxu0 0.0
      %664 = vmatprep.mubr.f32.mxu0 0.0
      %665 = vmatmul.mubr.f32.gmra.mrb[0].mxu0 %v256
      %v666 = vpop.f32.mrb[0].mxu0
      %v667 = vadd.f32 %v525, %v666
      %v668 = vpop.f32.mrb[0].mxu0
      %669 = vdwg.mxu0
      %v670 = vadd.f32 %v390, %v596
      %v671 = vxor.u32 %v670, 2147483648
      %v672 = vmul.f32 %v671, 1.442695
      %v673 = vpow.pop %v672
      %v674 = vadd.f32 %v673, 1.0
      %v675 = vrcp.pop %v674
      %v676 = vmul.f32 1.0, %v675
      %v677 = vadd.f32 %v392, %v598
      %v678 = vxor.u32 %v677, 2147483648
      %v679 = vmul.f32 %v678, 1.442695
      %v680 = vpow.pop %v679
      %v681 = vadd.f32 %v680, 1.0
      %v682 = vrcp.pop %v681
      %v683 = vmul.f32 1.0, %v682
      %v684 = vmul.f32 %v676, %v667
      %v685 = vadd.f32 %v461, %v684
      %v686 = vtanh.pop %v685
      %v687 = vsub.f32 1.0, %v683
      %v688 = vmul.f32 %v687, %v686
      %v689 = vmul.f32 %v683, %v256
      %v690 = vadd.f32 %v688, %v689
      %v691 = vld [vmem:[%s250] sm:$0xff]
      %693 = vset.pattern.permute.xlu0 0
      %694 = vperm.xlu0 %693, %v691
      %v695 = vpop.permute.xlu0 %694
      %v697 = vmul.f32 %v695, %v690
      %v698 = vsub.f32 1.0, %v691
      %700 = vset.pattern.permute.xlu0 0
      %701 = vperm.xlu0 %700, %v698
      %v702 = vpop.permute.xlu0 %701
      %v704 = vmul.f32 %v702, %v256
      %v705 = vadd.f32 %v697, %v704
      %706 = vst [vmem:[%s6] sm:$0xff] %v705
      // Predicated region
      $region49: #{dmn_forward.4} parent=43 // pred_check
        %p707 = pneg %p166
      $region50: #{dmn_forward.4} parent=43 // pred_check_branch
        %709 = sbr.rel (%p707) target = $region52
      $region51: #{dmn_forward.4} parent=43 // pred_region
        _
      $region52: #{dmn_forward.4} parent=43 // pred_fallthru
        _
      // Predicated region
      $region53: #{dmn_forward.4} parent=43 // pred_check
        %p710 = pneg %p166
      $region54: #{dmn_forward.4} parent=43 // pred_check_branch
        %712 = sbr.rel (%p710) target = $region56
      $region55: #{dmn_forward.4} parent=43 // pred_region
        _
      $region56: #{dmn_forward.4} parent=43 // pred_fallthru
        _
    $region44: #{dmn_forward.4} parent=5 // pred_fallthru
      _
    %p713 = scmp.le.s32.totalorder 2, %s12
    // Predicated region
    $region57: #{dmn_forward.4} parent=5 // pred_check
      %p714 = pneg %p713
    $region58: #{dmn_forward.4} parent=5 // pred_check_branch
      %716 = sbr.rel (%p714) target = $region60
    $region59: #{dmn_forward.4} parent=5 // pred_region
      %s717 = ssub.s32 %s12, 2
    $region60: #{dmn_forward.4} parent=5 // pred_fallthru
      _
  $region6: #{dmn_forward.4} parent=0 // loop_footer
    %s16 = sadd.s32 1, %s12
  $region7: #{dmn_forward.4} parent=0 // loop_footer_branch
    %11 = sbr.rel target = $region3
  $region8: #{dmn_forward.4} parent=0 // loop_exit
    _

// kernel: dmn_forward.7
$region0: #{dmn_forward.7}
  #allocation0 [shape = 'u32[]', space=smem, size = 0x4, offset = 0x4, fixed_abs, tag = 'smem constant byte address 0x4 - core index']
  #allocation1 [shape = 'u32[144,128]{1,0:T(1,128)}', space=vmem, size = 0x12000, scoped, tag = 'internal scratch']
  #allocation2 [shape = 'f32[8,128]{1,0:T(8,128)}', space=vmem, size = 0x1000, scoped, tag = 'scratch operand']
  #allocation3 [shape = 'f32[8,128]{1,0:T(8,128)}', space=vmem, size = 0x1000, scoped, tag = 'scratch operand']
  #allocation4 [shape = 'f32[8,384]{1,0:T(8,128)}', space=vmem, size = 0x3000, scoped, tag = 'scratch operand']
  %s0 = inlined_call_operand.vmem [shape: f32[8,128], index: 0, kind: input, shape index: {}]
  %s1 = inlined_call_operand.vmem [shape: f32[128,128], index: 1, kind: input, shape index: {}]
  %s2 = inlined_call_operand.vmem [shape: f32[8,128], index: 2, kind: input, shape index: {}]
  %s3 = inlined_call_operand.vmem [shape: f32[8,128], index: 3, kind: input, shape index: {}]
  %s4 = inlined_call_operand.vmem [shape: f32[128,384], index: 4, kind: input, shape index: {}]
  %s5 = inlined_call_operand.vmem [shape: f32[128,384], index: 5, kind: input, shape index: {}]
  %s6 = inlined_call_operand.vmem [shape: f32[128,384], index: 6, kind: input, shape index: {}]
  %s7 = inlined_call_operand.vmem [shape: f32[1,384], index: 7, kind: input, shape index: {}]
  %s8 = inlined_call_operand.vmem [shape: f32[1,384], index: 8, kind: input, shape index: {}]
  %s9 = inlined_call_operand.vmem [shape: f32[128,128], index: 9, kind: input, shape index: {}]
  %s10 = inlined_call_operand.vmem [shape: f32[1,128], index: 10, kind: input, shape index: {}]
  %s11 = inlined_call_operand.vmem [shape: f32[4,8,128], index: 11, kind: output, shape index: {}]
  %s12 = sld [smem:[#allocation0]]
  $region81: #{dmn_forward.7} parent=0
    _
  %s14 = ssub.s32 1, %s12
  %s15 = scalar_select 0, %s14, %s12
  loop: start=0, step=1, limit=6
  $region2: #{dmn_forward.7} parent=0 // loop_pre_header
    _
  $region3: #{dmn_forward.7} parent=0 // loop_header
    %s17 = sphi 0, %s21
    %p18 = scmp.ge.s32.totalorder %s17, 6
    %s25 = sphi 0, %s25
    %s27 = sphi 0, %s25
    %s28 = sphi 0, %s27
    %s42 = sphi 0, %s28
    %s46 = sphi 0, %s46
    %s48 = sphi 0, %s46
    %s49 = sphi 0, %s48
    %s63 = sphi 0, %s49
    %s67 = sphi 0, %s67
    %s69 = sphi 0, %s67
    %s70 = sphi 0, %s69
    %s84 = sphi 0, %s70
    %s88 = sphi 0, %s88
    %s90 = sphi 0, %s88
    %s91 = sphi 0, %s90
    %s105 = sphi 0, %s91
    %s109 = sphi 0, %s109
    %s111 = sphi 0, %s109
    %s112 = sphi 0, %s111
    %s126 = sphi 0, %s112
    %s130 = sphi 0, %s130
    %s132 = sphi 0, %s130
    %s133 = sphi 0, %s132
    %s147 = sphi 0, %s133
    %s151 = sphi 0, %s151
    %s153 = sphi 0, %s151
    %s154 = sphi 0, %s153
    %s168 = sphi 0, %s154
    %s172 = sphi 0, %s172
    %s174 = sphi 0, %s172
    %s175 = sphi 0, %s174
    %s189 = sphi 0, %s175
    %s193 = sphi 0, %s193
    %s195 = sphi 0, %s193
    %s196 = sphi 0, %s195
    %s210 = sphi 0, %s196
    %s214 = sphi 0, %s214
    %s216 = sphi 0, %s214
    %s217 = sphi 0, %s216
    %s231 = sphi 0, %s217
    %s235 = sphi 0, %s235
    %s237 = sphi 0, %s235
    %s238 = sphi 0, %s237
    %s252 = sphi 0, %s238
    %s258 = sphi 0, %s260
    %s261 = sphi 0, %s258
    %s262 = sphi 0, %s261
    %s278 = sphi 0, %s262
  $region4: #{dmn_forward.7} parent=0 // loop_header_branch
    %20 = sbr.rel (%p18) target = $region8
  $region5: #{dmn_forward.7} parent=0 // loop_body
    %s22 = ssub.s32 %s17, 1
    %s23 = ssub.s32 %s17, 2
    %s24 = sadd.s32 %s17, 1
    %s26 = sadd.s32 %s25, 1
    %p29 = scmp.eq.s32.totalorder %s17, 3
    %p30 = scmp.ne.s32.totalorder %s25, %s27
    %p31 = scmp.eq.s32.totalorder %s17, 0
    %p32 = por %p30, %p31
    %p33 = scmp.ne.s32.totalorder %s25, %s27
    %p34 = scmp.eq.s32.totalorder %s22, 3
    %p35 = por %p33, %p34
    %p36 = scmp.ne.s32.totalorder %s27, %s28
    %p37 = scmp.eq.s32.totalorder %s22, 0
    %p38 = por %p36, %p37
    %p39 = scmp.ne.s32.totalorder %s27, %s28
    %p40 = scmp.eq.s32.totalorder %s23, 3
    %p41 = por %p39, %p40
    %p43 = scmp.ne.s32.totalorder %s28, %s42
    %p44 = scmp.eq.s32.totalorder %s23, 0
    %p45 = por %p43, %p44
    %s47 = sadd.s32 %s46, 1
    %p50 = scmp.eq.s32.totalorder %s17, 3
    %p51 = scmp.ne.s32.totalorder %s46, %s48
    %p52 = scmp.eq.s32.totalorder %s17, 0
    %p53 = por %p51, %p52
    %p54 = scmp.ne.s32.totalorder %s46, %s48
    %p55 = scmp.eq.s32.totalorder %s22, 3
    %p56 = por %p54, %p55
    %p57 = scmp.ne.s32.totalorder %s48, %s49
    %p58 = scmp.eq.s32.totalorder %s22, 0
    %p59 = por %p57, %p58
    %p60 = scmp.ne.s32.totalorder %s48, %s49
    %p61 = scmp.eq.s32.totalorder %s23, 3
    %p62 = por %p60, %p61
    %p64 = scmp.ne.s32.totalorder %s49, %s63
    %p65 = scmp.eq.s32.totalorder %s23, 0
    %p66 = por %p64, %p65
    %s68 = sadd.s32 %s67, 1
    %p71 = scmp.eq.s32.totalorder %s17, 3
    %p72 = scmp.ne.s32.totalorder %s67, %s69
    %p73 = scmp.eq.s32.totalorder %s17, 0
    %p74 = por %p72, %p73
    %p75 = scmp.ne.s32.totalorder %s67, %s69
    %p76 = scmp.eq.s32.totalorder %s22, 3
    %p77 = por %p75, %p76
    %p78 = scmp.ne.s32.totalorder %s69, %s70
    %p79 = scmp.eq.s32.totalorder %s22, 0
    %p80 = por %p78, %p79
    %p81 = scmp.ne.s32.totalorder %s69, %s70
    %p82 = scmp.eq.s32.totalorder %s23, 3
    %p83 = por %p81, %p82
    %p85 = scmp.ne.s32.totalorder %s70, %s84
    %p86 = scmp.eq.s32.totalorder %s23, 0
    %p87 = por %p85, %p86
    %s89 = sadd.s32 %s88, 1
    %p92 = scmp.eq.s32.totalorder %s17, 3
    %p93 = scmp.ne.s32.totalorder %s88, %s90
    %p94 = scmp.eq.s32.totalorder %s17, 0
    %p95 = por %p93, %p94
    %p96 = scmp.ne.s32.totalorder %s88, %s90
    %p97 = scmp.eq.s32.totalorder %s22, 3
    %p98 = por %p96, %p97
    %p99 = scmp.ne.s32.totalorder %s90, %s91
    %p100 = scmp.eq.s32.totalorder %s22, 0
    %p101 = por %p99, %p100
    %p102 = scmp.ne.s32.totalorder %s90, %s91
    %p103 = scmp.eq.s32.totalorder %s23, 3
    %p104 = por %p102, %p103
    %p106 = scmp.ne.s32.totalorder %s91, %s105
    %p107 = scmp.eq.s32.totalorder %s23, 0
    %p108 = por %p106, %p107
    %s110 = sadd.s32 %s109, 1
    %p113 = scmp.eq.s32.totalorder %s17, 3
    %p114 = scmp.ne.s32.totalorder %s109, %s111
    %p115 = scmp.eq.s32.totalorder %s17, 0
    %p116 = por %p114, %p115
    %p117 = scmp.ne.s32.totalorder %s109, %s111
    %p118 = scmp.eq.s32.totalorder %s22, 3
    %p119 = por %p117, %p118
    %p120 = scmp.ne.s32.totalorder %s111, %s112
    %p121 = scmp.eq.s32.totalorder %s22, 0
    %p122 = por %p120, %p121
    %p123 = scmp.ne.s32.totalorder %s111, %s112
    %p124 = scmp.eq.s32.totalorder %s23, 3
    %p125 = por %p123, %p124
    %p127 = scmp.ne.s32.totalorder %s112, %s126
    %p128 = scmp.eq.s32.totalorder %s23, 0
    %p129 = por %p127, %p128
    %s131 = sadd.s32 %s130, 1
    %p134 = scmp.eq.s32.totalorder %s17, 3
    %p135 = scmp.ne.s32.totalorder %s130, %s132
    %p136 = scmp.eq.s32.totalorder %s17, 0
    %p137 = por %p135, %p136
    %p138 = scmp.ne.s32.totalorder %s130, %s132
    %p139 = scmp.eq.s32.totalorder %s22, 3
    %p140 = por %p138, %p139
    %p141 = scmp.ne.s32.totalorder %s132, %s133
    %p142 = scmp.eq.s32.totalorder %s22, 0
    %p143 = por %p141, %p142
    %p144 = scmp.ne.s32.totalorder %s132, %s133
    %p145 = scmp.eq.s32.totalorder %s23, 3
    %p146 = por %p144, %p145
    %p148 = scmp.ne.s32.totalorder %s133, %s147
    %p149 = scmp.eq.s32.totalorder %s23, 0
    %p150 = por %p148, %p149
    %s152 = sadd.s32 %s151, 1
    %p155 = scmp.eq.s32.totalorder %s17, 3
    %p156 = scmp.ne.s32.totalorder %s151, %s153
    %p157 = scmp.eq.s32.totalorder %s17, 0
    %p158 = por %p156, %p157
    %p159 = scmp.ne.s32.totalorder %s151, %s153
    %p160 = scmp.eq.s32.totalorder %s22, 3
    %p161 = por %p159, %p160
    %p162 = scmp.ne.s32.totalorder %s153, %s154
    %p163 = scmp.eq.s32.totalorder %s22, 0
    %p164 = por %p162, %p163
    %p165 = scmp.ne.s32.totalorder %s153, %s154
    %p166 = scmp.eq.s32.totalorder %s23, 3
    %p167 = por %p165, %p166
    %p169 = scmp.ne.s32.totalorder %s154, %s168
    %p170 = scmp.eq.s32.totalorder %s23, 0
    %p171 = por %p169, %p170
    %s173 = sadd.s32 %s172, 1
    %p176 = scmp.eq.s32.totalorder %s17, 3
    %p177 = scmp.ne.s32.totalorder %s172, %s174
    %p178 = scmp.eq.s32.totalorder %s17, 0
    %p179 = por %p177, %p178
    %p180 = scmp.ne.s32.totalorder %s172, %s174
    %p181 = scmp.eq.s32.totalorder %s22, 3
    %p182 = por %p180, %p181
    %p183 = scmp.ne.s32.totalorder %s174, %s175
    %p184 = scmp.eq.s32.totalorder %s22, 0
    %p185 = por %p183, %p184
    %p186 = scmp.ne.s32.totalorder %s174, %s175
    %p187 = scmp.eq.s32.totalorder %s23, 3
    %p188 = por %p186, %p187
    %p190 = scmp.ne.s32.totalorder %s175, %s189
    %p191 = scmp.eq.s32.totalorder %s23, 0
    %p192 = por %p190, %p191
    %s194 = sadd.s32 %s193, 1
    %p197 = scmp.eq.s32.totalorder %s17, 3
    %p198 = scmp.ne.s32.totalorder %s193, %s195
    %p199 = scmp.eq.s32.totalorder %s17, 0
    %p200 = por %p198, %p199
    %p201 = scmp.ne.s32.totalorder %s193, %s195
    %p202 = scmp.eq.s32.totalorder %s22, 3
    %p203 = por %p201, %p202
    %p204 = scmp.ne.s32.totalorder %s195, %s196
    %p205 = scmp.eq.s32.totalorder %s22, 0
    %p206 = por %p204, %p205
    %p207 = scmp.ne.s32.totalorder %s195, %s196
    %p208 = scmp.eq.s32.totalorder %s23, 3
    %p209 = por %p207, %p208
    %p211 = scmp.ne.s32.totalorder %s196, %s210
    %p212 = scmp.eq.s32.totalorder %s23, 0
    %p213 = por %p211, %p212
    %s215 = sadd.s32 %s214, 1
    %p218 = scmp.eq.s32.totalorder %s17, 3
    %p219 = scmp.ne.s32.totalorder %s214, %s216
    %p220 = scmp.eq.s32.totalorder %s17, 0
    %p221 = por %p219, %p220
    %p222 = scmp.ne.s32.totalorder %s214, %s216
    %p223 = scmp.eq.s32.totalorder %s22, 3
    %p224 = por %p222, %p223
    %p225 = scmp.ne.s32.totalorder %s216, %s217
    %p226 = scmp.eq.s32.totalorder %s22, 0
    %p227 = por %p225, %p226
    %p228 = scmp.ne.s32.totalorder %s216, %s217
    %p229 = scmp.eq.s32.totalorder %s23, 3
    %p230 = por %p228, %p229
    %p232 = scmp.ne.s32.totalorder %s217, %s231
    %p233 = scmp.eq.s32.totalorder %s23, 0
    %p234 = por %p232, %p233
    %s236 = sadd.s32 %s235, 1
    %p239 = scmp.eq.s32.totalorder %s17, 3
    %p240 = scmp.ne.s32.totalorder %s235, %s237
    %p241 = scmp.eq.s32.totalorder %s17, 0
    %p242 = por %p240, %p241
    %p243 = scmp.ne.s32.totalorder %s235, %s237
    %p244 = scmp.eq.s32.totalorder %s22, 3
    %p245 = por %p243, %p244
    %p246 = scmp.ne.s32.totalorder %s237, %s238
    %p247 = scmp.eq.s32.totalorder %s22, 0
    %p248 = por %p246, %p247
    %p249 = scmp.ne.s32.totalorder %s237, %s238
    %p250 = scmp.eq.s32.totalorder %s23, 3
    %p251 = por %p249, %p250
    %p253 = scmp.ne.s32.totalorder %s238, %s252
    %p254 = scmp.eq.s32.totalorder %s23, 0
    %p255 = por %p253, %p254
    %s256 = ssub.s32 %s17, %s24
    %p257 = scmp.eq.s32.totalorder %s256, 0
    %s259 = sadd.s32 %s258, 1
    %s260 = scalar_select %p257, %s258, %s259
    %p263 = pneg %p257
    %p264 = scmp.eq.s32.totalorder %s17, 3
    %p265 = por %p263, %p264
    %p266 = scmp.ne.s32.totalorder %s258, %s261
    %p267 = scmp.eq.s32.totalorder %s17, 0
    %p268 = por %p266, %p267
    %p269 = scmp.ne.s32.totalorder %s258, %s261
    %p270 = scmp.eq.s32.totalorder %s22, 3
    %p271 = por %p269, %p270
    %p272 = scmp.ne.s32.totalorder %s261, %s262
    %p273 = scmp.eq.s32.totalorder %s22, 0
    %p274 = por %p272, %p273
    %p275 = scmp.ne.s32.totalorder %s261, %s262
    %p276 = scmp.eq.s32.totalorder %s23, 3
    %p277 = por %p275, %p276
    %p279 = scmp.ne.s32.totalorder %s262, %s278
    %p280 = scmp.eq.s32.totalorder %s23, 0
    %p281 = por %p279, %p280
    %p282 = scmp.le.s32.totalorder 1, %s17
    %p283 = scmp.lt.s32.totalorder %s17, 5
    %p284 = pnand %p282, %p283
    %p285 = pneg %p284
    // Predicated region
    $region9: #{dmn_forward.7} parent=5 // pred_check
      _
    $region10: #{dmn_forward.7} parent=5 // pred_check_branch
      %287 = sbr.rel (%p284) target = $region12
    $region11: #{dmn_forward.7} parent=5 // pred_region
      %s288 = ssub.s32 %s17, 1
      // Predicated region
      $region13: #{dmn_forward.7} parent=11 // pred_check
        %p289 = pneg %p38
      $region14: #{dmn_forward.7} parent=11 // pred_check_branch
        %291 = sbr.rel (%p289) target = $region16
      $region15: #{dmn_forward.7} parent=11 // pred_region
        _
      $region16: #{dmn_forward.7} parent=11 // pred_fallthru
        _
      // Predicated region
      $region17: #{dmn_forward.7} parent=11 // pred_check
        %p292 = pneg %p59
      $region18: #{dmn_forward.7} parent=11 // pred_check_branch
        %294 = sbr.rel (%p292) target = $region20
      $region19: #{dmn_forward.7} parent=11 // pred_region
        _
      $region20: #{dmn_forward.7} parent=11 // pred_fallthru
        _
      // Predicated region
      $region21: #{dmn_forward.7} parent=11 // pred_check
        %p295 = pneg %p80
      $region22: #{dmn_forward.7} parent=11 // pred_check_branch
        %297 = sbr.rel (%p295) target = $region24
      $region23: #{dmn_forward.7} parent=11 // pred_region
        _
      $region24: #{dmn_forward.7} parent=11 // pred_fallthru
        _
      // Predicated region
      $region25: #{dmn_forward.7} parent=11 // pred_check
        %p298 = pneg %p101
      $region26: #{dmn_forward.7} parent=11 // pred_check_branch
        %300 = sbr.rel (%p298) target = $region28
      $region27: #{dmn_forward.7} parent=11 // pred_region
        _
      $region28: #{dmn_forward.7} parent=11 // pred_fallthru
        _
      // Predicated region
      $region29: #{dmn_forward.7} parent=11 // pred_check
        %p301 = pneg %p122
      $region30: #{dmn_forward.7} parent=11 // pred_check_branch
        %303 = sbr.rel (%p301) target = $region32
      $region31: #{dmn_forward.7} parent=11 // pred_region
        _
      $region32: #{dmn_forward.7} parent=11 // pred_fallthru
        _
      // Predicated region
      $region33: #{dmn_forward.7} parent=11 // pred_check
        %p304 = pneg %p143
      $region34: #{dmn_forward.7} parent=11 // pred_check_branch
        %306 = sbr.rel (%p304) target = $region36
      $region35: #{dmn_forward.7} parent=11 // pred_region
        _
      $region36: #{dmn_forward.7} parent=11 // pred_fallthru
        _
      // Predicated region
      $region37: #{dmn_forward.7} parent=11 // pred_check
        %p307 = pneg %p164
      $region38: #{dmn_forward.7} parent=11 // pred_check_branch
        %309 = sbr.rel (%p307) target = $region40
      $region39: #{dmn_forward.7} parent=11 // pred_region
        _
      $region40: #{dmn_forward.7} parent=11 // pred_fallthru
        _
      // Predicated region
      $region41: #{dmn_forward.7} parent=11 // pred_check
        %p310 = pneg %p185
      $region42: #{dmn_forward.7} parent=11 // pred_check_branch
        %312 = sbr.rel (%p310) target = $region44
      $region43: #{dmn_forward.7} parent=11 // pred_region
        _
      $region44: #{dmn_forward.7} parent=11 // pred_fallthru
        _
      // Predicated region
      $region45: #{dmn_forward.7} parent=11 // pred_check
        %p313 = pneg %p206
      $region46: #{dmn_forward.7} parent=11 // pred_check_branch
        %315 = sbr.rel (%p313) target = $region48
      $region47: #{dmn_forward.7} parent=11 // pred_region
        _
      $region48: #{dmn_forward.7} parent=11 // pred_fallthru
        _
      // Predicated region
      $region49: #{dmn_forward.7} parent=11 // pred_check
        %p316 = pneg %p227
      $region50: #{dmn_forward.7} parent=11 // pred_check_branch
        %318 = sbr.rel (%p316) target = $region52
      $region51: #{dmn_forward.7} parent=11 // pred_region
        _
      $region52: #{dmn_forward.7} parent=11 // pred_fallthru
        _
      // Predicated region
      $region53: #{dmn_forward.7} parent=11 // pred_check
        %p319 = pneg %p248
      $region54: #{dmn_forward.7} parent=11 // pred_check_branch
        %321 = sbr.rel (%p319) target = $region56
      $region55: #{dmn_forward.7} parent=11 // pred_region
        _
      $region56: #{dmn_forward.7} parent=11 // pred_fallthru
        _
    $region12: #{dmn_forward.7} parent=5 // pred_fallthru
      _
    %p322 = scmp.lt.s32.totalorder %s17, 4
    // Predicated region
    $region57: #{dmn_forward.7} parent=5 // pred_check
      %p323 = pneg %p322
    $region58: #{dmn_forward.7} parent=5 // pred_check_branch
      %325 = sbr.rel (%p323) target = $region60
    $region59: #{dmn_forward.7} parent=5 // pred_region
      _
    $region60: #{dmn_forward.7} parent=5 // pred_fallthru
      _
    %p326 = scmp.le.s32.totalorder 1, %s17
    %p327 = scmp.lt.s32.totalorder %s17, 5
    %p328 = pnand %p326, %p327
    %p329 = pneg %p328
    // Predicated region
    $region61: #{dmn_forward.7} parent=5 // pred_check
      _
    $region62: #{dmn_forward.7} parent=5 // pred_check_branch
      %331 = sbr.rel (%p328) target = $region64
    $region63: #{dmn_forward.7} parent=5 // pred_region
      %s332 = ssub.s32 %s17, 1
      %p333 = pneg %p38
      %p334 = pneg %p35
      %p335 = pneg %p59
      %p336 = pneg %p56
      %p337 = pneg %p80
      %p338 = pneg %p77
      %p339 = pneg %p101
      %p340 = pneg %p98
      %p341 = pneg %p122
      %p342 = pneg %p119
      %p343 = pneg %p143
      %p344 = pneg %p140
      %p345 = pneg %p164
      %p346 = pneg %p161
      %p347 = pneg %p185
      %p348 = pneg %p182
      %p349 = pneg %p206
      %p350 = pneg %p203
      %p351 = pneg %p227
      %p352 = pneg %p224
      %p353 = pneg %p248
      %p354 = pneg %p245
      %p355 = pneg %p274
      %p356 = pneg %p271
      %p357 = scmp.lt.s32.totalorder %s22, 3
      %s358 = scalar_select %p357, %s22, 3
      %s359 = smul.addr %s358, 8
      %s360 = scalar_lea.vmem %s11, %s359
      %p361 = scmp.lt.s32.totalorder %s22, 3
      %s362 = scalar_select %p361, %s22, 3
      %s363 = smul.addr %s362, 8
      %s364 = scalar_lea.vmem %s11, %s363
      %p365 = scmp.eq.s32.totalorder %s22, 0
      // Predicated region
      $region65: #{dmn_forward.7} parent=63 // pred_check
        %p366 = pneg %p365
      $region66: #{dmn_forward.7} parent=63 // pred_check_branch
        %368 = sbr.rel (%p366) target = $region68
      $region67: #{dmn_forward.7} parent=63 // pred_region
        %v369 = vld [vmem:[%s3] sm:$0xff]
        %370 = vst [vmem:[#allocation2] sm:$0xff] %v369
        %v371 = vld [vmem:[%s2] sm:$0xff]
        %372 = vst [vmem:[#allocation3] sm:$0xff] %v371
        %v373 = vld [vmem:[%s0] sm:$0xff]
        %v374 = vld [vmem:[%s5] sm:$0xff]
        %v375 = vld [vmem:[%s5 + $0x8] sm:$0xff]
        %v376 = vld [vmem:[%s5 + $0x10] sm:$0xff]
        %v377 = vld [vmem:[%s5 + $0x18] sm:$0xff]
        %v378 = vld [vmem:[%s5 + $0x20] sm:$0xff]
        %v379 = vld [vmem:[%s5 + $0x28] sm:$0xff]
        %v380 = vld [vmem:[%s5 + $0x30] sm:$0xff]
        %v381 = vld [vmem:[%s5 + $0x38] sm:$0xff]
        %v382 = vld [vmem:[%s5 + $0x40] sm:$0xff]
        %v383 = vld [vmem:[%s5 + $0x48] sm:$0xff]
        %v384 = vld [vmem:[%s5 + $0x50] sm:$0xff]
        %v385 = vld [vmem:[%s5 + $0x58] sm:$0xff]
        %v386 = vld [vmem:[%s5 + $0x60] sm:$0xff]
        %v387 = vld [vmem:[%s5 + $0x68] sm:$0xff]
        %v388 = vld [vmem:[%s5 + $0x70] sm:$0xff]
        %v389 = vld [vmem:[%s5 + $0x78] sm:$0xff]
        %v390 = vld [vmem:[%s5 + $0x80] sm:$0xff]
        %v391 = vld [vmem:[%s5 + $0x88] sm:$0xff]
        %v392 = vld [vmem:[%s5 + $0x90] sm:$0xff]
        %v393 = vld [vmem:[%s5 + $0x98] sm:$0xff]
        %v394 = vld [vmem:[%s5 + $0xa0] sm:$0xff]
        %v395 = vld [vmem:[%s5 + $0xa8] sm:$0xff]
        %v396 = vld [vmem:[%s5 + $0xb0] sm:$0xff]
        %v397 = vld [vmem:[%s5 + $0xb8] sm:$0xff]
        %v398 = vld [vmem:[%s5 + $0xc0] sm:$0xff]
        %v399 = vld [vmem:[%s5 + $0xc8] sm:$0xff]
        %v400 = vld [vmem:[%s5 + $0xd0] sm:$0xff]
        %v401 = vld [vmem:[%s5 + $0xd8] sm:$0xff]
        %v402 = vld [vmem:[%s5 + $0xe0] sm:$0xff]
        %v403 = vld [vmem:[%s5 + $0xe8] sm:$0xff]
        %v404 = vld [vmem:[%s5 + $0xf0] sm:$0xff]
        %v405 = vld [vmem:[%s5 + $0xf8] sm:$0xff]
        %v406 = vld [vmem:[%s5 + $0x100] sm:$0xff]
        %v407 = vld [vmem:[%s5 + $0x108] sm:$0xff]
        %v408 = vld [vmem:[%s5 + $0x110] sm:$0xff]
        %v409 = vld [vmem:[%s5 + $0x118] sm:$0xff]
        %v410 = vld [vmem:[%s5 + $0x120] sm:$0xff]
        %v411 = vld [vmem:[%s5 + $0x128] sm:$0xff]
        %v412 = vld [vmem:[%s5 + $0x130] sm:$0xff]
        %v413 = vld [vmem:[%s5 + $0x138] sm:$0xff]
        %v414 = vld [vmem:[%s5 + $0x140] sm:$0xff]
        %v415 = vld [vmem:[%s5 + $0x148] sm:$0xff]
        %v416 = vld [vmem:[%s5 + $0x150] sm:$0xff]
        %v417 = vld [vmem:[%s5 + $0x158] sm:$0xff]
        %v418 = vld [vmem:[%s5 + $0x160] sm:$0xff]
        %v419 = vld [vmem:[%s5 + $0x168] sm:$0xff]
        %v420 = vld [vmem:[%s5 + $0x170] sm:$0xff]
        %v421 = vld [vmem:[%s5 + $0x178] sm:$0xff]
        %v422 = vld [vmem:[%s7] sm:$0x7]
        %v424 = vlaneseq
        %v425 = vshrl.u32 %v424, 7
        %v426 = vsub.s32 0, %v425
        %v427 = vrot.slane %v422, %v426
        %v428 = vlaneseq
        %v429 = vshrl.u32 %v428, 7
        %v430 = vsub.s32 1, %v429
        %v431 = vrot.slane %v422, %v430
        %v432 = vlaneseq
        %v433 = vshrl.u32 %v432, 7
        %v434 = vsub.s32 2, %v433
        %v435 = vrot.slane %v422, %v434
        %439 = vmatprep.subr.mxu0 %v375
        %440 = vmatpush1.msra.mxu0 %v374
        %441 = vmatprep.subr.mxu0 %v378
        %442 = vmatpush1.msra.mxu0 %v377
        %443 = vmatprep.subr.mxu0 %v381
        %444 = vmatpush1.msra.mxu0 %v380
        %445 = vmatprep.subr.mxu0 %v384
        %446 = vmatpush1.msra.mxu0 %v383
        %447 = vmatprep.subr.mxu0 %v387
        %448 = vmatpush1.msra.mxu0 %v386
        %449 = vmatprep.subr.mxu0 %v390
        %450 = vmatpush1.msra.mxu0 %v389
        %451 = vmatprep.subr.mxu0 %v393
        %452 = vmatpush1.msra.mxu0 %v392
        %453 = vmatprep.subr.mxu0 %v396
        %454 = vmatpush1.msra.mxu0 %v395
        %455 = vmatprep.subr.mxu0 %v399
        %456 = vmatpush1.msra.mxu0 %v398
        %457 = vmatprep.subr.mxu0 %v402
        %458 = vmatpush1.msra.mxu0 %v401
        %459 = vmatprep.subr.mxu0 %v405
        %460 = vmatpush1.msra.mxu0 %v404
        %461 = vmatprep.subr.mxu0 %v408
        %462 = vmatpush1.msra.mxu0 %v407
        %463 = vmatprep.subr.mxu0 %v411
        %464 = vmatpush1.msra.mxu0 %v410
        %465 = vmatprep.subr.mxu0 %v414
        %466 = vmatpush1.msra.mxu0 %v413
        %467 = vmatprep.subr.mxu0 %v417
        %468 = vmatpush1.msra.mxu0 %v416
        %469 = vmatprep.subr.mxu0 %v420
        %470 = vmatpush1.msra.mxu0 %v419
        %471 = vmatprep.subr.mxu0 0.0
        %472 = vmatpush1.msra.mxu0 0.0
        %473 = vmatprep.subr.mxu0 0.0
        %474 = vmatpush1.msra.mxu0 0.0
        %475 = vmatprep.subr.mxu0 0.0
        %476 = vmatpush1.msra.mxu0 0.0
        %477 = vmatprep.subr.mxu0 0.0
        %478 = vmatpush1.msra.mxu0 0.0
        %479 = vmatprep.subr.mxu0 0.0
        %480 = vmatpush1.msra.mxu0 0.0
        %481 = vmatprep.subr.mxu0 0.0
        %482 = vmatpush1.msra.mxu0 0.0
        %483 = vmatprep.subr.mxu0 0.0
        %484 = vmatpush1.msra.mxu0 0.0
        %485 = vmatprep.subr.mxu0 0.0
        %486 = vmatpush1.msra.mxu0 0.0
        %487 = vmatprep.subr.mxu0 0.0
        %488 = vmatpush1.msra.mxu0 0.0
        %489 = vmatprep.subr.mxu0 0.0
        %490 = vmatpush1.msra.mxu0 0.0
        %491 = vmatprep.subr.mxu0 0.0
        %492 = vmatpush1.msra.mxu0 0.0
        %493 = vmatprep.subr.mxu0 0.0
        %494 = vmatpush1.msra.mxu0 0.0
        %495 = vmatprep.subr.mxu0 0.0
        %496 = vmatpush1.msra.mxu0 0.0
        %497 = vmatprep.subr.mxu0 0.0
        %498 = vmatpush1.msra.mxu0 0.0
        %499 = vmatprep.subr.mxu0 0.0
        %500 = vmatpush1.msra.mxu0 0.0
        %501 = vmatprep.subr.mxu0 0.0
        %502 = vmatpush1.msra.mxu0 0.0
        %503 = vmatprep.mubr.f32.mxu0 0.0
        %504 = vmatmul.mubr.f32.gmra.mrb[0].mxu0 %v373
        %v505 = vpop.f32.mrb[0].mxu0
        %v506 = vadd.f32 %v427, %v505
        %v507 = vpop.f32.mrb[0].mxu0
        %v508 = vadd.f32 %v431, %v507
        %509 = vdwg.mxu0
        %510 = vmatprep.subr.mxu0 0.0
        %511 = vmatpush1.msra.mxu0 %v376
        %512 = vmatprep.subr.mxu0 0.0
        %513 = vmatpush1.msra.mxu0 %v379
        %514 = vmatprep.subr.mxu0 0.0
        %515 = vmatpush1.msra.mxu0 %v382
        %516 = vmatprep.subr.mxu0 0.0
        %517 = vmatpush1.msra.mxu0 %v385
        %518 = vmatprep.subr.mxu0 0.0
        %519 = vmatpush1.msra.mxu0 %v388
        %520 = vmatprep.subr.mxu0 0.0
        %521 = vmatpush1.msra.mxu0 %v391
        %522 = vmatprep.subr.mxu0 0.0
        %523 = vmatpush1.msra.mxu0 %v394
        %524 = vmatprep.subr.mxu0 0.0
        %525 = vmatpush1.msra.mxu0 %v397
        %526 = vmatprep.subr.mxu0 0.0
        %527 = vmatpush1.msra.mxu0 %v400
        %528 = vmatprep.subr.mxu0 0.0
        %529 = vmatpush1.msra.mxu0 %v403
        %530 = vmatprep.subr.mxu0 0.0
        %531 = vmatpush1.msra.mxu0 %v406
        %532 = vmatprep.subr.mxu0 0.0
        %533 = vmatpush1.msra.mxu0 %v409
        %534 = vmatprep.subr.mxu0 0.0
        %535 = vmatpush1.msra.mxu0 %v412
        %536 = vmatprep.subr.mxu0 0.0
        %537 = vmatpush1.msra.mxu0 %v415
        %538 = vmatprep.subr.mxu0 0.0
        %539 = vmatpush1.msra.mxu0 %v418
        %540 = vmatprep.subr.mxu0 0.0
        %541 = vmatpush1.msra.mxu0 %v421
        %542 = vmatprep.subr.mxu0 0.0
        %543 = vmatpush1.msra.mxu0 0.0
        %544 = vmatprep.subr.mxu0 0.0
        %545 = vmatpush1.msra.mxu0 0.0
        %546 = vmatprep.subr.mxu0 0.0
        %547 = vmatpush1.msra.mxu0 0.0
        %548 = vmatprep.subr.mxu0 0.0
        %549 = vmatpush1.msra.mxu0 0.0
        %550 = vmatprep.subr.mxu0 0.0
        %551 = vmatpush1.msra.mxu0 0.0
        %552 = vmatprep.subr.mxu0 0.0
        %553 = vmatpush1.msra.mxu0 0.0
        %554 = vmatprep.subr.mxu0 0.0
        %555 = vmatpush1.msra.mxu0 0.0
        %556 = vmatprep.subr.mxu0 0.0
        %557 = vmatpush1.msra.mxu0 0.0
        %558 = vmatprep.subr.mxu0 0.0
        %559 = vmatpush1.msra.mxu0 0.0
        %560 = vmatprep.subr.mxu0 0.0
        %561 = vmatpush1.msra.mxu0 0.0
        %562 = vmatprep.subr.mxu0 0.0
        %563 = vmatpush1.msra.mxu0 0.0
        %564 = vmatprep.subr.mxu0 0.0
        %565 = vmatpush1.msra.mxu0 0.0
        %566 = vmatprep.subr.mxu0 0.0
        %567 = vmatpush1.msra.mxu0 0.0
        %568 = vmatprep.subr.mxu0 0.0
        %569 = vmatpush1.msra.mxu0 0.0
        %570 = vmatprep.subr.mxu0 0.0
        %571 = vmatpush1.msra.mxu0 0.0
        %572 = vmatprep.subr.mxu0 0.0
        %573 = vmatpush1.msra.mxu0 0.0
        %574 = vmatprep.mubr.f32.mxu0 0.0
        %575 = vmatmul.mubr.f32.gmra.mrb[0].mxu0 %v373
        %v576 = vpop.f32.mrb[0].mxu0
        %v577 = vadd.f32 %v435, %v576
        %v578 = vpop.f32.mrb[0].mxu0
        %579 = vdwg.mxu0
        %580 = vst [vmem:[#allocation4] sm:$0xff] %v506
        %581 = vst [vmem:[#allocation4 + $0x8] sm:$0xff] %v508
        %582 = vst [vmem:[#allocation4 + $0x10] sm:$0xff] %v577
      $region68: #{dmn_forward.7} parent=63 // pred_fallthru
        _
      %v583 = vld [vmem:[#allocation2] sm:$0xff]
      %v584 = vld [vmem:[#allocation3] sm:$0xff]
      %v585 = vld [vmem:[%s4] sm:$0xff]
      %v586 = vld [vmem:[%s4 + $0x8] sm:$0xff]
      %v587 = vld [vmem:[%s4 + $0x10] sm:$0xff]
      %v588 = vld [vmem:[%s4 + $0x18] sm:$0xff]
      %v589 = vld [vmem:[%s4 + $0x20] sm:$0xff]
      %v590 = vld [vmem:[%s4 + $0x28] sm:$0xff]
      %v591 = vld [vmem:[%s4 + $0x30] sm:$0xff]
      %v592 = vld [vmem:[%s4 + $0x38] sm:$0xff]
      %v593 = vld [vmem:[%s4 + $0x40] sm:$0xff]
      %v594 = vld [vmem:[%s4 + $0x48] sm:$0xff]
      %v595 = vld [vmem:[%s4 + $0x50] sm:$0xff]
      %v596 = vld [vmem:[%s4 + $0x58] sm:$0xff]
      %v597 = vld [vmem:[%s4 + $0x60] sm:$0xff]
      %v598 = vld [vmem:[%s4 + $0x68] sm:$0xff]
      %v599 = vld [vmem:[%s4 + $0x70] sm:$0xff]
      %v600 = vld [vmem:[%s4 + $0x78] sm:$0xff]
      %v601 = vld [vmem:[%s4 + $0x80] sm:$0xff]
      %v602 = vld [vmem:[%s4 + $0x88] sm:$0xff]
      %v603 = vld [vmem:[%s4 + $0x90] sm:$0xff]
      %v604 = vld [vmem:[%s4 + $0x98] sm:$0xff]
      %v605 = vld [vmem:[%s4 + $0xa0] sm:$0xff]
      %v606 = vld [vmem:[%s4 + $0xa8] sm:$0xff]
      %v607 = vld [vmem:[%s4 + $0xb0] sm:$0xff]
      %v608 = vld [vmem:[%s4 + $0xb8] sm:$0xff]
      %v609 = vld [vmem:[%s4 + $0xc0] sm:$0xff]
      %v610 = vld [vmem:[%s4 + $0xc8] sm:$0xff]
      %v611 = vld [vmem:[%s4 + $0xd0] sm:$0xff]
      %v612 = vld [vmem:[%s4 + $0xd8] sm:$0xff]
      %v613 = vld [vmem:[%s4 + $0xe0] sm:$0xff]
      %v614 = vld [vmem:[%s4 + $0xe8] sm:$0xff]
      %v615 = vld [vmem:[%s4 + $0xf0] sm:$0xff]
      %v616 = vld [vmem:[%s4 + $0xf8] sm:$0xff]
      %v617 = vld [vmem:[%s4 + $0x100] sm:$0xff]
      %v618 = vld [vmem:[%s4 + $0x108] sm:$0xff]
      %v619 = vld [vmem:[%s4 + $0x110] sm:$0xff]
      %v620 = vld [vmem:[%s4 + $0x118] sm:$0xff]
      %v621 = vld [vmem:[%s4 + $0x120] sm:$0xff]
      %v622 = vld [vmem:[%s4 + $0x128] sm:$0xff]
      %v623 = vld [vmem:[%s4 + $0x130] sm:$0xff]
      %v624 = vld [vmem:[%s4 + $0x138] sm:$0xff]
      %v625 = vld [vmem:[%s4 + $0x140] sm:$0xff]
      %v626 = vld [vmem:[%s4 + $0x148] sm:$0xff]
      %v627 = vld [vmem:[%s4 + $0x150] sm:$0xff]
      %v628 = vld [vmem:[%s4 + $0x158] sm:$0xff]
      %v629 = vld [vmem:[%s4 + $0x160] sm:$0xff]
      %v630 = vld [vmem:[%s4 + $0x168] sm:$0xff]
      %v631 = vld [vmem:[%s4 + $0x170] sm:$0xff]
      %v632 = vld [vmem:[%s4 + $0x178] sm:$0xff]
      %v633 = vld [vmem:[#allocation4] sm:$0xff]
      %v634 = vld [vmem:[#allocation4 + $0x8] sm:$0xff]
      %v635 = vld [vmem:[#allocation4 + $0x10] sm:$0xff]
      %636 = vmatprep.subr.mxu0 %v586
      %637 = vmatpush1.msra.mxu0 %v585
      %638 = vmatprep.subr.mxu0 %v589
      %639 = vmatpush1.msra.mxu0 %v588
      %640 = vmatprep.subr.mxu0 %v592
      %641 = vmatpush1.msra.mxu0 %v591
      %642 = vmatprep.subr.mxu0 %v595
      %643 = vmatpush1.msra.mxu0 %v594
      %644 = vmatprep.subr.mxu0 %v598
      %645 = vmatpush1.msra.mxu0 %v597
      %646 = vmatprep.subr.mxu0 %v601
      %647 = vmatpush1.msra.mxu0 %v600
      %648 = vmatprep.subr.mxu0 %v604
      %649 = vmatpush1.msra.mxu0 %v603
      %650 = vmatprep.subr.mxu0 %v607
      %651 = vmatpush1.msra.mxu0 %v606
      %652 = vmatprep.subr.mxu0 %v610
      %653 = vmatpush1.msra.mxu0 %v609
      %654 = vmatprep.subr.mxu0 %v613
      %655 = vmatpush1.msra.mxu0 %v612
      %656 = vmatprep.subr.mxu0 %v616
      %657 = vmatpush1.msra.mxu0 %v615
      %658 = vmatprep.subr.mxu0 %v619
      %659 = vmatpush1.msra.mxu0 %v618
      %660 = vmatprep.subr.mxu0 %v622
      %661 = vmatpush1.msra.mxu0 %v621
      %662 = vmatprep.subr.mxu0 %v625
      %663 = vmatpush1.msra.mxu0 %v624
      %664 = vmatprep.subr.mxu0 %v628
      %665 = vmatpush1.msra.mxu0 %v627
      %666 = vmatprep.subr.mxu0 %v631
      %667 = vmatpush1.msra.mxu0 %v630
      %668 = vmatprep.subr.mxu0 0.0
      %669 = vmatpush1.msra.mxu0 0.0
      %670 = vmatprep.subr.mxu0 0.0
      %671 = vmatpush1.msra.mxu0 0.0
      %672 = vmatprep.subr.mxu0 0.0
      %673 = vmatpush1.msra.mxu0 0.0
      %674 = vmatprep.subr.mxu0 0.0
      %675 = vmatpush1.msra.mxu0 0.0
      %676 = vmatprep.subr.mxu0 0.0
      %677 = vmatpush1.msra.mxu0 0.0
      %678 = vmatprep.subr.mxu0 0.0
      %679 = vmatpush1.msra.mxu0 0.0
      %680 = vmatprep.subr.mxu0 0.0
      %681 = vmatpush1.msra.mxu0 0.0
      %682 = vmatprep.subr.mxu0 0.0
      %683 = vmatpush1.msra.mxu0 0.0
      %684 = vmatprep.subr.mxu0 0.0
      %685 = vmatpush1.msra.mxu0 0.0
      %686 = vmatprep.subr.mxu0 0.0
      %687 = vmatpush1.msra.mxu0 0.0
      %688 = vmatprep.subr.mxu0 0.0
      %689 = vmatpush1.msra.mxu0 0.0
      %690 = vmatprep.subr.mxu0 0.0
      %691 = vmatpush1.msra.mxu0 0.0
      %692 = vmatprep.subr.mxu0 0.0
      %693 = vmatpush1.msra.mxu0 0.0
      %694 = vmatprep.subr.mxu0 0.0
      %695 = vmatpush1.msra.mxu0 0.0
      %696 = vmatprep.subr.mxu0 0.0
      %697 = vmatpush1.msra.mxu0 0.0
      %698 = vmatprep.subr.mxu0 0.0
      %699 = vmatpush1.msra.mxu0 0.0
      %700 = vmatprep.mubr.f32.mxu0 0.0
      %701 = vmatmul.mubr.f32.gmra.mrb[0].mxu0 %v584
      %v702 = vpop.f32.mrb[0].mxu0
      %v703 = vadd.f32 %v633, %v702
      %v704 = vpop.f32.mrb[0].mxu0
      %v705 = vadd.f32 %v634, %v704
      %706 = vdwg.mxu0
      %707 = vmatprep.subr.mxu0 0.0
      %708 = vmatpush1.msra.mxu0 %v587
      %709 = vmatprep.subr.mxu0 0.0
      %710 = vmatpush1.msra.mxu0 %v590
      %711 = vmatprep.subr.mxu0 0.0
      %712 = vmatpush1.msra.mxu0 %v593
      %713 = vmatprep.subr.mxu0 0.0
      %714 = vmatpush1.msra.mxu0 %v596
      %715 = vmatprep.subr.mxu0 0.0
      %716 = vmatpush1.msra.mxu0 %v599
      %717 = vmatprep.subr.mxu0 0.0
      %718 = vmatpush1.msra.mxu0 %v602
      %719 = vmatprep.subr.mxu0 0.0
      %720 = vmatpush1.msra.mxu0 %v605
      %721 = vmatprep.subr.mxu0 0.0
      %722 = vmatpush1.msra.mxu0 %v608
      %723 = vmatprep.subr.mxu0 0.0
      %724 = vmatpush1.msra.mxu0 %v611
      %725 = vmatprep.subr.mxu0 0.0
      %726 = vmatpush1.msra.mxu0 %v614
      %727 = vmatprep.subr.mxu0 0.0
      %728 = vmatpush1.msra.mxu0 %v617
      %729 = vmatprep.subr.mxu0 0.0
      %730 = vmatpush1.msra.mxu0 %v620
      %731 = vmatprep.subr.mxu0 0.0
      %732 = vmatpush1.msra.mxu0 %v623
      %733 = vmatprep.subr.mxu0 0.0
      %734 = vmatpush1.msra.mxu0 %v626
      %735 = vmatprep.subr.mxu0 0.0
      %736 = vmatpush1.msra.mxu0 %v629
      %737 = vmatprep.subr.mxu0 0.0
      %738 = vmatpush1.msra.mxu0 %v632
      %739 = vmatprep.subr.mxu0 0.0
      %740 = vmatpush1.msra.mxu0 0.0
      %741 = vmatprep.subr.mxu0 0.0
      %742 = vmatpush1.msra.mxu0 0.0
      %743 = vmatprep.subr.mxu0 0.0
      %744 = vmatpush1.msra.mxu0 0.0
      %745 = vmatprep.subr.mxu0 0.0
      %746 = vmatpush1.msra.mxu0 0.0
      %747 = vmatprep.subr.mxu0 0.0
      %748 = vmatpush1.msra.mxu0 0.0
      %749 = vmatprep.subr.mxu0 0.0
      %750 = vmatpush1.msra.mxu0 0.0
      %751 = vmatprep.subr.mxu0 0.0
      %752 = vmatpush1.msra.mxu0 0.0
      %753 = vmatprep.subr.mxu0 0.0
      %754 = vmatpush1.msra.mxu0 0.0
      %755 = vmatprep.subr.mxu0 0.0
      %756 = vmatpush1.msra.mxu0 0.0
      %757 = vmatprep.subr.mxu0 0.0
      %758 = vmatpush1.msra.mxu0 0.0
      %759 = vmatprep.subr.mxu0 0.0
      %760 = vmatpush1.msra.mxu0 0.0
      %761 = vmatprep.subr.mxu0 0.0
      %762 = vmatpush1.msra.mxu0 0.0
      %763 = vmatprep.subr.mxu0 0.0
      %764 = vmatpush1.msra.mxu0 0.0
      %765 = vmatprep.subr.mxu0 0.0
      %766 = vmatpush1.msra.mxu0 0.0
      %767 = vmatprep.subr.mxu0 0.0
      %768 = vmatpush1.msra.mxu0 0.0
      %769 = vmatprep.subr.mxu0 0.0
      %770 = vmatpush1.msra.mxu0 0.0
      %771 = vmatprep.mubr.f32.mxu0 0.0
      %772 = vmatmul.mubr.f32.gmra.mrb[0].mxu0 %v584
      %v773 = vpop.f32.mrb[0].mxu0
      %v774 = vadd.f32 %v635, %v773
      %v775 = vpop.f32.mrb[0].mxu0
      %776 = vdwg.mxu0
      %v777 = vld [vmem:[%s6] sm:$0xff]
      %v778 = vld [vmem:[%s6 + $0x8] sm:$0xff]
      %v779 = vld [vmem:[%s6 + $0x10] sm:$0xff]
      %v780 = vld [vmem:[%s6 + $0x18] sm:$0xff]
      %v781 = vld [vmem:[%s6 + $0x20] sm:$0xff]
      %v782 = vld [vmem:[%s6 + $0x28] sm:$0xff]
      %v783 = vld [vmem:[%s6 + $0x30] sm:$0xff]
      %v784 = vld [vmem:[%s6 + $0x38] sm:$0xff]
      %v785 = vld [vmem:[%s6 + $0x40] sm:$0xff]
      %v786 = vld [vmem:[%s6 + $0x48] sm:$0xff]
      %v787 = vld [vmem:[%s6 + $0x50] sm:$0xff]
      %v788 = vld [vmem:[%s6 + $0x58] sm:$0xff]
      %v789 = vld [vmem:[%s6 + $0x60] sm:$0xff]
      %v790 = vld [vmem:[%s6 + $0x68] sm:$0xff]
      %v791 = vld [vmem:[%s6 + $0x70] sm:$0xff]
      %v792 = vld [vmem:[%s6 + $0x78] sm:$0xff]
      %v793 = vld [vmem:[%s6 + $0x80] sm:$0xff]
      %v794 = vld [vmem:[%s6 + $0x88] sm:$0xff]
      %v795 = vld [vmem:[%s6 + $0x90] sm:$0xff]
      %v796 = vld [vmem:[%s6 + $0x98] sm:$0xff]
      %v797 = vld [vmem:[%s6 + $0xa0] sm:$0xff]
      %v798 = vld [vmem:[%s6 + $0xa8] sm:$0xff]
      %v799 = vld [vmem:[%s6 + $0xb0] sm:$0xff]
      %v800 = vld [vmem:[%s6 + $0xb8] sm:$0xff]
      %v801 = vld [vmem:[%s6 + $0xc0] sm:$0xff]
      %v802 = vld [vmem:[%s6 + $0xc8] sm:$0xff]
      %v803 = vld [vmem:[%s6 + $0xd0] sm:$0xff]
      %v804 = vld [vmem:[%s6 + $0xd8] sm:$0xff]
      %v805 = vld [vmem:[%s6 + $0xe0] sm:$0xff]
      %v806 = vld [vmem:[%s6 + $0xe8] sm:$0xff]
      %v807 = vld [vmem:[%s6 + $0xf0] sm:$0xff]
      %v808 = vld [vmem:[%s6 + $0xf8] sm:$0xff]
      %v809 = vld [vmem:[%s6 + $0x100] sm:$0xff]
      %v810 = vld [vmem:[%s6 + $0x108] sm:$0xff]
      %v811 = vld [vmem:[%s6 + $0x110] sm:$0xff]
      %v812 = vld [vmem:[%s6 + $0x118] sm:$0xff]
      %v813 = vld [vmem:[%s6 + $0x120] sm:$0xff]
      %v814 = vld [vmem:[%s6 + $0x128] sm:$0xff]
      %v815 = vld [vmem:[%s6 + $0x130] sm:$0xff]
      %v816 = vld [vmem:[%s6 + $0x138] sm:$0xff]
      %v817 = vld [vmem:[%s6 + $0x140] sm:$0xff]
      %v818 = vld [vmem:[%s6 + $0x148] sm:$0xff]
      %v819 = vld [vmem:[%s6 + $0x150] sm:$0xff]
      %v820 = vld [vmem:[%s6 + $0x158] sm:$0xff]
      %v821 = vld [vmem:[%s6 + $0x160] sm:$0xff]
      %v822 = vld [vmem:[%s6 + $0x168] sm:$0xff]
      %v823 = vld [vmem:[%s6 + $0x170] sm:$0xff]
      %v824 = vld [vmem:[%s6 + $0x178] sm:$0xff]
      %v825 = vld [vmem:[%s8] sm:$0x7]
      %v827 = vlaneseq
      %v828 = vshrl.u32 %v827, 7
      %v829 = vsub.s32 0, %v828
      %v830 = vrot.slane %v825, %v829
      %v831 = vlaneseq
      %v832 = vshrl.u32 %v831, 7
      %v833 = vsub.s32 1, %v832
      %v834 = vrot.slane %v825, %v833
      %v835 = vlaneseq
      %v836 = vshrl.u32 %v835, 7
      %v837 = vsub.s32 2, %v836
      %v838 = vrot.slane %v825, %v837
      %842 = vmatprep.subr.mxu0 %v778
      %843 = vmatpush1.msra.mxu0 %v777
      %844 = vmatprep.subr.mxu0 %v781
      %845 = vmatpush1.msra.mxu0 %v780
      %846 = vmatprep.subr.mxu0 %v784
      %847 = vmatpush1.msra.mxu0 %v783
      %848 = vmatprep.subr.mxu0 %v787
      %849 = vmatpush1.msra.mxu0 %v786
      %850 = vmatprep.subr.mxu0 %v790
      %851 = vmatpush1.msra.mxu0 %v789
      %852 = vmatprep.subr.mxu0 %v793
      %853 = vmatpush1.msra.mxu0 %v792
      %854 = vmatprep.subr.mxu0 %v796
      %855 = vmatpush1.msra.mxu0 %v795
      %856 = vmatprep.subr.mxu0 %v799
      %857 = vmatpush1.msra.mxu0 %v798
      %858 = vmatprep.subr.mxu0 %v802
      %859 = vmatpush1.msra.mxu0 %v801
      %860 = vmatprep.subr.mxu0 %v805
      %861 = vmatpush1.msra.mxu0 %v804
      %862 = vmatprep.subr.mxu0 %v808
      %863 = vmatpush1.msra.mxu0 %v807
      %864 = vmatprep.subr.mxu0 %v811
      %865 = vmatpush1.msra.mxu0 %v810
      %866 = vmatprep.subr.mxu0 %v814
      %867 = vmatpush1.msra.mxu0 %v813
      %868 = vmatprep.subr.mxu0 %v817
      %869 = vmatpush1.msra.mxu0 %v816
      %870 = vmatprep.subr.mxu0 %v820
      %871 = vmatpush1.msra.mxu0 %v819
      %872 = vmatprep.subr.mxu0 %v823
      %873 = vmatpush1.msra.mxu0 %v822
      %874 = vmatprep.subr.mxu0 0.0
      %875 = vmatpush1.msra.mxu0 0.0
      %876 = vmatprep.subr.mxu0 0.0
      %877 = vmatpush1.msra.mxu0 0.0
      %878 = vmatprep.subr.mxu0 0.0
      %879 = vmatpush1.msra.mxu0 0.0
      %880 = vmatprep.subr.mxu0 0.0
      %881 = vmatpush1.msra.mxu0 0.0
      %882 = vmatprep.subr.mxu0 0.0
      %883 = vmatpush1.msra.mxu0 0.0
      %884 = vmatprep.subr.mxu0 0.0
      %885 = vmatpush1.msra.mxu0 0.0
      %886 = vmatprep.subr.mxu0 0.0
      %887 = vmatpush1.msra.mxu0 0.0
      %888 = vmatprep.subr.mxu0 0.0
      %889 = vmatpush1.msra.mxu0 0.0
      %890 = vmatprep.subr.mxu0 0.0
      %891 = vmatpush1.msra.mxu0 0.0
      %892 = vmatprep.subr.mxu0 0.0
      %893 = vmatpush1.msra.mxu0 0.0
      %894 = vmatprep.subr.mxu0 0.0
      %895 = vmatpush1.msra.mxu0 0.0
      %896 = vmatprep.subr.mxu0 0.0
      %897 = vmatpush1.msra.mxu0 0.0
      %898 = vmatprep.subr.mxu0 0.0
      %899 = vmatpush1.msra.mxu0 0.0
      %900 = vmatprep.subr.mxu0 0.0
      %901 = vmatpush1.msra.mxu0 0.0
      %902 = vmatprep.subr.mxu0 0.0
      %903 = vmatpush1.msra.mxu0 0.0
      %904 = vmatprep.subr.mxu0 0.0
      %905 = vmatpush1.msra.mxu0 0.0
      %906 = vmatprep.mubr.f32.mxu0 0.0
      %907 = vmatmul.mubr.f32.gmra.mrb[0].mxu0 %v583
      %v908 = vpop.f32.mrb[0].mxu0
      %v909 = vadd.f32 %v830, %v908
      %v910 = vpop.f32.mrb[0].mxu0
      %v911 = vadd.f32 %v834, %v910
      %912 = vdwg.mxu0
      %913 = vmatprep.subr.mxu0 0.0
      %914 = vmatpush1.msra.mxu0 %v779
      %915 = vmatprep.subr.mxu0 0.0
      %916 = vmatpush1.msra.mxu0 %v782
      %917 = vmatprep.subr.mxu0 0.0
      %918 = vmatpush1.msra.mxu0 %v785
      %919 = vmatprep.subr.mxu0 0.0
      %920 = vmatpush1.msra.mxu0 %v788
      %921 = vmatprep.subr.mxu0 0.0
      %922 = vmatpush1.msra.mxu0 %v791
      %923 = vmatprep.subr.mxu0 0.0
      %924 = vmatpush1.msra.mxu0 %v794
      %925 = vmatprep.subr.mxu0 0.0
      %926 = vmatpush1.msra.mxu0 %v797
      %927 = vmatprep.subr.mxu0 0.0
      %928 = vmatpush1.msra.mxu0 %v800
      %929 = vmatprep.subr.mxu0 0.0
      %930 = vmatpush1.msra.mxu0 %v803
      %931 = vmatprep.subr.mxu0 0.0
      %932 = vmatpush1.msra.mxu0 %v806
      %933 = vmatprep.subr.mxu0 0.0
      %934 = vmatpush1.msra.mxu0 %v809
      %935 = vmatprep.subr.mxu0 0.0
      %936 = vmatpush1.msra.mxu0 %v812
      %937 = vmatprep.subr.mxu0 0.0
      %938 = vmatpush1.msra.mxu0 %v815
      %939 = vmatprep.subr.mxu0 0.0
      %940 = vmatpush1.msra.mxu0 %v818
      %941 = vmatprep.subr.mxu0 0.0
      %942 = vmatpush1.msra.mxu0 %v821
      %943 = vmatprep.subr.mxu0 0.0
      %944 = vmatpush1.msra.mxu0 %v824
      %945 = vmatprep.subr.mxu0 0.0
      %946 = vmatpush1.msra.mxu0 0.0
      %947 = vmatprep.subr.mxu0 0.0
      %948 = vmatpush1.msra.mxu0 0.0
      %949 = vmatprep.subr.mxu0 0.0
      %950 = vmatpush1.msra.mxu0 0.0
      %951 = vmatprep.subr.mxu0 0.0
      %952 = vmatpush1.msra.mxu0 0.0
      %953 = vmatprep.subr.mxu0 0.0
      %954 = vmatpush1.msra.mxu0 0.0
      %955 = vmatprep.subr.mxu0 0.0
      %956 = vmatpush1.msra.mxu0 0.0
      %957 = vmatprep.subr.mxu0 0.0
      %958 = vmatpush1.msra.mxu0 0.0
      %959 = vmatprep.subr.mxu0 0.0
      %960 = vmatpush1.msra.mxu0 0.0
      %961 = vmatprep.subr.mxu0 0.0
      %962 = vmatpush1.msra.mxu0 0.0
      %963 = vmatprep.subr.mxu0 0.0
      %964 = vmatpush1.msra.mxu0 0.0
      %965 = vmatprep.subr.mxu0 0.0
      %966 = vmatpush1.msra.mxu0 0.0
      %967 = vmatprep.subr.mxu0 0.0
      %968 = vmatpush1.msra.mxu0 0.0
      %969 = vmatprep.subr.mxu0 0.0
      %970 = vmatpush1.msra.mxu0 0.0
      %971 = vmatprep.subr.mxu0 0.0
      %972 = vmatpush1.msra.mxu0 0.0
      %973 = vmatprep.subr.mxu0 0.0
      %974 = vmatpush1.msra.mxu0 0.0
      %975 = vmatprep.subr.mxu0 0.0
      %976 = vmatpush1.msra.mxu0 0.0
      %977 = vmatprep.mubr.f32.mxu0 0.0
      %978 = vmatmul.mubr.f32.gmra.mrb[0].mxu0 %v583
      %v979 = vpop.f32.mrb[0].mxu0
      %v980 = vadd.f32 %v838, %v979
      %v981 = vpop.f32.mrb[0].mxu0
      %982 = vdwg.mxu0
      %v983 = vadd.f32 %v703, %v909
      %v984 = vxor.u32 %v983, 2147483648
      %v985 = vmul.f32 %v984, 1.442695
      %v986 = vpow.pop %v985
      %v987 = vadd.f32 %v986, 1.0
      %v988 = vrcp.pop %v987
      %v989 = vmul.f32 1.0, %v988
      %v990 = vadd.f32 %v705, %v911
      %v991 = vxor.u32 %v990, 2147483648
      %v992 = vmul.f32 %v991, 1.442695
      %v993 = vpow.pop %v992
      %v994 = vadd.f32 %v993, 1.0
      %v995 = vrcp.pop %v994
      %v996 = vmul.f32 1.0, %v995
      %v997 = vmul.f32 %v989, %v980
      %v998 = vadd.f32 %v774, %v997
      %v999 = vtanh.pop %v998
      %v1000 = vsub.f32 1.0, %v996
      %v1001 = vmul.f32 %v1000, %v999
      %v1002 = vmul.f32 %v996, %v583
      %v1003 = vadd.f32 %v1001, %v1002
      %1004 = vst [vmem:[#allocation2] sm:$0xff] %v1003
      %v1005 = vld [vmem:[%s9] sm:$0xff]
      %v1006 = vld [vmem:[%s9 + $0x8] sm:$0xff]
      %v1007 = vld [vmem:[%s9 + $0x10] sm:$0xff]
      %v1008 = vld [vmem:[%s9 + $0x18] sm:$0xff]
      %v1009 = vld [vmem:[%s9 + $0x20] sm:$0xff]
      %v1010 = vld [vmem:[%s9 + $0x28] sm:$0xff]
      %v1011 = vld [vmem:[%s9 + $0x30] sm:$0xff]
      %v1012 = vld [vmem:[%s9 + $0x38] sm:$0xff]
      %v1013 = vld [vmem:[%s9 + $0x40] sm:$0xff]
      %v1014 = vld [vmem:[%s9 + $0x48] sm:$0xff]
      %v1015 = vld [vmem:[%s9 + $0x50] sm:$0xff]
      %v1016 = vld [vmem:[%s9 + $0x58] sm:$0xff]
      %v1017 = vld [vmem:[%s9 + $0x60] sm:$0xff]
      %v1018 = vld [vmem:[%s9 + $0x68] sm:$0xff]
      %v1019 = vld [vmem:[%s9 + $0x70] sm:$0xff]
      %v1020 = vld [vmem:[%s9 + $0x78] sm:$0xff]
      %v1021 = vld [vmem:[%s10] sm:$0x1]
      %v1023 = vlaneseq
      %v1024 = vshrl.u32 %v1023, 7
      %v1025 = vsub.s32 0, %v1024
      %v1026 = vrot.slane %v1021, %v1025
      %1028 = vmatprep.subr.mxu0 0.0
      %1029 = vmatpush1.msra.mxu0 %v1005
      %1030 = vmatprep.subr.mxu0 0.0
      %1031 = vmatpush1.msra.mxu0 %v1006
      %1032 = vmatprep.subr.mxu0 0.0
      %1033 = vmatpush1.msra.mxu0 %v1007
      %1034 = vmatprep.subr.mxu0 0.0
      %1035 = vmatpush1.msra.mxu0 %v1008
      %1036 = vmatprep.subr.mxu0 0.0
      %1037 = vmatpush1.msra.mxu0 %v1009
      %1038 = vmatprep.subr.mxu0 0.0
      %1039 = vmatpush1.msra.mxu0 %v1010
      %1040 = vmatprep.subr.mxu0 0.0
      %1041 = vmatpush1.msra.mxu0 %v1011
      %1042 = vmatprep.subr.mxu0 0.0
      %1043 = vmatpush1.msra.mxu0 %v1012
      %1044 = vmatprep.subr.mxu0 0.0
      %1045 = vmatpush1.msra.mxu0 %v1013
      %1046 = vmatprep.subr.mxu0 0.0
      %1047 = vmatpush1.msra.mxu0 %v1014
      %1048 = vmatprep.subr.mxu0 0.0
      %1049 = vmatpush1.msra.mxu0 %v1015
      %1050 = vmatprep.subr.mxu0 0.0
      %1051 = vmatpush1.msra.mxu0 %v1016
      %1052 = vmatprep.subr.mxu0 0.0
      %1053 = vmatpush1.msra.mxu0 %v1017
      %1054 = vmatprep.subr.mxu0 0.0
      %1055 = vmatpush1.msra.mxu0 %v1018
      %1056 = vmatprep.subr.mxu0 0.0
      %1057 = vmatpush1.msra.mxu0 %v1019
      %1058 = vmatprep.subr.mxu0 0.0
      %1059 = vmatpush1.msra.mxu0 %v1020
      %1060 = vmatprep.subr.mxu0 0.0
      %1061 = vmatpush1.msra.mxu0 0.0
      %1062 = vmatprep.subr.mxu0 0.0
      %1063 = vmatpush1.msra.mxu0 0.0
      %1064 = vmatprep.subr.mxu0 0.0
      %1065 = vmatpush1.msra.mxu0 0.0
      %1066 = vmatprep.subr.mxu0 0.0
      %1067 = vmatpush1.msra.mxu0 0.0
      %1068 = vmatprep.subr.mxu0 0.0
      %1069 = vmatpush1.msra.mxu0 0.0
      %1070 = vmatprep.subr.mxu0 0.0
      %1071 = vmatpush1.msra.mxu0 0.0
      %1072 = vmatprep.subr.mxu0 0.0
      %1073 = vmatpush1.msra.mxu0 0.0
      %1074 = vmatprep.subr.mxu0 0.0
      %1075 = vmatpush1.msra.mxu0 0.0
      %1076 = vmatprep.subr.mxu0 0.0
      %1077 = vmatpush1.msra.mxu0 0.0
      %1078 = vmatprep.subr.mxu0 0.0
      %1079 = vmatpush1.msra.mxu0 0.0
      %1080 = vmatprep.subr.mxu0 0.0
      %1081 = vmatpush1.msra.mxu0 0.0
      %1082 = vmatprep.subr.mxu0 0.0
      %1083 = vmatpush1.msra.mxu0 0.0
      %1084 = vmatprep.subr.mxu0 0.0
      %1085 = vmatpush1.msra.mxu0 0.0
      %1086 = vmatprep.subr.mxu0 0.0
      %1087 = vmatpush1.msra.mxu0 0.0
      %1088 = vmatprep.subr.mxu0 0.0
      %1089 = vmatpush1.msra.mxu0 0.0
      %1090 = vmatprep.subr.mxu0 0.0
      %1091 = vmatpush1.msra.mxu0 0.0
      %1092 = vmatprep.mubr.f32.mxu0 0.0
      %1093 = vmatmul.mubr.f32.gmra.mrb[0].mxu0 %v1003
      %v1094 = vpop.f32.mrb[0].mxu0
      %v1095 = vadd.f32 %v1026, %v1094
      %v1096 = vpop.f32.mrb[0].mxu0
      %1097 = vdwg.mxu0
      %1098 = vmax.xlane.f32.xlu0 %v1095
      %v1099 = vpop.xlane.xlu0 %1098
      %v1100 = vsub.f32 %v1095, %v1099
      %v1101 = vmul.f32 %v1100, 1.442695
      %v1102 = vpow.pop %v1101
      %1103 = vadd.xlane.f32.xlu0 %v1102
      %v1104 = vpop.xlane.xlu0 %1103
      %v1105 = vlog2.pop %v1104
      %v1106 = vmul.f32 %v1105, 0.6931472
      %v1107 = vsub.f32 %v1100, %v1106
      %1108 = vst [vmem:[%s364] sm:$0xff] %v1107
      %v1109 = vlaneseq
      %v1110 = vand.u32 %v1109, 127
      %1111 = vmax.xlane.f32.xlu0 %v1107
      %v1112 = vpop.xlane.xlu0 %1111
      %vm1113 = vcmp.eq.f32.partialorder %v1107, %v1112
      %v1114 = vsel %vm1113, %v1110, 128
      %v1115 = vand.u32 %v1114, 65535
      %v1116 = vshra.s32 %v1114, 16
      %v1117 = vcvt.s32.f32 %v1115
      %v1118 = vcvt.s32.f32 %v1116
      %1119 = vmin.xlane.f32.xlu0 %v1118
      %v1120 = vpop.xlane.xlu0 %1119
      %vm1121 = vcmp.eq.f32.partialorder %v1118, %v1120
      %v1122 = vsel %vm1121, %v1117, inf
      %1123 = vmin.xlane.f32.xlu0 %v1122
      %v1124 = vpop.xlane.xlu0 %1123
      %v1125 = vcvt.f32.s32 %v1124
      %v1126 = vcvt.f32.s32 %v1120
      %v1127 = vshll.u32 %v1126, 16
      %v1128 = vadd.s32 %v1127, %v1125
      %vm1129 = vcmp.eq.s32.totalorder %v1110, %v1128
      %v1130 = vsel %vm1129, 1, 0
      %v1131 = vcvt.s32.f32 %v1130
      %v1132 = vld [vmem:[%s1] sm:$0xff]
      %v1133 = vld [vmem:[%s1 + $0x8] sm:$0xff]
      %v1134 = vld [vmem:[%s1 + $0x10] sm:$0xff]
      %v1135 = vld [vmem:[%s1 + $0x18] sm:$0xff]
      %v1136 = vld [vmem:[%s1 + $0x20] sm:$0xff]
      %v1137 = vld [vmem:[%s1 + $0x28] sm:$0xff]
      %v1138 = vld [vmem:[%s1 + $0x30] sm:$0xff]
      %v1139 = vld [vmem:[%s1 + $0x38] sm:$0xff]
      %v1140 = vld [vmem:[%s1 + $0x40] sm:$0xff]
      %v1141 = vld [vmem:[%s1 + $0x48] sm:$0xff]
      %v1142 = vld [vmem:[%s1 + $0x50] sm:$0xff]
      %v1143 = vld [vmem:[%s1 + $0x58] sm:$0xff]
      %v1144 = vld [vmem:[%s1 + $0x60] sm:$0xff]
      %v1145 = vld [vmem:[%s1 + $0x68] sm:$0xff]
      %v1146 = vld [vmem:[%s1 + $0x70] sm:$0xff]
      %v1147 = vld [vmem:[%s1 + $0x78] sm:$0xff]
      %1148 = vmatprep.subr.mxu0 0.0
      %1149 = vmatpush1.msra.mxu0 %v1132
      %1150 = vmatprep.subr.mxu0 0.0
      %1151 = vmatpush1.msra.mxu0 %v1133
      %1152 = vmatprep.subr.mxu0 0.0
      %1153 = vmatpush1.msra.mxu0 %v1134
      %1154 = vmatprep.subr.mxu0 0.0
      %1155 = vmatpush1.msra.mxu0 %v1135
      %1156 = vmatprep.subr.mxu0 0.0
      %1157 = vmatpush1.msra.mxu0 %v1136
      %1158 = vmatprep.subr.mxu0 0.0
      %1159 = vmatpush1.msra.mxu0 %v1137
      %1160 = vmatprep.subr.mxu0 0.0
      %1161 = vmatpush1.msra.mxu0 %v1138
      %1162 = vmatprep.subr.mxu0 0.0
      %1163 = vmatpush1.msra.mxu0 %v1139
      %1164 = vmatprep.subr.mxu0 0.0
      %1165 = vmatpush1.msra.mxu0 %v1140
      %1166 = vmatprep.subr.mxu0 0.0
      %1167 = vmatpush1.msra.mxu0 %v1141
      %1168 = vmatprep.subr.mxu0 0.0
      %1169 = vmatpush1.msra.mxu0 %v1142
      %1170 = vmatprep.subr.mxu0 0.0
      %1171 = vmatpush1.msra.mxu0 %v1143
      %1172 = vmatprep.subr.mxu0 0.0
      %1173 = vmatpush1.msra.mxu0 %v1144
      %1174 = vmatprep.subr.mxu0 0.0
      %1175 = vmatpush1.msra.mxu0 %v1145
      %1176 = vmatprep.subr.mxu0 0.0
      %1177 = vmatpush1.msra.mxu0 %v1146
      %1178 = vmatprep.subr.mxu0 0.0
      %1179 = vmatpush1.msra.mxu0 %v1147
      %1180 = vmatprep.subr.mxu0 0.0
      %1181 = vmatpush1.msra.mxu0 0.0
      %1182 = vmatprep.subr.mxu0 0.0
      %1183 = vmatpush1.msra.mxu0 0.0
      %1184 = vmatprep.subr.mxu0 0.0
      %1185 = vmatpush1.msra.mxu0 0.0
      %1186 = vmatprep.subr.mxu0 0.0
      %1187 = vmatpush1.msra.mxu0 0.0
      %1188 = vmatprep.subr.mxu0 0.0
      %1189 = vmatpush1.msra.mxu0 0.0
      %1190 = vmatprep.subr.mxu0 0.0
      %1191 = vmatpush1.msra.mxu0 0.0
      %1192 = vmatprep.subr.mxu0 0.0
      %1193 = vmatpush1.msra.mxu0 0.0
      %1194 = vmatprep.subr.mxu0 0.0
      %1195 = vmatpush1.msra.mxu0 0.0
      %1196 = vmatprep.subr.mxu0 0.0
      %1197 = vmatpush1.msra.mxu0 0.0
      %1198 = vmatprep.subr.mxu0 0.0
      %1199 = vmatpush1.msra.mxu0 0.0
      %1200 = vmatprep.subr.mxu0 0.0
      %1201 = vmatpush1.msra.mxu0 0.0
      %1202 = vmatprep.subr.mxu0 0.0
      %1203 = vmatpush1.msra.mxu0 0.0
      %1204 = vmatprep.subr.mxu0 0.0
      %1205 = vmatpush1.msra.mxu0 0.0
      %1206 = vmatprep.subr.mxu0 0.0
      %1207 = vmatpush1.msra.mxu0 0.0
      %1208 = vmatprep.subr.mxu0 0.0
      %1209 = vmatpush1.msra.mxu0 0.0
      %1210 = vmatprep.subr.mxu0 0.0
      %1211 = vmatpush1.msra.mxu0 0.0
      %1212 = vmatprep.mubr.f32.mxu0 0.0
      %1213 = vmatmul.mubr.f32.gmra.mrb[0].mxu0 %v1131
      %v1214 = vpop.f32.mrb[0].mxu0
      %v1215 = vadd.f32 0.0, %v1214
      %v1216 = vpop.f32.mrb[0].mxu0
      %1217 = vdwg.mxu0
      %1218 = vst [vmem:[#allocation3] sm:$0xff] %v1215
      %p1219 = scmp.lt.s32.totalorder %s22, 3
      %s1220 = scalar_select %p1219, %s22, 3
      %s1221 = smul.addr %s1220, 8
      %s1222 = scalar_lea.vmem %s11, %s1221
      // Predicated region
      $region69: #{dmn_forward.7} parent=63 // pred_check
        %p1223 = pneg %p271
      $region70: #{dmn_forward.7} parent=63 // pred_check_branch
        %1225 = sbr.rel (%p1223) target = $region72
      $region71: #{dmn_forward.7} parent=63 // pred_region
        _
      $region72: #{dmn_forward.7} parent=63 // pred_fallthru
        _
    $region64: #{dmn_forward.7} parent=5 // pred_fallthru
      _
    %p1226 = scmp.le.s32.totalorder 2, %s17
    // Predicated region
    $region73: #{dmn_forward.7} parent=5 // pred_check
      %p1227 = pneg %p1226
    $region74: #{dmn_forward.7} parent=5 // pred_check_branch
      %1229 = sbr.rel (%p1227) target = $region76
    $region75: #{dmn_forward.7} parent=5 // pred_region
      %s1230 = ssub.s32 %s17, 2
      // Predicated region
      $region77: #{dmn_forward.7} parent=75 // pred_check
        %p1231 = pneg %p277
      $region78: #{dmn_forward.7} parent=75 // pred_check_branch
        %1233 = sbr.rel (%p1231) target = $region80
      $region79: #{dmn_forward.7} parent=75 // pred_region
        %p1234 = scmp.lt.s32.totalorder %s23, 3
        %s1235 = scalar_select %p1234, %s23, 3
        %s1236 = smul.addr %s1235, 8
        %s1237 = scalar_lea.vmem %s11, %s1236
      $region80: #{dmn_forward.7} parent=75 // pred_fallthru
        _
    $region76: #{dmn_forward.7} parent=5 // pred_fallthru
      _
  $region6: #{dmn_forward.7} parent=0 // loop_footer
    %s21 = sadd.s32 1, %s17
  $region7: #{dmn_forward.7} parent=0 // loop_footer_branch
    %16 = sbr.rel target = $region3
  $region8: #{dmn_forward.7} parent=0 // loop_exit
    _

// kernel: dmn_forward.6
$region0: #{dmn_forward.6}
  #allocation0 [shape = 'u32[]', space=smem, size = 0x4, offset = 0x4, fixed_abs, tag = 'smem constant byte address 0x4 - core index']
  #allocation1 [shape = 'u32[144,128]{1,0:T(1,128)}', space=vmem, size = 0x12000, scoped, tag = 'internal scratch']
  #allocation2 [shape = 'f32[8,128]{1,0:T(8,128)}', space=vmem, size = 0x1000, scoped, tag = 'scratch operand']
  %s0 = inlined_call_operand.vmem [shape: f32[3,8,128], index: 0, kind: input, shape index: {}]
  %s1 = inlined_call_operand.vmem [shape: f32[8,128], index: 1, kind: input, shape index: {}]
  %s2 = inlined_call_operand.vmem [shape: f32[512,128], index: 2, kind: input, shape index: {}]
  %s3 = inlined_call_operand.vmem [shape: f32[1,128], index: 3, kind: input, shape index: {}]
  %s4 = inlined_call_operand.vmem [shape: f32[1,128], index: 4, kind: input, shape index: {}]
  %s5 = inlined_call_operand.vmem [shape: f32[1,128], index: 5, kind: input, shape index: {}]
  %s6 = inlined_call_operand.vmem [shape: f32[128,384], index: 6, kind: input, shape index: {}]
  %s7 = inlined_call_operand.vmem [shape: f32[128,384], index: 7, kind: input, shape index: {}]
  %s8 = inlined_call_operand.vmem [shape: f32[1,384], index: 8, kind: input, shape index: {}]
  %s9 = inlined_call_operand.vmem [shape: f32[1,384], index: 9, kind: input, shape index: {}]
  %s10 = inlined_call_operand.vmem [shape: f32[128,384], index: 10, kind: input, shape index: {}]
  %s11 = inlined_call_operand.vmem [shape: f32[128,384], index: 11, kind: input, shape index: {}]
  %s12 = inlined_call_operand.vmem [shape: f32[1,384], index: 12, kind: input, shape index: {}]
  %s13 = inlined_call_operand.vmem [shape: f32[1,384], index: 13, kind: input, shape index: {}]
  %s14 = inlined_call_operand.vmem [shape: f32[8,128], index: 14, kind: output, shape index: {}]
  %s15 = sld [smem:[#allocation0]]
  $region101: #{dmn_forward.6} parent=0
    _
  %s17 = ssub.s32 1, %s15
  %s18 = scalar_select 0, %s17, %s15
  loop: start=0, step=1, limit=8
  $region2: #{dmn_forward.6} parent=0 // loop_pre_header
    _
  $region3: #{dmn_forward.6} parent=0 // loop_header
    %s20 = sphi 0, %s24
    %p21 = scmp.ge.s32.totalorder %s20, 8
    %s27 = sphi 0, %s39
    %s28 = sphi 0, %s35
    %s29 = sphi 0, %s27
    %s30 = sphi 0, %s28
    %s31 = sphi 0, %s29
    %s32 = sphi 0, %s30
    %s42 = sphi 0, %s44
    %s45 = sphi 0, %s42
    %s46 = sphi 0, %s45
    %s62 = sphi 0, %s46
    %s66 = sphi 0, %s66
    %s68 = sphi 0, %s66
    %s69 = sphi 0, %s68
    %s83 = sphi 0, %s69
    %s87 = sphi 0, %s87
    %s89 = sphi 0, %s87
    %s90 = sphi 0, %s89
    %s104 = sphi 0, %s90
    %s108 = sphi 0, %s108
    %s110 = sphi 0, %s108
    %s111 = sphi 0, %s110
    %s125 = sphi 0, %s111
    %s129 = sphi 0, %s129
    %s131 = sphi 0, %s129
    %s132 = sphi 0, %s131
    %s146 = sphi 0, %s132
    %s150 = sphi 0, %s150
    %s152 = sphi 0, %s150
    %s153 = sphi 0, %s152
    %s167 = sphi 0, %s153
    %s171 = sphi 0, %s171
    %s173 = sphi 0, %s171
    %s174 = sphi 0, %s173
    %s188 = sphi 0, %s174
    %s192 = sphi 0, %s192
    %s194 = sphi 0, %s192
    %s195 = sphi 0, %s194
    %s209 = sphi 0, %s195
    %s213 = sphi 0, %s213
    %s215 = sphi 0, %s213
    %s216 = sphi 0, %s215
    %s230 = sphi 0, %s216
    %s234 = sphi 0, %s234
    %s236 = sphi 0, %s234
    %s237 = sphi 0, %s236
    %s251 = sphi 0, %s237
    %s255 = sphi 0, %s255
    %s257 = sphi 0, %s255
    %s258 = sphi 0, %s257
    %s272 = sphi 0, %s258
    %s276 = sphi 0, %s276
    %s278 = sphi 0, %s276
    %s279 = sphi 0, %s278
    %s293 = sphi 0, %s279
    %s297 = sphi 0, %s297
    %s299 = sphi 0, %s297
    %s300 = sphi 0, %s299
    %s314 = sphi 0, %s300
    %s318 = sphi 0, %s318
    %s320 = sphi 0, %s318
    %s321 = sphi 0, %s320
    %s335 = sphi 0, %s321
    %s339 = sphi 0, %s339
    %s341 = sphi 0, %s339
    %s342 = sphi 0, %s341
    %s356 = sphi 0, %s342
  $region4: #{dmn_forward.6} parent=0 // loop_header_branch
    %23 = sbr.rel (%p21) target = $region8
  $region5: #{dmn_forward.6} parent=0 // loop_body
    %s25 = ssub.s32 %s20, 1
    %s26 = ssub.s32 %s20, 2
    %s33 = sadd.s32 1, %s28
    %p34 = scmp.ge.s32.totalorder %s33, 3
    %s35 = scalar_select %p34, 0, %s33
    %s36 = sadd.s32 1, %s27
    %s37 = scalar_select %p34, %s36, %s27
    %p38 = scmp.ge.s32.totalorder %s37, 2
    %s39 = scalar_select %p38, 0, %s37
    %s40 = ssub.s32 %s28, %s35
    %p41 = scmp.eq.s32.totalorder %s40, 0
    %s43 = sadd.s32 %s42, 1
    %s44 = scalar_select %p41, %s42, %s43
    %p47 = pneg %p41
    %p48 = scmp.eq.s32.totalorder %s20, 5
    %p49 = por %p47, %p48
    %p50 = scmp.ne.s32.totalorder %s42, %s45
    %p51 = scmp.eq.s32.totalorder %s20, 0
    %p52 = por %p50, %p51
    %p53 = scmp.ne.s32.totalorder %s42, %s45
    %p54 = scmp.eq.s32.totalorder %s25, 5
    %p55 = por %p53, %p54
    %p56 = scmp.ne.s32.totalorder %s45, %s46
    %p57 = scmp.eq.s32.totalorder %s25, 0
    %p58 = por %p56, %p57
    %p59 = scmp.ne.s32.totalorder %s45, %s46
    %p60 = scmp.eq.s32.totalorder %s26, 5
    %p61 = por %p59, %p60
    %p63 = scmp.ne.s32.totalorder %s46, %s62
    %p64 = scmp.eq.s32.totalorder %s26, 0
    %p65 = por %p63, %p64
    %s67 = sadd.s32 %s66, 1
    %p70 = scmp.eq.s32.totalorder %s20, 5
    %p71 = scmp.ne.s32.totalorder %s66, %s68
    %p72 = scmp.eq.s32.totalorder %s20, 0
    %p73 = por %p71, %p72
    %p74 = scmp.ne.s32.totalorder %s66, %s68
    %p75 = scmp.eq.s32.totalorder %s25, 5
    %p76 = por %p74, %p75
    %p77 = scmp.ne.s32.totalorder %s68, %s69
    %p78 = scmp.eq.s32.totalorder %s25, 0
    %p79 = por %p77, %p78
    %p80 = scmp.ne.s32.totalorder %s68, %s69
    %p81 = scmp.eq.s32.totalorder %s26, 5
    %p82 = por %p80, %p81
    %p84 = scmp.ne.s32.totalorder %s69, %s83
    %p85 = scmp.eq.s32.totalorder %s26, 0
    %p86 = por %p84, %p85
    %s88 = sadd.s32 %s87, 1
    %p91 = scmp.eq.s32.totalorder %s20, 5
    %p92 = scmp.ne.s32.totalorder %s87, %s89
    %p93 = scmp.eq.s32.totalorder %s20, 0
    %p94 = por %p92, %p93
    %p95 = scmp.ne.s32.totalorder %s87, %s89
    %p96 = scmp.eq.s32.totalorder %s25, 5
    %p97 = por %p95, %p96
    %p98 = scmp.ne.s32.totalorder %s89, %s90
    %p99 = scmp.eq.s32.totalorder %s25, 0
    %p100 = por %p98, %p99
    %p101 = scmp.ne.s32.totalorder %s89, %s90
    %p102 = scmp.eq.s32.totalorder %s26, 5
    %p103 = por %p101, %p102
    %p105 = scmp.ne.s32.totalorder %s90, %s104
    %p106 = scmp.eq.s32.totalorder %s26, 0
    %p107 = por %p105, %p106
    %s109 = sadd.s32 %s108, 1
    %p112 = scmp.eq.s32.totalorder %s20, 5
    %p113 = scmp.ne.s32.totalorder %s108, %s110
    %p114 = scmp.eq.s32.totalorder %s20, 0
    %p115 = por %p113, %p114
    %p116 = scmp.ne.s32.totalorder %s108, %s110
    %p117 = scmp.eq.s32.totalorder %s25, 5
    %p118 = por %p116, %p117
    %p119 = scmp.ne.s32.totalorder %s110, %s111
    %p120 = scmp.eq.s32.totalorder %s25, 0
    %p121 = por %p119, %p120
    %p122 = scmp.ne.s32.totalorder %s110, %s111
    %p123 = scmp.eq.s32.totalorder %s26, 5
    %p124 = por %p122, %p123
    %p126 = scmp.ne.s32.totalorder %s111, %s125
    %p127 = scmp.eq.s32.totalorder %s26, 0
    %p128 = por %p126, %p127
    %s130 = sadd.s32 %s129, 1
    %p133 = scmp.eq.s32.totalorder %s20, 5
    %p134 = scmp.ne.s32.totalorder %s129, %s131
    %p135 = scmp.eq.s32.totalorder %s20, 0
    %p136 = por %p134, %p135
    %p137 = scmp.ne.s32.totalorder %s129, %s131
    %p138 = scmp.eq.s32.totalorder %s25, 5
    %p139 = por %p137, %p138
    %p140 = scmp.ne.s32.totalorder %s131, %s132
    %p141 = scmp.eq.s32.totalorder %s25, 0
    %p142 = por %p140, %p141
    %p143 = scmp.ne.s32.totalorder %s131, %s132
    %p144 = scmp.eq.s32.totalorder %s26, 5
    %p145 = por %p143, %p144
    %p147 = scmp.ne.s32.totalorder %s132, %s146
    %p148 = scmp.eq.s32.totalorder %s26, 0
    %p149 = por %p147, %p148
    %s151 = sadd.s32 %s150, 1
    %p154 = scmp.eq.s32.totalorder %s20, 5
    %p155 = scmp.ne.s32.totalorder %s150, %s152
    %p156 = scmp.eq.s32.totalorder %s20, 0
    %p157 = por %p155, %p156
    %p158 = scmp.ne.s32.totalorder %s150, %s152
    %p159 = scmp.eq.s32.totalorder %s25, 5
    %p160 = por %p158, %p159
    %p161 = scmp.ne.s32.totalorder %s152, %s153
    %p162 = scmp.eq.s32.totalorder %s25, 0
    %p163 = por %p161, %p162
    %p164 = scmp.ne.s32.totalorder %s152, %s153
    %p165 = scmp.eq.s32.totalorder %s26, 5
    %p166 = por %p164, %p165
    %p168 = scmp.ne.s32.totalorder %s153, %s167
    %p169 = scmp.eq.s32.totalorder %s26, 0
    %p170 = por %p168, %p169
    %s172 = sadd.s32 %s171, 1
    %p175 = scmp.eq.s32.totalorder %s20, 5
    %p176 = scmp.ne.s32.totalorder %s171, %s173
    %p177 = scmp.eq.s32.totalorder %s20, 0
    %p178 = por %p176, %p177
    %p179 = scmp.ne.s32.totalorder %s171, %s173
    %p180 = scmp.eq.s32.totalorder %s25, 5
    %p181 = por %p179, %p180
    %p182 = scmp.ne.s32.totalorder %s173, %s174
    %p183 = scmp.eq.s32.totalorder %s25, 0
    %p184 = por %p182, %p183
    %p185 = scmp.ne.s32.totalorder %s173, %s174
    %p186 = scmp.eq.s32.totalorder %s26, 5
    %p187 = por %p185, %p186
    %p189 = scmp.ne.s32.totalorder %s174, %s188
    %p190 = scmp.eq.s32.totalorder %s26, 0
    %p191 = por %p189, %p190
    %s193 = sadd.s32 %s192, 1
    %p196 = scmp.eq.s32.totalorder %s20, 5
    %p197 = scmp.ne.s32.totalorder %s192, %s194
    %p198 = scmp.eq.s32.totalorder %s20, 0
    %p199 = por %p197, %p198
    %p200 = scmp.ne.s32.totalorder %s192, %s194
    %p201 = scmp.eq.s32.totalorder %s25, 5
    %p202 = por %p200, %p201
    %p203 = scmp.ne.s32.totalorder %s194, %s195
    %p204 = scmp.eq.s32.totalorder %s25, 0
    %p205 = por %p203, %p204
    %p206 = scmp.ne.s32.totalorder %s194, %s195
    %p207 = scmp.eq.s32.totalorder %s26, 5
    %p208 = por %p206, %p207
    %p210 = scmp.ne.s32.totalorder %s195, %s209
    %p211 = scmp.eq.s32.totalorder %s26, 0
    %p212 = por %p210, %p211
    %s214 = sadd.s32 %s213, 1
    %p217 = scmp.eq.s32.totalorder %s20, 5
    %p218 = scmp.ne.s32.totalorder %s213, %s215
    %p219 = scmp.eq.s32.totalorder %s20, 0
    %p220 = por %p218, %p219
    %p221 = scmp.ne.s32.totalorder %s213, %s215
    %p222 = scmp.eq.s32.totalorder %s25, 5
    %p223 = por %p221, %p222
    %p224 = scmp.ne.s32.totalorder %s215, %s216
    %p225 = scmp.eq.s32.totalorder %s25, 0
    %p226 = por %p224, %p225
    %p227 = scmp.ne.s32.totalorder %s215, %s216
    %p228 = scmp.eq.s32.totalorder %s26, 5
    %p229 = por %p227, %p228
    %p231 = scmp.ne.s32.totalorder %s216, %s230
    %p232 = scmp.eq.s32.totalorder %s26, 0
    %p233 = por %p231, %p232
    %s235 = sadd.s32 %s234, 1
    %p238 = scmp.eq.s32.totalorder %s20, 5
    %p239 = scmp.ne.s32.totalorder %s234, %s236
    %p240 = scmp.eq.s32.totalorder %s20, 0
    %p241 = por %p239, %p240
    %p242 = scmp.ne.s32.totalorder %s234, %s236
    %p243 = scmp.eq.s32.totalorder %s25, 5
    %p244 = por %p242, %p243
    %p245 = scmp.ne.s32.totalorder %s236, %s237
    %p246 = scmp.eq.s32.totalorder %s25, 0
    %p247 = por %p245, %p246
    %p248 = scmp.ne.s32.totalorder %s236, %s237
    %p249 = scmp.eq.s32.totalorder %s26, 5
    %p250 = por %p248, %p249
    %p252 = scmp.ne.s32.totalorder %s237, %s251
    %p253 = scmp.eq.s32.totalorder %s26, 0
    %p254 = por %p252, %p253
    %s256 = sadd.s32 %s255, 1
    %p259 = scmp.eq.s32.totalorder %s20, 5
    %p260 = scmp.ne.s32.totalorder %s255, %s257
    %p261 = scmp.eq.s32.totalorder %s20, 0
    %p262 = por %p260, %p261
    %p263 = scmp.ne.s32.totalorder %s255, %s257
    %p264 = scmp.eq.s32.totalorder %s25, 5
    %p265 = por %p263, %p264
    %p266 = scmp.ne.s32.totalorder %s257, %s258
    %p267 = scmp.eq.s32.totalorder %s25, 0
    %p268 = por %p266, %p267
    %p269 = scmp.ne.s32.totalorder %s257, %s258
    %p270 = scmp.eq.s32.totalorder %s26, 5
    %p271 = por %p269, %p270
    %p273 = scmp.ne.s32.totalorder %s258, %s272
    %p274 = scmp.eq.s32.totalorder %s26, 0
    %p275 = por %p273, %p274
    %s277 = sadd.s32 %s276, 1
    %p280 = scmp.eq.s32.totalorder %s20, 5
    %p281 = scmp.ne.s32.totalorder %s276, %s278
    %p282 = scmp.eq.s32.totalorder %s20, 0
    %p283 = por %p281, %p282
    %p284 = scmp.ne.s32.totalorder %s276, %s278
    %p285 = scmp.eq.s32.totalorder %s25, 5
    %p286 = por %p284, %p285
    %p287 = scmp.ne.s32.totalorder %s278, %s279
    %p288 = scmp.eq.s32.totalorder %s25, 0
    %p289 = por %p287, %p288
    %p290 = scmp.ne.s32.totalorder %s278, %s279
    %p291 = scmp.eq.s32.totalorder %s26, 5
    %p292 = por %p290, %p291
    %p294 = scmp.ne.s32.totalorder %s279, %s293
    %p295 = scmp.eq.s32.totalorder %s26, 0
    %p296 = por %p294, %p295
    %s298 = sadd.s32 %s297, 1
    %p301 = scmp.eq.s32.totalorder %s20, 5
    %p302 = scmp.ne.s32.totalorder %s297, %s299
    %p303 = scmp.eq.s32.totalorder %s20, 0
    %p304 = por %p302, %p303
    %p305 = scmp.ne.s32.totalorder %s297, %s299
    %p306 = scmp.eq.s32.totalorder %s25, 5
    %p307 = por %p305, %p306
    %p308 = scmp.ne.s32.totalorder %s299, %s300
    %p309 = scmp.eq.s32.totalorder %s25, 0
    %p310 = por %p308, %p309
    %p311 = scmp.ne.s32.totalorder %s299, %s300
    %p312 = scmp.eq.s32.totalorder %s26, 5
    %p313 = por %p311, %p312
    %p315 = scmp.ne.s32.totalorder %s300, %s314
    %p316 = scmp.eq.s32.totalorder %s26, 0
    %p317 = por %p315, %p316
    %s319 = sadd.s32 %s318, 1
    %p322 = scmp.eq.s32.totalorder %s20, 5
    %p323 = scmp.ne.s32.totalorder %s318, %s320
    %p324 = scmp.eq.s32.totalorder %s20, 0
    %p325 = por %p323, %p324
    %p326 = scmp.ne.s32.totalorder %s318, %s320
    %p327 = scmp.eq.s32.totalorder %s25, 5
    %p328 = por %p326, %p327
    %p329 = scmp.ne.s32.totalorder %s320, %s321
    %p330 = scmp.eq.s32.totalorder %s25, 0
    %p331 = por %p329, %p330
    %p332 = scmp.ne.s32.totalorder %s320, %s321
    %p333 = scmp.eq.s32.totalorder %s26, 5
    %p334 = por %p332, %p333
    %p336 = scmp.ne.s32.totalorder %s321, %s335
    %p337 = scmp.eq.s32.totalorder %s26, 0
    %p338 = por %p336, %p337
    %s340 = sadd.s32 %s339, 1
    %p343 = scmp.eq.s32.totalorder %s20, 5
    %p344 = scmp.ne.s32.totalorder %s339, %s341
    %p345 = scmp.eq.s32.totalorder %s20, 0
    %p346 = por %p344, %p345
    %p347 = scmp.ne.s32.totalorder %s339, %s341
    %p348 = scmp.eq.s32.totalorder %s25, 5
    %p349 = por %p347, %p348
    %p350 = scmp.ne.s32.totalorder %s341, %s342
    %p351 = scmp.eq.s32.totalorder %s25, 0
    %p352 = por %p350, %p351
    %p353 = scmp.ne.s32.totalorder %s341, %s342
    %p354 = scmp.eq.s32.totalorder %s26, 5
    %p355 = por %p353, %p354
    %p357 = scmp.ne.s32.totalorder %s342, %s356
    %p358 = scmp.eq.s32.totalorder %s26, 0
    %p359 = por %p357, %p358
    %p360 = scmp.le.s32.totalorder 1, %s20
    %p361 = scmp.lt.s32.totalorder %s20, 7
    %p362 = pnand %p360, %p361
    %p363 = pneg %p362
    // Predicated region
    $region9: #{dmn_forward.6} parent=5 // pred_check
      _
    $region10: #{dmn_forward.6} parent=5 // pred_check_branch
      %365 = sbr.rel (%p362) target = $region12
    $region11: #{dmn_forward.6} parent=5 // pred_region
      %s366 = ssub.s32 %s20, 1
      // Predicated region
      $region13: #{dmn_forward.6} parent=11 // pred_check
        %p367 = pneg %p79
      $region14: #{dmn_forward.6} parent=11 // pred_check_branch
        %369 = sbr.rel (%p367) target = $region16
      $region15: #{dmn_forward.6} parent=11 // pred_region
        _
      $region16: #{dmn_forward.6} parent=11 // pred_fallthru
        _
      // Predicated region
      $region17: #{dmn_forward.6} parent=11 // pred_check
        %p370 = pneg %p100
      $region18: #{dmn_forward.6} parent=11 // pred_check_branch
        %372 = sbr.rel (%p370) target = $region20
      $region19: #{dmn_forward.6} parent=11 // pred_region
        _
      $region20: #{dmn_forward.6} parent=11 // pred_fallthru
        _
      // Predicated region
      $region21: #{dmn_forward.6} parent=11 // pred_check
        %p373 = pneg %p121
      $region22: #{dmn_forward.6} parent=11 // pred_check_branch
        %375 = sbr.rel (%p373) target = $region24
      $region23: #{dmn_forward.6} parent=11 // pred_region
        _
      $region24: #{dmn_forward.6} parent=11 // pred_fallthru
        _
      // Predicated region
      $region25: #{dmn_forward.6} parent=11 // pred_check
        %p376 = pneg %p142
      $region26: #{dmn_forward.6} parent=11 // pred_check_branch
        %378 = sbr.rel (%p376) target = $region28
      $region27: #{dmn_forward.6} parent=11 // pred_region
        _
      $region28: #{dmn_forward.6} parent=11 // pred_fallthru
        _
      // Predicated region
      $region29: #{dmn_forward.6} parent=11 // pred_check
        %p379 = pneg %p163
      $region30: #{dmn_forward.6} parent=11 // pred_check_branch
        %381 = sbr.rel (%p379) target = $region32
      $region31: #{dmn_forward.6} parent=11 // pred_region
        _
      $region32: #{dmn_forward.6} parent=11 // pred_fallthru
        _
      // Predicated region
      $region33: #{dmn_forward.6} parent=11 // pred_check
        %p382 = pneg %p184
      $region34: #{dmn_forward.6} parent=11 // pred_check_branch
        %384 = sbr.rel (%p382) target = $region36
      $region35: #{dmn_forward.6} parent=11 // pred_region
        _
      $region36: #{dmn_forward.6} parent=11 // pred_fallthru
        _
      // Predicated region
      $region37: #{dmn_forward.6} parent=11 // pred_check
        %p385 = pneg %p205
      $region38: #{dmn_forward.6} parent=11 // pred_check_branch
        %387 = sbr.rel (%p385) target = $region40
      $region39: #{dmn_forward.6} parent=11 // pred_region
        _
      $region40: #{dmn_forward.6} parent=11 // pred_fallthru
        _
      // Predicated region
      $region41: #{dmn_forward.6} parent=11 // pred_check
        %p388 = pneg %p226
      $region42: #{dmn_forward.6} parent=11 // pred_check_branch
        %390 = sbr.rel (%p388) target = $region44
      $region43: #{dmn_forward.6} parent=11 // pred_region
        _
      $region44: #{dmn_forward.6} parent=11 // pred_fallthru
        _
      // Predicated region
      $region45: #{dmn_forward.6} parent=11 // pred_check
        %p391 = pneg %p247
      $region46: #{dmn_forward.6} parent=11 // pred_check_branch
        %393 = sbr.rel (%p391) target = $region48
      $region47: #{dmn_forward.6} parent=11 // pred_region
        _
      $region48: #{dmn_forward.6} parent=11 // pred_fallthru
        _
      // Predicated region
      $region49: #{dmn_forward.6} parent=11 // pred_check
        %p394 = pneg %p268
      $region50: #{dmn_forward.6} parent=11 // pred_check_branch
        %396 = sbr.rel (%p394) target = $region52
      $region51: #{dmn_forward.6} parent=11 // pred_region
        _
      $region52: #{dmn_forward.6} parent=11 // pred_fallthru
        _
      // Predicated region
      $region53: #{dmn_forward.6} parent=11 // pred_check
        %p397 = pneg %p289
      $region54: #{dmn_forward.6} parent=11 // pred_check_branch
        %399 = sbr.rel (%p397) target = $region56
      $region55: #{dmn_forward.6} parent=11 // pred_region
        _
      $region56: #{dmn_forward.6} parent=11 // pred_fallthru
        _
      // Predicated region
      $region57: #{dmn_forward.6} parent=11 // pred_check
        %p400 = pneg %p310
      $region58: #{dmn_forward.6} parent=11 // pred_check_branch
        %402 = sbr.rel (%p400) target = $region60
      $region59: #{dmn_forward.6} parent=11 // pred_region
        _
      $region60: #{dmn_forward.6} parent=11 // pred_fallthru
        _
      // Predicated region
      $region61: #{dmn_forward.6} parent=11 // pred_check
        %p403 = pneg %p331
      $region62: #{dmn_forward.6} parent=11 // pred_check_branch
        %405 = sbr.rel (%p403) target = $region64
      $region63: #{dmn_forward.6} parent=11 // pred_region
        _
      $region64: #{dmn_forward.6} parent=11 // pred_fallthru
        _
    $region12: #{dmn_forward.6} parent=5 // pred_fallthru
      _
    %p406 = scmp.lt.s32.totalorder %s20, 6
    // Predicated region
    $region65: #{dmn_forward.6} parent=5 // pred_check
      %p407 = pneg %p406
    $region66: #{dmn_forward.6} parent=5 // pred_check_branch
      %409 = sbr.rel (%p407) target = $region68
    $region67: #{dmn_forward.6} parent=5 // pred_region
      // Predicated region
      $region69: #{dmn_forward.6} parent=67 // pred_check
        %p410 = pneg %p52
      $region70: #{dmn_forward.6} parent=67 // pred_check_branch
        %412 = sbr.rel (%p410) target = $region72
      $region71: #{dmn_forward.6} parent=67 // pred_region
        %p413 = scmp.lt.s32.totalorder %s28, 2
        %s414 = scalar_select %p413, %s28, 2
        %s415 = smul.addr %s414, 8
        %s416 = scalar_lea.vmem %s0, %s415
      $region72: #{dmn_forward.6} parent=67 // pred_fallthru
        _
    $region68: #{dmn_forward.6} parent=5 // pred_fallthru
      _
    %p417 = scmp.le.s32.totalorder 1, %s20
    %p418 = scmp.lt.s32.totalorder %s20, 7
    %p419 = pnand %p417, %p418
    %p420 = pneg %p419
    // Predicated region
    $region73: #{dmn_forward.6} parent=5 // pred_check
      _
    $region74: #{dmn_forward.6} parent=5 // pred_check_branch
      %422 = sbr.rel (%p419) target = $region76
    $region75: #{dmn_forward.6} parent=5 // pred_region
      %s423 = ssub.s32 %s20, 1
      %p424 = scmp.lt.s32.totalorder %s30, 2
      %s425 = scalar_select %p424, %s30, 2
      %s426 = smul.addr %s425, 8
      %s427 = scalar_lea.vmem %s0, %s426
      %p428 = pneg %p58
      %p429 = pneg %p55
      %p430 = pneg %p79
      %p431 = pneg %p76
      %p432 = pneg %p100
      %p433 = pneg %p97
      %p434 = pneg %p121
      %p435 = pneg %p118
      %p436 = pneg %p142
      %p437 = pneg %p139
      %p438 = pneg %p163
      %p439 = pneg %p160
      %p440 = pneg %p184
      %p441 = pneg %p181
      %p442 = pneg %p205
      %p443 = pneg %p202
      %p444 = pneg %p226
      %p445 = pneg %p223
      %p446 = pneg %p247
      %p447 = pneg %p244
      %p448 = pneg %p268
      %p449 = pneg %p265
      %p450 = pneg %p289
      %p451 = pneg %p286
      %p452 = pneg %p310
      %p453 = pneg %p307
      %p454 = pneg %p331
      %p455 = pneg %p328
      %p456 = pneg %p352
      %p457 = pneg %p349
      %p458 = scmp.lt.s32.totalorder %s30, 2
      %s459 = scalar_select %p458, %s30, 2
      %s460 = smul.addr %s459, 8
      %s461 = scalar_lea.vmem %s0, %s460
      %p462 = scmp.eq.s32.totalorder %s29, 0
      %p463 = scmp.eq.s32.totalorder %s30, 0
      %p464 = pnand %p462, %p463
      %p465 = pneg %p464
      // Predicated region
      $region77: #{dmn_forward.6} parent=75 // pred_check
        _
      $region78: #{dmn_forward.6} parent=75 // pred_check_branch
        %467 = sbr.rel (%p464) target = $region80
      $region79: #{dmn_forward.6} parent=75 // pred_region
        %v468 = vld [vmem:[%s1] sm:$0xff]
        %469 = vst [vmem:[%s14] sm:$0xff] %v468
      $region80: #{dmn_forward.6} parent=75 // pred_fallthru
        _
      // Predicated region
      $region81: #{dmn_forward.6} parent=75 // pred_check
        %p470 = pneg %p463
      $region82: #{dmn_forward.6} parent=75 // pred_check_branch
        %472 = sbr.rel (%p470) target = $region84
      $region83: #{dmn_forward.6} parent=75 // pred_region
        %473 = vst [vmem:[#allocation2] sm:$0xff] 0.0
      $region84: #{dmn_forward.6} parent=75 // pred_fallthru
        _
      %v474 = vld [vmem:[%s461] sm:$0xff]
      %v475 = vld [vmem:[%s1] sm:$0xff]
      %v476 = vld [vmem:[%s14] sm:$0xff]
      %v477 = vld [vmem:[#allocation2] sm:$0xff]
      %v478 = vld [vmem:[%s2] sm:$0xff]
      %v479 = vld [vmem:[%s2 + $0x8] sm:$0xff]
      %v480 = vld [vmem:[%s2 + $0x10] sm:$0xff]
      %v481 = vld [vmem:[%s2 + $0x18] sm:$0xff]
      %v482 = vld [vmem:[%s2 + $0x20] sm:$0xff]
      %v483 = vld [vmem:[%s2 + $0x28] sm:$0xff]
      %v484 = vld [vmem:[%s2 + $0x30] sm:$0xff]
      %v485 = vld [vmem:[%s2 + $0x38] sm:$0xff]
      %v486 = vld [vmem:[%s2 + $0x40] sm:$0xff]
      %v487 = vld [vmem:[%s2 + $0x48] sm:$0xff]
      %v488 = vld [vmem:[%s2 + $0x50] sm:$0xff]
      %v489 = vld [vmem:[%s2 + $0x58] sm:$0xff]
      %v490 = vld [vmem:[%s2 + $0x60] sm:$0xff]
      %v491 = vld [vmem:[%s2 + $0x68] sm:$0xff]
      %v492 = vld [vmem:[%s2 + $0x70] sm:$0xff]
      %v493 = vld [vmem:[%s2 + $0x78] sm:$0xff]
      %v494 = vld [vmem:[%s2 + $0x80] sm:$0xff]
      %v495 = vld [vmem:[%s2 + $0x88] sm:$0xff]
      %v496 = vld [vmem:[%s2 + $0x90] sm:$0xff]
      %v497 = vld [vmem:[%s2 + $0x98] sm:$0xff]
      %v498 = vld [vmem:[%s2 + $0xa0] sm:$0xff]
      %v499 = vld [vmem:[%s2 + $0xa8] sm:$0xff]
      %v500 = vld [vmem:[%s2 + $0xb0] sm:$0xff]
      %v501 = vld [vmem:[%s2 + $0xb8] sm:$0xff]
      %v502 = vld [vmem:[%s2 + $0xc0] sm:$0xff]
      %v503 = vld [vmem:[%s2 + $0xc8] sm:$0xff]
      %v504 = vld [vmem:[%s2 + $0xd0] sm:$0xff]
      %v505 = vld [vmem:[%s2 + $0xd8] sm:$0xff]
      %v506 = vld [vmem:[%s2 + $0xe0] sm:$0xff]
      %v507 = vld [vmem:[%s2 + $0xe8] sm:$0xff]
      %v508 = vld [vmem:[%s2 + $0xf0] sm:$0xff]
      %v509 = vld [vmem:[%s2 + $0xf8] sm:$0xff]
      %v510 = vld [vmem:[%s2 + $0x100] sm:$0xff]
      %v511 = vld [vmem:[%s2 + $0x108] sm:$0xff]
      %v512 = vld [vmem:[%s2 + $0x110] sm:$0xff]
      %v513 = vld [vmem:[%s2 + $0x118] sm:$0xff]
      %v514 = vld [vmem:[%s2 + $0x120] sm:$0xff]
      %v515 = vld [vmem:[%s2 + $0x128] sm:$0xff]
      %v516 = vld [vmem:[%s2 + $0x130] sm:$0xff]
      %v517 = vld [vmem:[%s2 + $0x138] sm:$0xff]
      %v518 = vld [vmem:[%s2 + $0x140] sm:$0xff]
      %v519 = vld [vmem:[%s2 + $0x148] sm:$0xff]
      %v520 = vld [vmem:[%s2 + $0x150] sm:$0xff]
      %v521 = vld [vmem:[%s2 + $0x158] sm:$0xff]
      %v522 = vld [vmem:[%s2 + $0x160] sm:$0xff]
      %v523 = vld [vmem:[%s2 + $0x168] sm:$0xff]
      %v524 = vld [vmem:[%s2 + $0x170] sm:$0xff]
      %v525 = vld [vmem:[%s2 + $0x178] sm:$0xff]
      %v526 = vld [vmem:[%s2 + $0x180] sm:$0xff]
      %v527 = vld [vmem:[%s2 + $0x188] sm:$0xff]
      %v528 = vld [vmem:[%s2 + $0x190] sm:$0xff]
      %v529 = vld [vmem:[%s2 + $0x198] sm:$0xff]
      %v530 = vld [vmem:[%s2 + $0x1a0] sm:$0xff]
      %v531 = vld [vmem:[%s2 + $0x1a8] sm:$0xff]
      %v532 = vld [vmem:[%s2 + $0x1b0] sm:$0xff]
      %v533 = vld [vmem:[%s2 + $0x1b8] sm:$0xff]
      %v534 = vld [vmem:[%s2 + $0x1c0] sm:$0xff]
      %v535 = vld [vmem:[%s2 + $0x1c8] sm:$0xff]
      %v536 = vld [vmem:[%s2 + $0x1d0] sm:$0xff]
      %v537 = vld [vmem:[%s2 + $0x1d8] sm:$0xff]
      %v538 = vld [vmem:[%s2 + $0x1e0] sm:$0xff]
      %v539 = vld [vmem:[%s2 + $0x1e8] sm:$0xff]
      %v540 = vld [vmem:[%s2 + $0x1f0] sm:$0xff]
      %v541 = vld [vmem:[%s2 + $0x1f8] sm:$0xff]
      %v542 = vmul.f32 %v474, %v475
      %v543 = vmul.f32 %v474, %v476
      %544 = vmatprep.subr.mxu0 0.0
      %545 = vmatpush1.msra.mxu0 %v494
      %546 = vmatprep.subr.mxu0 0.0
      %547 = vmatpush1.msra.mxu0 %v495
      %548 = vmatprep.subr.mxu0 0.0
      %549 = vmatpush1.msra.mxu0 %v496
      %550 = vmatprep.subr.mxu0 0.0
      %551 = vmatpush1.msra.mxu0 %v497
      %552 = vmatprep.subr.mxu0 0.0
      %553 = vmatpush1.msra.mxu0 %v498
      %554 = vmatprep.subr.mxu0 0.0
      %555 = vmatpush1.msra.mxu0 %v499
      %556 = vmatprep.subr.mxu0 0.0
      %557 = vmatpush1.msra.mxu0 %v500
      %558 = vmatprep.subr.mxu0 0.0
      %559 = vmatpush1.msra.mxu0 %v501
      %560 = vmatprep.subr.mxu0 0.0
      %561 = vmatpush1.msra.mxu0 %v502
      %562 = vmatprep.subr.mxu0 0.0
      %563 = vmatpush1.msra.mxu0 %v503
      %564 = vmatprep.subr.mxu0 0.0
      %565 = vmatpush1.msra.mxu0 %v504
      %566 = vmatprep.subr.mxu0 0.0
      %567 = vmatpush1.msra.mxu0 %v505
      %568 = vmatprep.subr.mxu0 0.0
      %569 = vmatpush1.msra.mxu0 %v506
      %570 = vmatprep.subr.mxu0 0.0
      %571 = vmatpush1.msra.mxu0 %v507
      %572 = vmatprep.subr.mxu0 0.0
      %573 = vmatpush1.msra.mxu0 %v508
      %574 = vmatprep.subr.mxu0 0.0
      %575 = vmatpush1.msra.mxu0 %v509
      %576 = vmatprep.subr.mxu0 0.0
      %577 = vmatpush1.msra.mxu0 0.0
      %578 = vmatprep.subr.mxu0 0.0
      %579 = vmatpush1.msra.mxu0 0.0
      %580 = vmatprep.subr.mxu0 0.0
      %581 = vmatpush1.msra.mxu0 0.0
      %582 = vmatprep.subr.mxu0 0.0
      %583 = vmatpush1.msra.mxu0 0.0
      %584 = vmatprep.subr.mxu0 0.0
      %585 = vmatpush1.msra.mxu0 0.0
      %586 = vmatprep.subr.mxu0 0.0
      %587 = vmatpush1.msra.mxu0 0.0
      %588 = vmatprep.subr.mxu0 0.0
      %589 = vmatpush1.msra.mxu0 0.0
      %590 = vmatprep.subr.mxu0 0.0
      %591 = vmatpush1.msra.mxu0 0.0
      %592 = vmatprep.subr.mxu0 0.0
      %593 = vmatpush1.msra.mxu0 0.0
      %594 = vmatprep.subr.mxu0 0.0
      %595 = vmatpush1.msra.mxu0 0.0
      %596 = vmatprep.subr.mxu0 0.0
      %597 = vmatpush1.msra.mxu0 0.0
      %598 = vmatprep.subr.mxu0 0.0
      %599 = vmatpush1.msra.mxu0 0.0
      %600 = vmatprep.subr.mxu0 0.0
      %601 = vmatpush1.msra.mxu0 0.0
      %602 = vmatprep.subr.mxu0 0.0
      %603 = vmatpush1.msra.mxu0 0.0
      %604 = vmatprep.subr.mxu0 0.0
      %605 = vmatpush1.msra.mxu0 0.0
      %606 = vmatprep.subr.mxu0 0.0
      %607 = vmatpush1.msra.mxu0 0.0
      %608 = vmatprep.mubr.f32.mxu0 0.0
      %609 = vmatmul.mubr.f32.gmra.mrb[0].mxu0 %v543
      %v610 = vpop.f32.mrb[0].mxu0
      %v611 = vadd.f32 0.0, %v610
      %v612 = vpop.f32.mrb[0].mxu0
      %613 = vdwg.mxu0
      %614 = vmatprep.subr.mxu0 0.0
      %615 = vmatpush1.msra.mxu0 %v478
      %616 = vmatprep.subr.mxu0 0.0
      %617 = vmatpush1.msra.mxu0 %v479
      %618 = vmatprep.subr.mxu0 0.0
      %619 = vmatpush1.msra.mxu0 %v480
      %620 = vmatprep.subr.mxu0 0.0
      %621 = vmatpush1.msra.mxu0 %v481
      %622 = vmatprep.subr.mxu0 0.0
      %623 = vmatpush1.msra.mxu0 %v482
      %624 = vmatprep.subr.mxu0 0.0
      %625 = vmatpush1.msra.mxu0 %v483
      %626 = vmatprep.subr.mxu0 0.0
      %627 = vmatpush1.msra.mxu0 %v484
      %628 = vmatprep.subr.mxu0 0.0
      %629 = vmatpush1.msra.mxu0 %v485
      %630 = vmatprep.subr.mxu0 0.0
      %631 = vmatpush1.msra.mxu0 %v486
      %632 = vmatprep.subr.mxu0 0.0
      %633 = vmatpush1.msra.mxu0 %v487
      %634 = vmatprep.subr.mxu0 0.0
      %635 = vmatpush1.msra.mxu0 %v488
      %636 = vmatprep.subr.mxu0 0.0
      %637 = vmatpush1.msra.mxu0 %v489
      %638 = vmatprep.subr.mxu0 0.0
      %639 = vmatpush1.msra.mxu0 %v490
      %640 = vmatprep.subr.mxu0 0.0
      %641 = vmatpush1.msra.mxu0 %v491
      %642 = vmatprep.subr.mxu0 0.0
      %643 = vmatpush1.msra.mxu0 %v492
      %644 = vmatprep.subr.mxu0 0.0
      %645 = vmatpush1.msra.mxu0 %v493
      %646 = vmatprep.subr.mxu0 0.0
      %647 = vmatpush1.msra.mxu0 0.0
      %648 = vmatprep.subr.mxu0 0.0
      %649 = vmatpush1.msra.mxu0 0.0
      %650 = vmatprep.subr.mxu0 0.0
      %651 = vmatpush1.msra.mxu0 0.0
      %652 = vmatprep.subr.mxu0 0.0
      %653 = vmatpush1.msra.mxu0 0.0
      %654 = vmatprep.subr.mxu0 0.0
      %655 = vmatpush1.msra.mxu0 0.0
      %656 = vmatprep.subr.mxu0 0.0
      %657 = vmatpush1.msra.mxu0 0.0
      %658 = vmatprep.subr.mxu0 0.0
      %659 = vmatpush1.msra.mxu0 0.0
      %660 = vmatprep.subr.mxu0 0.0
      %661 = vmatpush1.msra.mxu0 0.0
      %662 = vmatprep.subr.mxu0 0.0
      %663 = vmatpush1.msra.mxu0 0.0
      %664 = vmatprep.subr.mxu0 0.0
      %665 = vmatpush1.msra.mxu0 0.0
      %666 = vmatprep.subr.mxu0 0.0
      %667 = vmatpush1.msra.mxu0 0.0
      %668 = vmatprep.subr.mxu0 0.0
      %669 = vmatpush1.msra.mxu0 0.0
      %670 = vmatprep.subr.mxu0 0.0
      %671 = vmatpush1.msra.mxu0 0.0
      %672 = vmatprep.subr.mxu0 0.0
      %673 = vmatpush1.msra.mxu0 0.0
      %674 = vmatprep.subr.mxu0 0.0
      %675 = vmatpush1.msra.mxu0 0.0
      %676 = vmatprep.subr.mxu0 0.0
      %677 = vmatpush1.msra.mxu0 0.0
      %678 = vmatprep.mubr.f32.mxu0 0.0
      %679 = vmatmul.mubr.f32.gmra.mrb[0].mxu0 %v542
      %v680 = vpop.f32.mrb[0].mxu0
      %v681 = vadd.f32 %v611, %v680
      %v682 = vpop.f32.mrb[0].mxu0
      %683 = vdwg.mxu0
      %v684 = vsub.f32 %v474, %v475
      %v685 = vand.u32 2147483647, %v684
      %686 = vmatprep.subr.mxu0 0.0
      %687 = vmatpush1.msra.mxu0 %v510
      %688 = vmatprep.subr.mxu0 0.0
      %689 = vmatpush1.msra.mxu0 %v511
      %690 = vmatprep.subr.mxu0 0.0
      %691 = vmatpush1.msra.mxu0 %v512
      %692 = vmatprep.subr.mxu0 0.0
      %693 = vmatpush1.msra.mxu0 %v513
      %694 = vmatprep.subr.mxu0 0.0
      %695 = vmatpush1.msra.mxu0 %v514
      %696 = vmatprep.subr.mxu0 0.0
      %697 = vmatpush1.msra.mxu0 %v515
      %698 = vmatprep.subr.mxu0 0.0
      %699 = vmatpush1.msra.mxu0 %v516
      %700 = vmatprep.subr.mxu0 0.0
      %701 = vmatpush1.msra.mxu0 %v517
      %702 = vmatprep.subr.mxu0 0.0
      %703 = vmatpush1.msra.mxu0 %v518
      %704 = vmatprep.subr.mxu0 0.0
      %705 = vmatpush1.msra.mxu0 %v519
      %706 = vmatprep.subr.mxu0 0.0
      %707 = vmatpush1.msra.mxu0 %v520
      %708 = vmatprep.subr.mxu0 0.0
      %709 = vmatpush1.msra.mxu0 %v521
      %710 = vmatprep.subr.mxu0 0.0
      %711 = vmatpush1.msra.mxu0 %v522
      %712 = vmatprep.subr.mxu0 0.0
      %713 = vmatpush1.msra.mxu0 %v523
      %714 = vmatprep.subr.mxu0 0.0
      %715 = vmatpush1.msra.mxu0 %v524
      %716 = vmatprep.subr.mxu0 0.0
      %717 = vmatpush1.msra.mxu0 %v525
      %718 = vmatprep.subr.mxu0 0.0
      %719 = vmatpush1.msra.mxu0 0.0
      %720 = vmatprep.subr.mxu0 0.0
      %721 = vmatpush1.msra.mxu0 0.0
      %722 = vmatprep.subr.mxu0 0.0
      %723 = vmatpush1.msra.mxu0 0.0
      %724 = vmatprep.subr.mxu0 0.0
      %725 = vmatpush1.msra.mxu0 0.0
      %726 = vmatprep.subr.mxu0 0.0
      %727 = vmatpush1.msra.mxu0 0.0
      %728 = vmatprep.subr.mxu0 0.0
      %729 = vmatpush1.msra.mxu0 0.0
      %730 = vmatprep.subr.mxu0 0.0
      %731 = vmatpush1.msra.mxu0 0.0
      %732 = vmatprep.subr.mxu0 0.0
      %733 = vmatpush1.msra.mxu0 0.0
      %734 = vmatprep.subr.mxu0 0.0
      %735 = vmatpush1.msra.mxu0 0.0
      %736 = vmatprep.subr.mxu0 0.0
      %737 = vmatpush1.msra.mxu0 0.0
      %738 = vmatprep.subr.mxu0 0.0
      %739 = vmatpush1.msra.mxu0 0.0
      %740 = vmatprep.subr.mxu0 0.0
      %741 = vmatpush1.msra.mxu0 0.0
      %742 = vmatprep.subr.mxu0 0.0
      %743 = vmatpush1.msra.mxu0 0.0
      %744 = vmatprep.subr.mxu0 0.0
      %745 = vmatpush1.msra.mxu0 0.0
      %746 = vmatprep.subr.mxu0 0.0
      %747 = vmatpush1.msra.mxu0 0.0
      %748 = vmatprep.subr.mxu0 0.0
      %749 = vmatpush1.msra.mxu0 0.0
      %750 = vmatprep.mubr.f32.mxu0 0.0
      %751 = vmatmul.mubr.f32.gmra.mrb[0].mxu0 %v685
      %v752 = vpop.f32.mrb[0].mxu0
      %v753 = vadd.f32 0.0, %v752
      %v754 = vpop.f32.mrb[0].mxu0
      %755 = vdwg.mxu0
      %v756 = vadd.f32 %v681, %v753
      %v757 = vsub.f32 %v474, %v476
      %v758 = vand.u32 2147483647, %v757
      %759 = vmatprep.subr.mxu0 0.0
      %760 = vmatpush1.msra.mxu0 %v526
      %761 = vmatprep.subr.mxu0 0.0
      %762 = vmatpush1.msra.mxu0 %v527
      %763 = vmatprep.subr.mxu0 0.0
      %764 = vmatpush1.msra.mxu0 %v528
      %765 = vmatprep.subr.mxu0 0.0
      %766 = vmatpush1.msra.mxu0 %v529
      %767 = vmatprep.subr.mxu0 0.0
      %768 = vmatpush1.msra.mxu0 %v530
      %769 = vmatprep.subr.mxu0 0.0
      %770 = vmatpush1.msra.mxu0 %v531
      %771 = vmatprep.subr.mxu0 0.0
      %772 = vmatpush1.msra.mxu0 %v532
      %773 = vmatprep.subr.mxu0 0.0
      %774 = vmatpush1.msra.mxu0 %v533
      %775 = vmatprep.subr.mxu0 0.0
      %776 = vmatpush1.msra.mxu0 %v534
      %777 = vmatprep.subr.mxu0 0.0
      %778 = vmatpush1.msra.mxu0 %v535
      %779 = vmatprep.subr.mxu0 0.0
      %780 = vmatpush1.msra.mxu0 %v536
      %781 = vmatprep.subr.mxu0 0.0
      %782 = vmatpush1.msra.mxu0 %v537
      %783 = vmatprep.subr.mxu0 0.0
      %784 = vmatpush1.msra.mxu0 %v538
      %785 = vmatprep.subr.mxu0 0.0
      %786 = vmatpush1.msra.mxu0 %v539
      %787 = vmatprep.subr.mxu0 0.0
      %788 = vmatpush1.msra.mxu0 %v540
      %789 = vmatprep.subr.mxu0 0.0
      %790 = vmatpush1.msra.mxu0 %v541
      %791 = vmatprep.subr.mxu0 0.0
      %792 = vmatpush1.msra.mxu0 0.0
      %793 = vmatprep.subr.mxu0 0.0
      %794 = vmatpush1.msra.mxu0 0.0
      %795 = vmatprep.subr.mxu0 0.0
      %796 = vmatpush1.msra.mxu0 0.0
      %797 = vmatprep.subr.mxu0 0.0
      %798 = vmatpush1.msra.mxu0 0.0
      %799 = vmatprep.subr.mxu0 0.0
      %800 = vmatpush1.msra.mxu0 0.0
      %801 = vmatprep.subr.mxu0 0.0
      %802 = vmatpush1.msra.mxu0 0.0
      %803 = vmatprep.subr.mxu0 0.0
      %804 = vmatpush1.msra.mxu0 0.0
      %805 = vmatprep.subr.mxu0 0.0
      %806 = vmatpush1.msra.mxu0 0.0
      %807 = vmatprep.subr.mxu0 0.0
      %808 = vmatpush1.msra.mxu0 0.0
      %809 = vmatprep.subr.mxu0 0.0
      %810 = vmatpush1.msra.mxu0 0.0
      %811 = vmatprep.subr.mxu0 0.0
      %812 = vmatpush1.msra.mxu0 0.0
      %813 = vmatprep.subr.mxu0 0.0
      %814 = vmatpush1.msra.mxu0 0.0
      %815 = vmatprep.subr.mxu0 0.0
      %816 = vmatpush1.msra.mxu0 0.0
      %817 = vmatprep.subr.mxu0 0.0
      %818 = vmatpush1.msra.mxu0 0.0
      %819 = vmatprep.subr.mxu0 0.0
      %820 = vmatpush1.msra.mxu0 0.0
      %821 = vmatprep.subr.mxu0 0.0
      %822 = vmatpush1.msra.mxu0 0.0
      %823 = vmatprep.mubr.f32.mxu0 0.0
      %824 = vmatmul.mubr.f32.gmra.mrb[0].mxu0 %v758
      %v825 = vpop.f32.mrb[0].mxu0
      %v826 = vadd.f32 0.0, %v825
      %v827 = vpop.f32.mrb[0].mxu0
      %828 = vdwg.mxu0
      %v829 = vadd.f32 %v756, %v826
      %v830 = vld [vmem:[%s3] sm:$0x1]
      %v832 = vlaneseq
      %v833 = vshrl.u32 %v832, 7
      %v834 = vsub.s32 0, %v833
      %v835 = vrot.slane %v830, %v834
      %v837 = vadd.f32 %v829, %v835
      %v838 = vtanh.pop %v837
      %v839 = vld [vmem:[%s4] sm:$0x1]
      %v841 = vlaneseq
      %v842 = vshrl.u32 %v841, 7
      %v843 = vsub.s32 0, %v842
      %v844 = vrot.slane %v839, %v843
      %v846 = vmul.f32 %v838, %v844
      %847 = vadd.xlane.f32.xlu0 %v846
      %v848 = vpop.xlane.xlu0 %847
      %v849 = vld [vmem:[%s5] sm:$0x1]
      %v851 = vlaneseq
      %v852 = vshrl.u32 %v851, 7
      %v853 = vsub.s32 0, %v852
      %v854 = vrot.slane %v849, %v853
      %v856 = vadd.f32 %v848, %v854
      %v857 = vxor.u32 %v856, 2147483648
      %v858 = vmul.f32 %v857, 1.442695
      %v859 = vpow.pop %v858
      %v860 = vadd.f32 %v859, 1.0
      %v861 = vrcp.pop %v860
      %v862 = vmul.f32 1.0, %v861
      %v863 = vld [vmem:[%s6] sm:$0xff]
      %v864 = vld [vmem:[%s6 + $0x8] sm:$0xff]
      %v865 = vld [vmem:[%s6 + $0x10] sm:$0xff]
      %v866 = vld [vmem:[%s6 + $0x18] sm:$0xff]
      %v867 = vld [vmem:[%s6 + $0x20] sm:$0xff]
      %v868 = vld [vmem:[%s6 + $0x28] sm:$0xff]
      %v869 = vld [vmem:[%s6 + $0x30] sm:$0xff]
      %v870 = vld [vmem:[%s6 + $0x38] sm:$0xff]
      %v871 = vld [vmem:[%s6 + $0x40] sm:$0xff]
      %v872 = vld [vmem:[%s6 + $0x48] sm:$0xff]
      %v873 = vld [vmem:[%s6 + $0x50] sm:$0xff]
      %v874 = vld [vmem:[%s6 + $0x58] sm:$0xff]
      %v875 = vld [vmem:[%s6 + $0x60] sm:$0xff]
      %v876 = vld [vmem:[%s6 + $0x68] sm:$0xff]
      %v877 = vld [vmem:[%s6 + $0x70] sm:$0xff]
      %v878 = vld [vmem:[%s6 + $0x78] sm:$0xff]
      %v879 = vld [vmem:[%s6 + $0x80] sm:$0xff]
      %v880 = vld [vmem:[%s6 + $0x88] sm:$0xff]
      %v881 = vld [vmem:[%s6 + $0x90] sm:$0xff]
      %v882 = vld [vmem:[%s6 + $0x98] sm:$0xff]
      %v883 = vld [vmem:[%s6 + $0xa0] sm:$0xff]
      %v884 = vld [vmem:[%s6 + $0xa8] sm:$0xff]
      %v885 = vld [vmem:[%s6 + $0xb0] sm:$0xff]
      %v886 = vld [vmem:[%s6 + $0xb8] sm:$0xff]
      %v887 = vld [vmem:[%s6 + $0xc0] sm:$0xff]
      %v888 = vld [vmem:[%s6 + $0xc8] sm:$0xff]
      %v889 = vld [vmem:[%s6 + $0xd0] sm:$0xff]
      %v890 = vld [vmem:[%s6 + $0xd8] sm:$0xff]
      %v891 = vld [vmem:[%s6 + $0xe0] sm:$0xff]
      %v892 = vld [vmem:[%s6 + $0xe8] sm:$0xff]
      %v893 = vld [vmem:[%s6 + $0xf0] sm:$0xff]
      %v894 = vld [vmem:[%s6 + $0xf8] sm:$0xff]
      %v895 = vld [vmem:[%s6 + $0x100] sm:$0xff]
      %v896 = vld [vmem:[%s6 + $0x108] sm:$0xff]
      %v897 = vld [vmem:[%s6 + $0x110] sm:$0xff]
      %v898 = vld [vmem:[%s6 + $0x118] sm:$0xff]
      %v899 = vld [vmem:[%s6 + $0x120] sm:$0xff]
      %v900 = vld [vmem:[%s6 + $0x128] sm:$0xff]
      %v901 = vld [vmem:[%s6 + $0x130] sm:$0xff]
      %v902 = vld [vmem:[%s6 + $0x138] sm:$0xff]
      %v903 = vld [vmem:[%s6 + $0x140] sm:$0xff]
      %v904 = vld [vmem:[%s6 + $0x148] sm:$0xff]
      %v905 = vld [vmem:[%s6 + $0x150] sm:$0xff]
      %v906 = vld [vmem:[%s6 + $0x158] sm:$0xff]
      %v907 = vld [vmem:[%s6 + $0x160] sm:$0xff]
      %v908 = vld [vmem:[%s6 + $0x168] sm:$0xff]
      %v909 = vld [vmem:[%s6 + $0x170] sm:$0xff]
      %v910 = vld [vmem:[%s6 + $0x178] sm:$0xff]
      %v911 = vld [vmem:[%s8] sm:$0x7]
      %v913 = vlaneseq
      %v914 = vshrl.u32 %v913, 7
      %v915 = vsub.s32 0, %v914
      %v916 = vrot.slane %v911, %v915
      %v917 = vlaneseq
      %v918 = vshrl.u32 %v917, 7
      %v919 = vsub.s32 1, %v918
      %v920 = vrot.slane %v911, %v919
      %v921 = vlaneseq
      %v922 = vshrl.u32 %v921, 7
      %v923 = vsub.s32 2, %v922
      %v924 = vrot.slane %v911, %v923
      %928 = vmatprep.subr.mxu0 %v864
      %929 = vmatpush1.msra.mxu0 %v863
      %930 = vmatprep.subr.mxu0 %v867
      %931 = vmatpush1.msra.mxu0 %v866
      %932 = vmatprep.subr.mxu0 %v870
      %933 = vmatpush1.msra.mxu0 %v869
      %934 = vmatprep.subr.mxu0 %v873
      %935 = vmatpush1.msra.mxu0 %v872
      %936 = vmatprep.subr.mxu0 %v876
      %937 = vmatpush1.msra.mxu0 %v875
      %938 = vmatprep.subr.mxu0 %v879
      %939 = vmatpush1.msra.mxu0 %v878
      %940 = vmatprep.subr.mxu0 %v882
      %941 = vmatpush1.msra.mxu0 %v881
      %942 = vmatprep.subr.mxu0 %v885
      %943 = vmatpush1.msra.mxu0 %v884
      %944 = vmatprep.subr.mxu0 %v888
      %945 = vmatpush1.msra.mxu0 %v887
      %946 = vmatprep.subr.mxu0 %v891
      %947 = vmatpush1.msra.mxu0 %v890
      %948 = vmatprep.subr.mxu0 %v894
      %949 = vmatpush1.msra.mxu0 %v893
      %950 = vmatprep.subr.mxu0 %v897
      %951 = vmatpush1.msra.mxu0 %v896
      %952 = vmatprep.subr.mxu0 %v900
      %953 = vmatpush1.msra.mxu0 %v899
      %954 = vmatprep.subr.mxu0 %v903
      %955 = vmatpush1.msra.mxu0 %v902
      %956 = vmatprep.subr.mxu0 %v906
      %957 = vmatpush1.msra.mxu0 %v905
      %958 = vmatprep.subr.mxu0 %v909
      %959 = vmatpush1.msra.mxu0 %v908
      %960 = vmatprep.subr.mxu0 0.0
      %961 = vmatpush1.msra.mxu0 0.0
      %962 = vmatprep.subr.mxu0 0.0
      %963 = vmatpush1.msra.mxu0 0.0
      %964 = vmatprep.subr.mxu0 0.0
      %965 = vmatpush1.msra.mxu0 0.0
      %966 = vmatprep.subr.mxu0 0.0
      %967 = vmatpush1.msra.mxu0 0.0
      %968 = vmatprep.subr.mxu0 0.0
      %969 = vmatpush1.msra.mxu0 0.0
      %970 = vmatprep.subr.mxu0 0.0
      %971 = vmatpush1.msra.mxu0 0.0
      %972 = vmatprep.subr.mxu0 0.0
      %973 = vmatpush1.msra.mxu0 0.0
      %974 = vmatprep.subr.mxu0 0.0
      %975 = vmatpush1.msra.mxu0 0.0
      %976 = vmatprep.subr.mxu0 0.0
      %977 = vmatpush1.msra.mxu0 0.0
      %978 = vmatprep.subr.mxu0 0.0
      %979 = vmatpush1.msra.mxu0 0.0
      %980 = vmatprep.subr.mxu0 0.0
      %981 = vmatpush1.msra.mxu0 0.0
      %982 = vmatprep.subr.mxu0 0.0
      %983 = vmatpush1.msra.mxu0 0.0
      %984 = vmatprep.subr.mxu0 0.0
      %985 = vmatpush1.msra.mxu0 0.0
      %986 = vmatprep.subr.mxu0 0.0
      %987 = vmatpush1.msra.mxu0 0.0
      %988 = vmatprep.subr.mxu0 0.0
      %989 = vmatpush1.msra.mxu0 0.0
      %990 = vmatprep.subr.mxu0 0.0
      %991 = vmatpush1.msra.mxu0 0.0
      %992 = vmatprep.mubr.f32.mxu0 0.0
      %993 = vmatmul.mubr.f32.gmra.mrb[0].mxu0 %v474
      %v994 = vpop.f32.mrb[0].mxu0
      %v995 = vadd.f32 %v916, %v994
      %v996 = vpop.f32.mrb[0].mxu0
      %v997 = vadd.f32 %v920, %v996
      %998 = vdwg.mxu0
      %999 = vmatprep.subr.mxu0 0.0
      %1000 = vmatpush1.msra.mxu0 %v865
      %1001 = vmatprep.subr.mxu0 0.0
      %1002 = vmatpush1.msra.mxu0 %v868
      %1003 = vmatprep.subr.mxu0 0.0
      %1004 = vmatpush1.msra.mxu0 %v871
      %1005 = vmatprep.subr.mxu0 0.0
      %1006 = vmatpush1.msra.mxu0 %v874
      %1007 = vmatprep.subr.mxu0 0.0
      %1008 = vmatpush1.msra.mxu0 %v877
      %1009 = vmatprep.subr.mxu0 0.0
      %1010 = vmatpush1.msra.mxu0 %v880
      %1011 = vmatprep.subr.mxu0 0.0
      %1012 = vmatpush1.msra.mxu0 %v883
      %1013 = vmatprep.subr.mxu0 0.0
      %1014 = vmatpush1.msra.mxu0 %v886
      %1015 = vmatprep.subr.mxu0 0.0
      %1016 = vmatpush1.msra.mxu0 %v889
      %1017 = vmatprep.subr.mxu0 0.0
      %1018 = vmatpush1.msra.mxu0 %v892
      %1019 = vmatprep.subr.mxu0 0.0
      %1020 = vmatpush1.msra.mxu0 %v895
      %1021 = vmatprep.subr.mxu0 0.0
      %1022 = vmatpush1.msra.mxu0 %v898
      %1023 = vmatprep.subr.mxu0 0.0
      %1024 = vmatpush1.msra.mxu0 %v901
      %1025 = vmatprep.subr.mxu0 0.0
      %1026 = vmatpush1.msra.mxu0 %v904
      %1027 = vmatprep.subr.mxu0 0.0
      %1028 = vmatpush1.msra.mxu0 %v907
      %1029 = vmatprep.subr.mxu0 0.0
      %1030 = vmatpush1.msra.mxu0 %v910
      %1031 = vmatprep.subr.mxu0 0.0
      %1032 = vmatpush1.msra.mxu0 0.0
      %1033 = vmatprep.subr.mxu0 0.0
      %1034 = vmatpush1.msra.mxu0 0.0
      %1035 = vmatprep.subr.mxu0 0.0
      %1036 = vmatpush1.msra.mxu0 0.0
      %1037 = vmatprep.subr.mxu0 0.0
      %1038 = vmatpush1.msra.mxu0 0.0
      %1039 = vmatprep.subr.mxu0 0.0
      %1040 = vmatpush1.msra.mxu0 0.0
      %1041 = vmatprep.subr.mxu0 0.0
      %1042 = vmatpush1.msra.mxu0 0.0
      %1043 = vmatprep.subr.mxu0 0.0
      %1044 = vmatpush1.msra.mxu0 0.0
      %1045 = vmatprep.subr.mxu0 0.0
      %1046 = vmatpush1.msra.mxu0 0.0
      %1047 = vmatprep.subr.mxu0 0.0
      %1048 = vmatpush1.msra.mxu0 0.0
      %1049 = vmatprep.subr.mxu0 0.0
      %1050 = vmatpush1.msra.mxu0 0.0
      %1051 = vmatprep.subr.mxu0 0.0
      %1052 = vmatpush1.msra.mxu0 0.0
      %1053 = vmatprep.subr.mxu0 0.0
      %1054 = vmatpush1.msra.mxu0 0.0
      %1055 = vmatprep.subr.mxu0 0.0
      %1056 = vmatpush1.msra.mxu0 0.0
      %1057 = vmatprep.subr.mxu0 0.0
      %1058 = vmatpush1.msra.mxu0 0.0
      %1059 = vmatprep.subr.mxu0 0.0
      %1060 = vmatpush1.msra.mxu0 0.0
      %1061 = vmatprep.subr.mxu0 0.0
      %1062 = vmatpush1.msra.mxu0 0.0
      %1063 = vmatprep.mubr.f32.mxu0 0.0
      %1064 = vmatmul.mubr.f32.gmra.mrb[0].mxu0 %v474
      %v1065 = vpop.f32.mrb[0].mxu0
      %v1066 = vadd.f32 %v924, %v1065
      %v1067 = vpop.f32.mrb[0].mxu0
      %1068 = vdwg.mxu0
      %v1069 = vld [vmem:[%s7] sm:$0xff]
      %v1070 = vld [vmem:[%s7 + $0x8] sm:$0xff]
      %v1071 = vld [vmem:[%s7 + $0x10] sm:$0xff]
      %v1072 = vld [vmem:[%s7 + $0x18] sm:$0xff]
      %v1073 = vld [vmem:[%s7 + $0x20] sm:$0xff]
      %v1074 = vld [vmem:[%s7 + $0x28] sm:$0xff]
      %v1075 = vld [vmem:[%s7 + $0x30] sm:$0xff]
      %v1076 = vld [vmem:[%s7 + $0x38] sm:$0xff]
      %v1077 = vld [vmem:[%s7 + $0x40] sm:$0xff]
      %v1078 = vld [vmem:[%s7 + $0x48] sm:$0xff]
      %v1079 = vld [vmem:[%s7 + $0x50] sm:$0xff]
      %v1080 = vld [vmem:[%s7 + $0x58] sm:$0xff]
      %v1081 = vld [vmem:[%s7 + $0x60] sm:$0xff]
      %v1082 = vld [vmem:[%s7 + $0x68] sm:$0xff]
      %v1083 = vld [vmem:[%s7 + $0x70] sm:$0xff]
      %v1084 = vld [vmem:[%s7 + $0x78] sm:$0xff]
      %v1085 = vld [vmem:[%s7 + $0x80] sm:$0xff]
      %v1086 = vld [vmem:[%s7 + $0x88] sm:$0xff]
      %v1087 = vld [vmem:[%s7 + $0x90] sm:$0xff]
      %v1088 = vld [vmem:[%s7 + $0x98] sm:$0xff]
      %v1089 = vld [vmem:[%s7 + $0xa0] sm:$0xff]
      %v1090 = vld [vmem:[%s7 + $0xa8] sm:$0xff]
      %v1091 = vld [vmem:[%s7 + $0xb0] sm:$0xff]
      %v1092 = vld [vmem:[%s7 + $0xb8] sm:$0xff]
      %v1093 = vld [vmem:[%s7 + $0xc0] sm:$0xff]
      %v1094 = vld [vmem:[%s7 + $0xc8] sm:$0xff]
      %v1095 = vld [vmem:[%s7 + $0xd0] sm:$0xff]
      %v1096 = vld [vmem:[%s7 + $0xd8] sm:$0xff]
      %v1097 = vld [vmem:[%s7 + $0xe0] sm:$0xff]
      %v1098 = vld [vmem:[%s7 + $0xe8] sm:$0xff]
      %v1099 = vld [vmem:[%s7 + $0xf0] sm:$0xff]
      %v1100 = vld [vmem:[%s7 + $0xf8] sm:$0xff]
      %v1101 = vld [vmem:[%s7 + $0x100] sm:$0xff]
      %v1102 = vld [vmem:[%s7 + $0x108] sm:$0xff]
      %v1103 = vld [vmem:[%s7 + $0x110] sm:$0xff]
      %v1104 = vld [vmem:[%s7 + $0x118] sm:$0xff]
      %v1105 = vld [vmem:[%s7 + $0x120] sm:$0xff]
      %v1106 = vld [vmem:[%s7 + $0x128] sm:$0xff]
      %v1107 = vld [vmem:[%s7 + $0x130] sm:$0xff]
      %v1108 = vld [vmem:[%s7 + $0x138] sm:$0xff]
      %v1109 = vld [vmem:[%s7 + $0x140] sm:$0xff]
      %v1110 = vld [vmem:[%s7 + $0x148] sm:$0xff]
      %v1111 = vld [vmem:[%s7 + $0x150] sm:$0xff]
      %v1112 = vld [vmem:[%s7 + $0x158] sm:$0xff]
      %v1113 = vld [vmem:[%s7 + $0x160] sm:$0xff]
      %v1114 = vld [vmem:[%s7 + $0x168] sm:$0xff]
      %v1115 = vld [vmem:[%s7 + $0x170] sm:$0xff]
      %v1116 = vld [vmem:[%s7 + $0x178] sm:$0xff]
      %v1117 = vld [vmem:[%s9] sm:$0x7]
      %v1119 = vlaneseq
      %v1120 = vshrl.u32 %v1119, 7
      %v1121 = vsub.s32 0, %v1120
      %v1122 = vrot.slane %v1117, %v1121
      %v1123 = vlaneseq
      %v1124 = vshrl.u32 %v1123, 7
      %v1125 = vsub.s32 1, %v1124
      %v1126 = vrot.slane %v1117, %v1125
      %v1127 = vlaneseq
      %v1128 = vshrl.u32 %v1127, 7
      %v1129 = vsub.s32 2, %v1128
      %v1130 = vrot.slane %v1117, %v1129
      %1134 = vmatprep.subr.mxu0 %v1070
      %1135 = vmatpush1.msra.mxu0 %v1069
      %1136 = vmatprep.subr.mxu0 %v1073
      %1137 = vmatpush1.msra.mxu0 %v1072
      %1138 = vmatprep.subr.mxu0 %v1076
      %1139 = vmatpush1.msra.mxu0 %v1075
      %1140 = vmatprep.subr.mxu0 %v1079
      %1141 = vmatpush1.msra.mxu0 %v1078
      %1142 = vmatprep.subr.mxu0 %v1082
      %1143 = vmatpush1.msra.mxu0 %v1081
      %1144 = vmatprep.subr.mxu0 %v1085
      %1145 = vmatpush1.msra.mxu0 %v1084
      %1146 = vmatprep.subr.mxu0 %v1088
      %1147 = vmatpush1.msra.mxu0 %v1087
      %1148 = vmatprep.subr.mxu0 %v1091
      %1149 = vmatpush1.msra.mxu0 %v1090
      %1150 = vmatprep.subr.mxu0 %v1094
      %1151 = vmatpush1.msra.mxu0 %v1093
      %1152 = vmatprep.subr.mxu0 %v1097
      %1153 = vmatpush1.msra.mxu0 %v1096
      %1154 = vmatprep.subr.mxu0 %v1100
      %1155 = vmatpush1.msra.mxu0 %v1099
      %1156 = vmatprep.subr.mxu0 %v1103
      %1157 = vmatpush1.msra.mxu0 %v1102
      %1158 = vmatprep.subr.mxu0 %v1106
      %1159 = vmatpush1.msra.mxu0 %v1105
      %1160 = vmatprep.subr.mxu0 %v1109
      %1161 = vmatpush1.msra.mxu0 %v1108
      %1162 = vmatprep.subr.mxu0 %v1112
      %1163 = vmatpush1.msra.mxu0 %v1111
      %1164 = vmatprep.subr.mxu0 %v1115
      %1165 = vmatpush1.msra.mxu0 %v1114
      %1166 = vmatprep.subr.mxu0 0.0
      %1167 = vmatpush1.msra.mxu0 0.0
      %1168 = vmatprep.subr.mxu0 0.0
      %1169 = vmatpush1.msra.mxu0 0.0
      %1170 = vmatprep.subr.mxu0 0.0
      %1171 = vmatpush1.msra.mxu0 0.0
      %1172 = vmatprep.subr.mxu0 0.0
      %1173 = vmatpush1.msra.mxu0 0.0
      %1174 = vmatprep.subr.mxu0 0.0
      %1175 = vmatpush1.msra.mxu0 0.0
      %1176 = vmatprep.subr.mxu0 0.0
      %1177 = vmatpush1.msra.mxu0 0.0
      %1178 = vmatprep.subr.mxu0 0.0
      %1179 = vmatpush1.msra.mxu0 0.0
      %1180 = vmatprep.subr.mxu0 0.0
      %1181 = vmatpush1.msra.mxu0 0.0
      %1182 = vmatprep.subr.mxu0 0.0
      %1183 = vmatpush1.msra.mxu0 0.0
      %1184 = vmatprep.subr.mxu0 0.0
      %1185 = vmatpush1.msra.mxu0 0.0
      %1186 = vmatprep.subr.mxu0 0.0
      %1187 = vmatpush1.msra.mxu0 0.0
      %1188 = vmatprep.subr.mxu0 0.0
      %1189 = vmatpush1.msra.mxu0 0.0
      %1190 = vmatprep.subr.mxu0 0.0
      %1191 = vmatpush1.msra.mxu0 0.0
      %1192 = vmatprep.subr.mxu0 0.0
      %1193 = vmatpush1.msra.mxu0 0.0
      %1194 = vmatprep.subr.mxu0 0.0
      %1195 = vmatpush1.msra.mxu0 0.0
      %1196 = vmatprep.subr.mxu0 0.0
      %1197 = vmatpush1.msra.mxu0 0.0
      %1198 = vmatprep.mubr.f32.mxu0 0.0
      %1199 = vmatmul.mubr.f32.gmra.mrb[0].mxu0 %v477
      %v1200 = vpop.f32.mrb[0].mxu0
      %v1201 = vadd.f32 %v1122, %v1200
      %v1202 = vpop.f32.mrb[0].mxu0
      %v1203 = vadd.f32 %v1126, %v1202
      %1204 = vdwg.mxu0
      %1205 = vmatprep.subr.mxu0 0.0
      %1206 = vmatpush1.msra.mxu0 %v1071
      %1207 = vmatprep.subr.mxu0 0.0
      %1208 = vmatpush1.msra.mxu0 %v1074
      %1209 = vmatprep.subr.mxu0 0.0
      %1210 = vmatpush1.msra.mxu0 %v1077
      %1211 = vmatprep.subr.mxu0 0.0
      %1212 = vmatpush1.msra.mxu0 %v1080
      %1213 = vmatprep.subr.mxu0 0.0
      %1214 = vmatpush1.msra.mxu0 %v1083
      %1215 = vmatprep.subr.mxu0 0.0
      %1216 = vmatpush1.msra.mxu0 %v1086
      %1217 = vmatprep.subr.mxu0 0.0
      %1218 = vmatpush1.msra.mxu0 %v1089
      %1219 = vmatprep.subr.mxu0 0.0
      %1220 = vmatpush1.msra.mxu0 %v1092
      %1221 = vmatprep.subr.mxu0 0.0
      %1222 = vmatpush1.msra.mxu0 %v1095
      %1223 = vmatprep.subr.mxu0 0.0
      %1224 = vmatpush1.msra.mxu0 %v1098
      %1225 = vmatprep.subr.mxu0 0.0
      %1226 = vmatpush1.msra.mxu0 %v1101
      %1227 = vmatprep.subr.mxu0 0.0
      %1228 = vmatpush1.msra.mxu0 %v1104
      %1229 = vmatprep.subr.mxu0 0.0
      %1230 = vmatpush1.msra.mxu0 %v1107
      %1231 = vmatprep.subr.mxu0 0.0
      %1232 = vmatpush1.msra.mxu0 %v1110
      %1233 = vmatprep.subr.mxu0 0.0
      %1234 = vmatpush1.msra.mxu0 %v1113
      %1235 = vmatprep.subr.mxu0 0.0
      %1236 = vmatpush1.msra.mxu0 %v1116
      %1237 = vmatprep.subr.mxu0 0.0
      %1238 = vmatpush1.msra.mxu0 0.0
      %1239 = vmatprep.subr.mxu0 0.0
      %1240 = vmatpush1.msra.mxu0 0.0
      %1241 = vmatprep.subr.mxu0 0.0
      %1242 = vmatpush1.msra.mxu0 0.0
      %1243 = vmatprep.subr.mxu0 0.0
      %1244 = vmatpush1.msra.mxu0 0.0
      %1245 = vmatprep.subr.mxu0 0.0
      %1246 = vmatpush1.msra.mxu0 0.0
      %1247 = vmatprep.subr.mxu0 0.0
      %1248 = vmatpush1.msra.mxu0 0.0
      %1249 = vmatprep.subr.mxu0 0.0
      %1250 = vmatpush1.msra.mxu0 0.0
      %1251 = vmatprep.subr.mxu0 0.0
      %1252 = vmatpush1.msra.mxu0 0.0
      %1253 = vmatprep.subr.mxu0 0.0
      %1254 = vmatpush1.msra.mxu0 0.0
      %1255 = vmatprep.subr.mxu0 0.0
      %1256 = vmatpush1.msra.mxu0 0.0
      %1257 = vmatprep.subr.mxu0 0.0
      %1258 = vmatpush1.msra.mxu0 0.0
      %1259 = vmatprep.subr.mxu0 0.0
      %1260 = vmatpush1.msra.mxu0 0.0
      %1261 = vmatprep.subr.mxu0 0.0
      %1262 = vmatpush1.msra.mxu0 0.0
      %1263 = vmatprep.subr.mxu0 0.0
      %1264 = vmatpush1.msra.mxu0 0.0
      %1265 = vmatprep.subr.mxu0 0.0
      %1266 = vmatpush1.msra.mxu0 0.0
      %1267 = vmatprep.subr.mxu0 0.0
      %1268 = vmatpush1.msra.mxu0 0.0
      %1269 = vmatprep.mubr.f32.mxu0 0.0
      %1270 = vmatmul.mubr.f32.gmra.mrb[0].mxu0 %v477
      %v1271 = vpop.f32.mrb[0].mxu0
      %v1272 = vadd.f32 %v1130, %v1271
      %v1273 = vpop.f32.mrb[0].mxu0
      %1274 = vdwg.mxu0
      %v1275 = vadd.f32 %v995, %v1201
      %v1276 = vxor.u32 %v1275, 2147483648
      %v1277 = vmul.f32 %v1276, 1.442695
      %v1278 = vpow.pop %v1277
      %v1279 = vadd.f32 %v1278, 1.0
      %v1280 = vrcp.pop %v1279
      %v1281 = vmul.f32 1.0, %v1280
      %v1282 = vadd.f32 %v997, %v1203
      %v1283 = vxor.u32 %v1282, 2147483648
      %v1284 = vmul.f32 %v1283, 1.442695
      %v1285 = vpow.pop %v1284
      %v1286 = vadd.f32 %v1285, 1.0
      %v1287 = vrcp.pop %v1286
      %v1288 = vmul.f32 1.0, %v1287
      %v1289 = vmul.f32 %v1281, %v1272
      %v1290 = vadd.f32 %v1066, %v1289
      %v1291 = vtanh.pop %v1290
      %v1292 = vsub.f32 1.0, %v1288
      %v1293 = vmul.f32 %v1292, %v1291
      %v1294 = vmul.f32 %v1288, %v477
      %v1295 = vadd.f32 %v1293, %v1294
      %v1296 = vmul.f32 %v862, %v1295
      %v1297 = vsub.f32 1.0, %v862
      %v1298 = vmul.f32 %v1297, %v477
      %v1299 = vadd.f32 %v1296, %v1298
      %1300 = vst [vmem:[#allocation2] sm:$0xff] %v1299
      %p1301 = scmp.eq.s32.totalorder %s30, 2
      // Predicated region
      $region85: #{dmn_forward.6} parent=75 // pred_check
        %p1302 = pneg %p1301
      $region86: #{dmn_forward.6} parent=75 // pred_check_branch
        %1304 = sbr.rel (%p1302) target = $region88
      $region87: #{dmn_forward.6} parent=75 // pred_region
        %v1305 = vld [vmem:[%s10] sm:$0xff]
        %v1306 = vld [vmem:[%s10 + $0x8] sm:$0xff]
        %v1307 = vld [vmem:[%s10 + $0x10] sm:$0xff]
        %v1308 = vld [vmem:[%s10 + $0x18] sm:$0xff]
        %v1309 = vld [vmem:[%s10 + $0x20] sm:$0xff]
        %v1310 = vld [vmem:[%s10 + $0x28] sm:$0xff]
        %v1311 = vld [vmem:[%s10 + $0x30] sm:$0xff]
        %v1312 = vld [vmem:[%s10 + $0x38] sm:$0xff]
        %v1313 = vld [vmem:[%s10 + $0x40] sm:$0xff]
        %v1314 = vld [vmem:[%s10 + $0x48] sm:$0xff]
        %v1315 = vld [vmem:[%s10 + $0x50] sm:$0xff]
        %v1316 = vld [vmem:[%s10 + $0x58] sm:$0xff]
        %v1317 = vld [vmem:[%s10 + $0x60] sm:$0xff]
        %v1318 = vld [vmem:[%s10 + $0x68] sm:$0xff]
        %v1319 = vld [vmem:[%s10 + $0x70] sm:$0xff]
        %v1320 = vld [vmem:[%s10 + $0x78] sm:$0xff]
        %v1321 = vld [vmem:[%s10 + $0x80] sm:$0xff]
        %v1322 = vld [vmem:[%s10 + $0x88] sm:$0xff]
        %v1323 = vld [vmem:[%s10 + $0x90] sm:$0xff]
        %v1324 = vld [vmem:[%s10 + $0x98] sm:$0xff]
        %v1325 = vld [vmem:[%s10 + $0xa0] sm:$0xff]
        %v1326 = vld [vmem:[%s10 + $0xa8] sm:$0xff]
        %v1327 = vld [vmem:[%s10 + $0xb0] sm:$0xff]
        %v1328 = vld [vmem:[%s10 + $0xb8] sm:$0xff]
        %v1329 = vld [vmem:[%s10 + $0xc0] sm:$0xff]
        %v1330 = vld [vmem:[%s10 + $0xc8] sm:$0xff]
        %v1331 = vld [vmem:[%s10 + $0xd0] sm:$0xff]
        %v1332 = vld [vmem:[%s10 + $0xd8] sm:$0xff]
        %v1333 = vld [vmem:[%s10 + $0xe0] sm:$0xff]
        %v1334 = vld [vmem:[%s10 + $0xe8] sm:$0xff]
        %v1335 = vld [vmem:[%s10 + $0xf0] sm:$0xff]
        %v1336 = vld [vmem:[%s10 + $0xf8] sm:$0xff]
        %v1337 = vld [vmem:[%s10 + $0x100] sm:$0xff]
        %v1338 = vld [vmem:[%s10 + $0x108] sm:$0xff]
        %v1339 = vld [vmem:[%s10 + $0x110] sm:$0xff]
        %v1340 = vld [vmem:[%s10 + $0x118] sm:$0xff]
        %v1341 = vld [vmem:[%s10 + $0x120] sm:$0xff]
        %v1342 = vld [vmem:[%s10 + $0x128] sm:$0xff]
        %v1343 = vld [vmem:[%s10 + $0x130] sm:$0xff]
        %v1344 = vld [vmem:[%s10 + $0x138] sm:$0xff]
        %v1345 = vld [vmem:[%s10 + $0x140] sm:$0xff]
        %v1346 = vld [vmem:[%s10 + $0x148] sm:$0xff]
        %v1347 = vld [vmem:[%s10 + $0x150] sm:$0xff]
        %v1348 = vld [vmem:[%s10 + $0x158] sm:$0xff]
        %v1349 = vld [vmem:[%s10 + $0x160] sm:$0xff]
        %v1350 = vld [vmem:[%s10 + $0x168] sm:$0xff]
        %v1351 = vld [vmem:[%s10 + $0x170] sm:$0xff]
        %v1352 = vld [vmem:[%s10 + $0x178] sm:$0xff]
        %v1353 = vld [vmem:[%s12] sm:$0x7]
        %v1355 = vlaneseq
        %v1356 = vshrl.u32 %v1355, 7
        %v1357 = vsub.s32 0, %v1356
        %v1358 = vrot.slane %v1353, %v1357
        %v1359 = vlaneseq
        %v1360 = vshrl.u32 %v1359, 7
        %v1361 = vsub.s32 1, %v1360
        %v1362 = vrot.slane %v1353, %v1361
        %v1363 = vlaneseq
        %v1364 = vshrl.u32 %v1363, 7
        %v1365 = vsub.s32 2, %v1364
        %v1366 = vrot.slane %v1353, %v1365
        %1370 = vmatprep.subr.mxu0 %v1306
        %1371 = vmatpush1.msra.mxu0 %v1305
        %1372 = vmatprep.subr.mxu0 %v1309
        %1373 = vmatpush1.msra.mxu0 %v1308
        %1374 = vmatprep.subr.mxu0 %v1312
        %1375 = vmatpush1.msra.mxu0 %v1311
        %1376 = vmatprep.subr.mxu0 %v1315
        %1377 = vmatpush1.msra.mxu0 %v1314
        %1378 = vmatprep.subr.mxu0 %v1318
        %1379 = vmatpush1.msra.mxu0 %v1317
        %1380 = vmatprep.subr.mxu0 %v1321
        %1381 = vmatpush1.msra.mxu0 %v1320
        %1382 = vmatprep.subr.mxu0 %v1324
        %1383 = vmatpush1.msra.mxu0 %v1323
        %1384 = vmatprep.subr.mxu0 %v1327
        %1385 = vmatpush1.msra.mxu0 %v1326
        %1386 = vmatprep.subr.mxu0 %v1330
        %1387 = vmatpush1.msra.mxu0 %v1329
        %1388 = vmatprep.subr.mxu0 %v1333
        %1389 = vmatpush1.msra.mxu0 %v1332
        %1390 = vmatprep.subr.mxu0 %v1336
        %1391 = vmatpush1.msra.mxu0 %v1335
        %1392 = vmatprep.subr.mxu0 %v1339
        %1393 = vmatpush1.msra.mxu0 %v1338
        %1394 = vmatprep.subr.mxu0 %v1342
        %1395 = vmatpush1.msra.mxu0 %v1341
        %1396 = vmatprep.subr.mxu0 %v1345
        %1397 = vmatpush1.msra.mxu0 %v1344
        %1398 = vmatprep.subr.mxu0 %v1348
        %1399 = vmatpush1.msra.mxu0 %v1347
        %1400 = vmatprep.subr.mxu0 %v1351
        %1401 = vmatpush1.msra.mxu0 %v1350
        %1402 = vmatprep.subr.mxu0 0.0
        %1403 = vmatpush1.msra.mxu0 0.0
        %1404 = vmatprep.subr.mxu0 0.0
        %1405 = vmatpush1.msra.mxu0 0.0
        %1406 = vmatprep.subr.mxu0 0.0
        %1407 = vmatpush1.msra.mxu0 0.0
        %1408 = vmatprep.subr.mxu0 0.0
        %1409 = vmatpush1.msra.mxu0 0.0
        %1410 = vmatprep.subr.mxu0 0.0
        %1411 = vmatpush1.msra.mxu0 0.0
        %1412 = vmatprep.subr.mxu0 0.0
        %1413 = vmatpush1.msra.mxu0 0.0
        %1414 = vmatprep.subr.mxu0 0.0
        %1415 = vmatpush1.msra.mxu0 0.0
        %1416 = vmatprep.subr.mxu0 0.0
        %1417 = vmatpush1.msra.mxu0 0.0
        %1418 = vmatprep.subr.mxu0 0.0
        %1419 = vmatpush1.msra.mxu0 0.0
        %1420 = vmatprep.subr.mxu0 0.0
        %1421 = vmatpush1.msra.mxu0 0.0
        %1422 = vmatprep.subr.mxu0 0.0
        %1423 = vmatpush1.msra.mxu0 0.0
        %1424 = vmatprep.subr.mxu0 0.0
        %1425 = vmatpush1.msra.mxu0 0.0
        %1426 = vmatprep.subr.mxu0 0.0
        %1427 = vmatpush1.msra.mxu0 0.0
        %1428 = vmatprep.subr.mxu0 0.0
        %1429 = vmatpush1.msra.mxu0 0.0
        %1430 = vmatprep.subr.mxu0 0.0
        %1431 = vmatpush1.msra.mxu0 0.0
        %1432 = vmatprep.subr.mxu0 0.0
        %1433 = vmatpush1.msra.mxu0 0.0
        %1434 = vmatprep.mubr.f32.mxu0 0.0
        %1435 = vmatmul.mubr.f32.gmra.mrb[0].mxu0 %v1299
        %v1436 = vpop.f32.mrb[0].mxu0
        %v1437 = vadd.f32 %v1358, %v1436
        %v1438 = vpop.f32.mrb[0].mxu0
        %v1439 = vadd.f32 %v1362, %v1438
        %1440 = vdwg.mxu0
        %1441 = vmatprep.subr.mxu0 0.0
        %1442 = vmatpush1.msra.mxu0 %v1307
        %1443 = vmatprep.subr.mxu0 0.0
        %1444 = vmatpush1.msra.mxu0 %v1310
        %1445 = vmatprep.subr.mxu0 0.0
        %1446 = vmatpush1.msra.mxu0 %v1313
        %1447 = vmatprep.subr.mxu0 0.0
        %1448 = vmatpush1.msra.mxu0 %v1316
        %1449 = vmatprep.subr.mxu0 0.0
        %1450 = vmatpush1.msra.mxu0 %v1319
        %1451 = vmatprep.subr.mxu0 0.0
        %1452 = vmatpush1.msra.mxu0 %v1322
        %1453 = vmatprep.subr.mxu0 0.0
        %1454 = vmatpush1.msra.mxu0 %v1325
        %1455 = vmatprep.subr.mxu0 0.0
        %1456 = vmatpush1.msra.mxu0 %v1328
        %1457 = vmatprep.subr.mxu0 0.0
        %1458 = vmatpush1.msra.mxu0 %v1331
        %1459 = vmatprep.subr.mxu0 0.0
        %1460 = vmatpush1.msra.mxu0 %v1334
        %1461 = vmatprep.subr.mxu0 0.0
        %1462 = vmatpush1.msra.mxu0 %v1337
        %1463 = vmatprep.subr.mxu0 0.0
        %1464 = vmatpush1.msra.mxu0 %v1340
        %1465 = vmatprep.subr.mxu0 0.0
        %1466 = vmatpush1.msra.mxu0 %v1343
        %1467 = vmatprep.subr.mxu0 0.0
        %1468 = vmatpush1.msra.mxu0 %v1346
        %1469 = vmatprep.subr.mxu0 0.0
        %1470 = vmatpush1.msra.mxu0 %v1349
        %1471 = vmatprep.subr.mxu0 0.0
        %1472 = vmatpush1.msra.mxu0 %v1352
        %1473 = vmatprep.subr.mxu0 0.0
        %1474 = vmatpush1.msra.mxu0 0.0
        %1475 = vmatprep.subr.mxu0 0.0
        %1476 = vmatpush1.msra.mxu0 0.0
        %1477 = vmatprep.subr.mxu0 0.0
        %1478 = vmatpush1.msra.mxu0 0.0
        %1479 = vmatprep.subr.mxu0 0.0
        %1480 = vmatpush1.msra.mxu0 0.0
        %1481 = vmatprep.subr.mxu0 0.0
        %1482 = vmatpush1.msra.mxu0 0.0
        %1483 = vmatprep.subr.mxu0 0.0
        %1484 = vmatpush1.msra.mxu0 0.0
        %1485 = vmatprep.subr.mxu0 0.0
        %1486 = vmatpush1.msra.mxu0 0.0
        %1487 = vmatprep.subr.mxu0 0.0
        %1488 = vmatpush1.msra.mxu0 0.0
        %1489 = vmatprep.subr.mxu0 0.0
        %1490 = vmatpush1.msra.mxu0 0.0
        %1491 = vmatprep.subr.mxu0 0.0
        %1492 = vmatpush1.msra.mxu0 0.0
        %1493 = vmatprep.subr.mxu0 0.0
        %1494 = vmatpush1.msra.mxu0 0.0
        %1495 = vmatprep.subr.mxu0 0.0
        %1496 = vmatpush1.msra.mxu0 0.0
        %1497 = vmatprep.subr.mxu0 0.0
        %1498 = vmatpush1.msra.mxu0 0.0
        %1499 = vmatprep.subr.mxu0 0.0
        %1500 = vmatpush1.msra.mxu0 0.0
        %1501 = vmatprep.subr.mxu0 0.0
        %1502 = vmatpush1.msra.mxu0 0.0
        %1503 = vmatprep.subr.mxu0 0.0
        %1504 = vmatpush1.msra.mxu0 0.0
        %1505 = vmatprep.mubr.f32.mxu0 0.0
        %1506 = vmatmul.mubr.f32.gmra.mrb[0].mxu0 %v1299
        %v1507 = vpop.f32.mrb[0].mxu0
        %v1508 = vadd.f32 %v1366, %v1507
        %v1509 = vpop.f32.mrb[0].mxu0
        %1510 = vdwg.mxu0
        %v1511 = vld [vmem:[%s11] sm:$0xff]
        %v1512 = vld [vmem:[%s11 + $0x8] sm:$0xff]
        %v1513 = vld [vmem:[%s11 + $0x10] sm:$0xff]
        %v1514 = vld [vmem:[%s11 + $0x18] sm:$0xff]
        %v1515 = vld [vmem:[%s11 + $0x20] sm:$0xff]
        %v1516 = vld [vmem:[%s11 + $0x28] sm:$0xff]
        %v1517 = vld [vmem:[%s11 + $0x30] sm:$0xff]
        %v1518 = vld [vmem:[%s11 + $0x38] sm:$0xff]
        %v1519 = vld [vmem:[%s11 + $0x40] sm:$0xff]
        %v1520 = vld [vmem:[%s11 + $0x48] sm:$0xff]
        %v1521 = vld [vmem:[%s11 + $0x50] sm:$0xff]
        %v1522 = vld [vmem:[%s11 + $0x58] sm:$0xff]
        %v1523 = vld [vmem:[%s11 + $0x60] sm:$0xff]
        %v1524 = vld [vmem:[%s11 + $0x68] sm:$0xff]
        %v1525 = vld [vmem:[%s11 + $0x70] sm:$0xff]
        %v1526 = vld [vmem:[%s11 + $0x78] sm:$0xff]
        %v1527 = vld [vmem:[%s11 + $0x80] sm:$0xff]
        %v1528 = vld [vmem:[%s11 + $0x88] sm:$0xff]
        %v1529 = vld [vmem:[%s11 + $0x90] sm:$0xff]
        %v1530 = vld [vmem:[%s11 + $0x98] sm:$0xff]
        %v1531 = vld [vmem:[%s11 + $0xa0] sm:$0xff]
        %v1532 = vld [vmem:[%s11 + $0xa8] sm:$0xff]
        %v1533 = vld [vmem:[%s11 + $0xb0] sm:$0xff]
        %v1534 = vld [vmem:[%s11 + $0xb8] sm:$0xff]
        %v1535 = vld [vmem:[%s11 + $0xc0] sm:$0xff]
        %v1536 = vld [vmem:[%s11 + $0xc8] sm:$0xff]
        %v1537 = vld [vmem:[%s11 + $0xd0] sm:$0xff]
        %v1538 = vld [vmem:[%s11 + $0xd8] sm:$0xff]
        %v1539 = vld [vmem:[%s11 + $0xe0] sm:$0xff]
        %v1540 = vld [vmem:[%s11 + $0xe8] sm:$0xff]
        %v1541 = vld [vmem:[%s11 + $0xf0] sm:$0xff]
        %v1542 = vld [vmem:[%s11 + $0xf8] sm:$0xff]
        %v1543 = vld [vmem:[%s11 + $0x100] sm:$0xff]
        %v1544 = vld [vmem:[%s11 + $0x108] sm:$0xff]
        %v1545 = vld [vmem:[%s11 + $0x110] sm:$0xff]
        %v1546 = vld [vmem:[%s11 + $0x118] sm:$0xff]
        %v1547 = vld [vmem:[%s11 + $0x120] sm:$0xff]
        %v1548 = vld [vmem:[%s11 + $0x128] sm:$0xff]
        %v1549 = vld [vmem:[%s11 + $0x130] sm:$0xff]
        %v1550 = vld [vmem:[%s11 + $0x138] sm:$0xff]
        %v1551 = vld [vmem:[%s11 + $0x140] sm:$0xff]
        %v1552 = vld [vmem:[%s11 + $0x148] sm:$0xff]
        %v1553 = vld [vmem:[%s11 + $0x150] sm:$0xff]
        %v1554 = vld [vmem:[%s11 + $0x158] sm:$0xff]
        %v1555 = vld [vmem:[%s11 + $0x160] sm:$0xff]
        %v1556 = vld [vmem:[%s11 + $0x168] sm:$0xff]
        %v1557 = vld [vmem:[%s11 + $0x170] sm:$0xff]
        %v1558 = vld [vmem:[%s11 + $0x178] sm:$0xff]
        %v1559 = vld [vmem:[%s13] sm:$0x7]
        %v1561 = vlaneseq
        %v1562 = vshrl.u32 %v1561, 7
        %v1563 = vsub.s32 0, %v1562
        %v1564 = vrot.slane %v1559, %v1563
        %v1565 = vlaneseq
        %v1566 = vshrl.u32 %v1565, 7
        %v1567 = vsub.s32 1, %v1566
        %v1568 = vrot.slane %v1559, %v1567
        %v1569 = vlaneseq
        %v1570 = vshrl.u32 %v1569, 7
        %v1571 = vsub.s32 2, %v1570
        %v1572 = vrot.slane %v1559, %v1571
        %1576 = vmatprep.subr.mxu0 %v1512
        %1577 = vmatpush1.msra.mxu0 %v1511
        %1578 = vmatprep.subr.mxu0 %v1515
        %1579 = vmatpush1.msra.mxu0 %v1514
        %1580 = vmatprep.subr.mxu0 %v1518
        %1581 = vmatpush1.msra.mxu0 %v1517
        %1582 = vmatprep.subr.mxu0 %v1521
        %1583 = vmatpush1.msra.mxu0 %v1520
        %1584 = vmatprep.subr.mxu0 %v1524
        %1585 = vmatpush1.msra.mxu0 %v1523
        %1586 = vmatprep.subr.mxu0 %v1527
        %1587 = vmatpush1.msra.mxu0 %v1526
        %1588 = vmatprep.subr.mxu0 %v1530
        %1589 = vmatpush1.msra.mxu0 %v1529
        %1590 = vmatprep.subr.mxu0 %v1533
        %1591 = vmatpush1.msra.mxu0 %v1532
        %1592 = vmatprep.subr.mxu0 %v1536
        %1593 = vmatpush1.msra.mxu0 %v1535
        %1594 = vmatprep.subr.mxu0 %v1539
        %1595 = vmatpush1.msra.mxu0 %v1538
        %1596 = vmatprep.subr.mxu0 %v1542
        %1597 = vmatpush1.msra.mxu0 %v1541
        %1598 = vmatprep.subr.mxu0 %v1545
        %1599 = vmatpush1.msra.mxu0 %v1544
        %1600 = vmatprep.subr.mxu0 %v1548
        %1601 = vmatpush1.msra.mxu0 %v1547
        %1602 = vmatprep.subr.mxu0 %v1551
        %1603 = vmatpush1.msra.mxu0 %v1550
        %1604 = vmatprep.subr.mxu0 %v1554
        %1605 = vmatpush1.msra.mxu0 %v1553
        %1606 = vmatprep.subr.mxu0 %v1557
        %1607 = vmatpush1.msra.mxu0 %v1556
        %1608 = vmatprep.subr.mxu0 0.0
        %1609 = vmatpush1.msra.mxu0 0.0
        %1610 = vmatprep.subr.mxu0 0.0
        %1611 = vmatpush1.msra.mxu0 0.0
        %1612 = vmatprep.subr.mxu0 0.0
        %1613 = vmatpush1.msra.mxu0 0.0
        %1614 = vmatprep.subr.mxu0 0.0
        %1615 = vmatpush1.msra.mxu0 0.0
        %1616 = vmatprep.subr.mxu0 0.0
        %1617 = vmatpush1.msra.mxu0 0.0
        %1618 = vmatprep.subr.mxu0 0.0
        %1619 = vmatpush1.msra.mxu0 0.0
        %1620 = vmatprep.subr.mxu0 0.0
        %1621 = vmatpush1.msra.mxu0 0.0
        %1622 = vmatprep.subr.mxu0 0.0
        %1623 = vmatpush1.msra.mxu0 0.0
        %1624 = vmatprep.subr.mxu0 0.0
        %1625 = vmatpush1.msra.mxu0 0.0
        %1626 = vmatprep.subr.mxu0 0.0
        %1627 = vmatpush1.msra.mxu0 0.0
        %1628 = vmatprep.subr.mxu0 0.0
        %1629 = vmatpush1.msra.mxu0 0.0
        %1630 = vmatprep.subr.mxu0 0.0
        %1631 = vmatpush1.msra.mxu0 0.0
        %1632 = vmatprep.subr.mxu0 0.0
        %1633 = vmatpush1.msra.mxu0 0.0
        %1634 = vmatprep.subr.mxu0 0.0
        %1635 = vmatpush1.msra.mxu0 0.0
        %1636 = vmatprep.subr.mxu0 0.0
        %1637 = vmatpush1.msra.mxu0 0.0
        %1638 = vmatprep.subr.mxu0 0.0
        %1639 = vmatpush1.msra.mxu0 0.0
        %1640 = vmatprep.mubr.f32.mxu0 0.0
        %1641 = vmatmul.mubr.f32.gmra.mrb[0].mxu0 %v476
        %v1642 = vpop.f32.mrb[0].mxu0
        %v1643 = vadd.f32 %v1564, %v1642
        %v1644 = vpop.f32.mrb[0].mxu0
        %v1645 = vadd.f32 %v1568, %v1644
        %1646 = vdwg.mxu0
        %1647 = vmatprep.subr.mxu0 0.0
        %1648 = vmatpush1.msra.mxu0 %v1513
        %1649 = vmatprep.subr.mxu0 0.0
        %1650 = vmatpush1.msra.mxu0 %v1516
        %1651 = vmatprep.subr.mxu0 0.0
        %1652 = vmatpush1.msra.mxu0 %v1519
        %1653 = vmatprep.subr.mxu0 0.0
        %1654 = vmatpush1.msra.mxu0 %v1522
        %1655 = vmatprep.subr.mxu0 0.0
        %1656 = vmatpush1.msra.mxu0 %v1525
        %1657 = vmatprep.subr.mxu0 0.0
        %1658 = vmatpush1.msra.mxu0 %v1528
        %1659 = vmatprep.subr.mxu0 0.0
        %1660 = vmatpush1.msra.mxu0 %v1531
        %1661 = vmatprep.subr.mxu0 0.0
        %1662 = vmatpush1.msra.mxu0 %v1534
        %1663 = vmatprep.subr.mxu0 0.0
        %1664 = vmatpush1.msra.mxu0 %v1537
        %1665 = vmatprep.subr.mxu0 0.0
        %1666 = vmatpush1.msra.mxu0 %v1540
        %1667 = vmatprep.subr.mxu0 0.0
        %1668 = vmatpush1.msra.mxu0 %v1543
        %1669 = vmatprep.subr.mxu0 0.0
        %1670 = vmatpush1.msra.mxu0 %v1546
        %1671 = vmatprep.subr.mxu0 0.0
        %1672 = vmatpush1.msra.mxu0 %v1549
        %1673 = vmatprep.subr.mxu0 0.0
        %1674 = vmatpush1.msra.mxu0 %v1552
        %1675 = vmatprep.subr.mxu0 0.0
        %1676 = vmatpush1.msra.mxu0 %v1555
        %1677 = vmatprep.subr.mxu0 0.0
        %1678 = vmatpush1.msra.mxu0 %v1558
        %1679 = vmatprep.subr.mxu0 0.0
        %1680 = vmatpush1.msra.mxu0 0.0
        %1681 = vmatprep.subr.mxu0 0.0
        %1682 = vmatpush1.msra.mxu0 0.0
        %1683 = vmatprep.subr.mxu0 0.0
        %1684 = vmatpush1.msra.mxu0 0.0
        %1685 = vmatprep.subr.mxu0 0.0
        %1686 = vmatpush1.msra.mxu0 0.0
        %1687 = vmatprep.subr.mxu0 0.0
        %1688 = vmatpush1.msra.mxu0 0.0
        %1689 = vmatprep.subr.mxu0 0.0
        %1690 = vmatpush1.msra.mxu0 0.0
        %1691 = vmatprep.subr.mxu0 0.0
        %1692 = vmatpush1.msra.mxu0 0.0
        %1693 = vmatprep.subr.mxu0 0.0
        %1694 = vmatpush1.msra.mxu0 0.0
        %1695 = vmatprep.subr.mxu0 0.0
        %1696 = vmatpush1.msra.mxu0 0.0
        %1697 = vmatprep.subr.mxu0 0.0
        %1698 = vmatpush1.msra.mxu0 0.0
        %1699 = vmatprep.subr.mxu0 0.0
        %1700 = vmatpush1.msra.mxu0 0.0
        %1701 = vmatprep.subr.mxu0 0.0
        %1702 = vmatpush1.msra.mxu0 0.0
        %1703 = vmatprep.subr.mxu0 0.0
        %1704 = vmatpush1.msra.mxu0 0.0
        %1705 = vmatprep.subr.mxu0 0.0
        %1706 = vmatpush1.msra.mxu0 0.0
        %1707 = vmatprep.subr.mxu0 0.0
        %1708 = vmatpush1.msra.mxu0 0.0
        %1709 = vmatprep.subr.mxu0 0.0
        %1710 = vmatpush1.msra.mxu0 0.0
        %1711 = vmatprep.mubr.f32.mxu0 0.0
        %1712 = vmatmul.mubr.f32.gmra.mrb[0].mxu0 %v476
        %v1713 = vpop.f32.mrb[0].mxu0
        %v1714 = vadd.f32 %v1572, %v1713
        %v1715 = vpop.f32.mrb[0].mxu0
        %1716 = vdwg.mxu0
        %v1717 = vadd.f32 %v1437, %v1643
        %v1718 = vxor.u32 %v1717, 2147483648
        %v1719 = vmul.f32 %v1718, 1.442695
        %v1720 = vpow.pop %v1719
        %v1721 = vadd.f32 %v1720, 1.0
        %v1722 = vrcp.pop %v1721
        %v1723 = vmul.f32 1.0, %v1722
        %v1724 = vadd.f32 %v1439, %v1645
        %v1725 = vxor.u32 %v1724, 2147483648
        %v1726 = vmul.f32 %v1725, 1.442695
        %v1727 = vpow.pop %v1726
        %v1728 = vadd.f32 %v1727, 1.0
        %v1729 = vrcp.pop %v1728
        %v1730 = vmul.f32 1.0, %v1729
        %v1731 = vmul.f32 %v1723, %v1714
        %v1732 = vadd.f32 %v1508, %v1731
        %v1733 = vtanh.pop %v1732
        %v1734 = vsub.f32 1.0, %v1730
        %v1735 = vmul.f32 %v1734, %v1733
        %v1736 = vmul.f32 %v1730, %v476
        %v1737 = vadd.f32 %v1735, %v1736
        %1738 = vst [vmem:[%s14] sm:$0xff] %v1737
      $region88: #{dmn_forward.6} parent=75 // pred_fallthru
        _
      // Predicated region
      $region89: #{dmn_forward.6} parent=75 // pred_check
        %p1739 = pneg %p349
      $region90: #{dmn_forward.6} parent=75 // pred_check_branch
        %1741 = sbr.rel (%p1739) target = $region92
      $region91: #{dmn_forward.6} parent=75 // pred_region
        _
      $region92: #{dmn_forward.6} parent=75 // pred_fallthru
        _
      // Predicated region
      $region93: #{dmn_forward.6} parent=75 // pred_check
        %p1742 = pneg %p349
      $region94: #{dmn_forward.6} parent=75 // pred_check_branch
        %1744 = sbr.rel (%p1742) target = $region96
      $region95: #{dmn_forward.6} parent=75 // pred_region
        _
      $region96: #{dmn_forward.6} parent=75 // pred_fallthru
        _
    $region76: #{dmn_forward.6} parent=5 // pred_fallthru
      _
    %p1745 = scmp.le.s32.totalorder 2, %s20
    // Predicated region
    $region97: #{dmn_forward.6} parent=5 // pred_check
      %p1746 = pneg %p1745
    $region98: #{dmn_forward.6} parent=5 // pred_check_branch
      %1748 = sbr.rel (%p1746) target = $region100
    $region99: #{dmn_forward.6} parent=5 // pred_region
      %s1749 = ssub.s32 %s20, 2
    $region100: #{dmn_forward.6} parent=5 // pred_fallthru
      _
  $region6: #{dmn_forward.6} parent=0 // loop_footer
    %s24 = sadd.s32 1, %s20
  $region7: #{dmn_forward.6} parent=0 // loop_footer_branch
    %19 = sbr.rel target = $region3
  $region8: #{dmn_forward.6} parent=0 // loop_exit
    _

</llo_original>
